<compile_context>
chip_gen: v5e
topology: v5e:2x2
jax: 0.10.0
libtpu: 0.0.40
codegen_flags: <defaults>
</compile_context>

<pallas_src>
import functools

import jax
import jax.numpy as jnp
from jax.experimental import pallas as pl
from jax.experimental.pallas import tpu as pltpu

VOCAB = 21
VOCAB_PAD = 32          # vocab padded to 32 (pad rows of the fused table are zero)
EMB = 128
CONV_OUT = 64
CONV_PAD = 128          # conv channels padded 64 -> 128 (zero columns)
KSIZE = 16
PAD = KSIZE // 2
POOL = 5
HID = 100               # real LSTM hidden size (PyTorch semantics)
HPAD = 128              # lane-aligned padded hidden size used inside the kernel
NCLS = 2


# ---------------------------------------------------------------------------
# One fused kernel: (embedding*conv) table matmul -> relu -> maxpool -> LSTM -> linear
# ---------------------------------------------------------------------------
def scanner_kernel(codes_ref, table_ref, cb_ref, bg_ref, bl_ref,
                   wih_hbm, whh_hbm, wl_hbm,
                   o_ref,
                   wih_buf, whh_buf, wl_buf, sems,
                   *, B, l_out_pad, t_out):
    # codes_ref : (B*l_out_pad, KSIZE) int32   pre-shifted token codes k*32+tok (sentinel=512)
    # table_ref : (KSIZE*VOCAB_PAD, CONV_PAD)  bf16 fused embedding@conv table
    # cb_ref    : (1, CONV_PAD)  f32 conv bias      bg_ref: (1, 4*HPAD) f32 LSTM bias
    # bl_ref    : (1, HPAD)      f32 linear bias
    # wih_hbm/whh_hbm/wl_hbm : bf16 LSTM/linear weights left in HBM (manual DMA)
    # o_ref     : (B, HPAD) f32 lane-dense output (cols >= NCLS are zero)

    # ---- 0) kick off the LSTM/linear weight DMAs; they hide under the conv stage ----
    cp_wih = pltpu.make_async_copy(wih_hbm, wih_buf, sems.at[0]); cp_wih.start()
    cp_whh = pltpu.make_async_copy(whh_hbm, whh_buf, sems.at[1]); cp_whh.start()
    cp_wl = pltpu.make_async_copy(wl_hbm, wl_buf, sems.at[2]); cp_wl.start()

    rows = B * l_out_pad

    # ---- 1) fused embedding + conv1d: shifted one-hot @ precomputed table ----
    # onehot[r, j] = 1 iff some tap k of output row r saw token v with j == k*32+v.
    col_iota = jax.lax.broadcasted_iota(jnp.int32, (rows, KSIZE * VOCAB_PAD), 1)
    hit = col_iota == codes_ref[:, 0:1]
    for k in range(1, KSIZE):
        hit = jnp.logical_or(hit, col_iota == codes_ref[:, k:k + 1])
    onehot = hit.astype(jnp.bfloat16)                             # exact 0/1 in bf16
    conv = jnp.dot(onehot, table_ref[...],
                   preferred_element_type=jnp.float32)            # (rows, CONV_PAD) f32
    conv = jnp.maximum(conv + cb_ref[0], 0.0)                     # bias + ReLU (f32)

    # ---- 2) MaxPool1d(kernel=5, stride=5): chained maxima, kept in vregs ----
    conv3 = conv.reshape(B, l_out_pad, CONV_PAD)                  # aligned leading split
    steps = []
    for t in range(t_out):
        m = conv3[:, POOL * t, :]
        for j in range(1, POOL):
            m = jnp.maximum(m, conv3[:, POOL * t + j, :])
        steps.append(m)                                           # (B, CONV_PAD)
    pooled = jnp.concatenate(steps, axis=0)                       # (t_out*B, CONV_PAD)

    # ---- 3) LSTM: input projection hoisted out of the recurrence ----
    cp_wih.wait()
    gx = jnp.dot(pooled.astype(jnp.bfloat16), wih_buf[...],
                 preferred_element_type=jnp.float32) + bg_ref[0]  # (t_out*B, 4*HPAD)

    cp_whh.wait()
    h = jnp.zeros((B, HPAD), jnp.float32)
    c = jnp.zeros((B, HPAD), jnp.float32)
    for t in range(t_out):                                        # small static unroll
        gates = gx[t * B:(t + 1) * B, :] + jnp.dot(
            h.astype(jnp.bfloat16), whh_buf[...],                 # W_hh streamed per step
            preferred_element_type=jnp.float32)                   # (B, 4*HPAD) f32
        i = jax.nn.sigmoid(gates[:, 0 * HPAD:1 * HPAD])           # lane-aligned slices
        f = jax.nn.sigmoid(gates[:, 1 * HPAD:2 * HPAD])
        g = jnp.tanh(gates[:, 2 * HPAD:3 * HPAD])
        o = jax.nn.sigmoid(gates[:, 3 * HPAD:4 * HPAD])
        c = f * c + i * g
        h = o * jnp.tanh(c)
        # padded lanes [HID:HPAD]: gates are 0 -> g=0 and c starts at 0, so h/c
        # padded lanes stay exactly 0 and never leak into the real 100 lanes.

    # ---- 4) Linear(100, 2) head; lane-dense (B, HPAD) store, sliced outside ----
    cp_wl.wait()
    o_ref[...] = jnp.dot(h.astype(jnp.bfloat16), wl_buf[...],
                         preferred_element_type=jnp.float32) + bl_ref[0]


# ---------------------------------------------------------------------------
# Wrapper
# ---------------------------------------------------------------------------
def scanner_net_forward(tokens, params):
    # tokens: int32 (B, L) with values in [0, VOCAB). Out-of-range tokens silently
    # map to a zero embedding row (unlike nn.Embedding, which would error).
    B, L = tokens.shape
    l_out = L + 2 * PAD - KSIZE + 1            # = L + 1 (PyTorch conv1d)
    t_out = (l_out - POOL) // POOL + 1         # PyTorch MaxPool1d, floor mode
    l_out_pad = ((l_out + 7) // 8) * 8         # sublane-aligned per-batch row stride
    l_pad = L + 2 * PAD
    sentinel = KSIZE * VOCAB_PAD               # code that never matches the col iota

    # Pre-shifted token codes: codes[b*l_out_pad + p, k] = k*32 + tok[b, p+k-PAD]
    # for valid (in-sequence) taps, else sentinel.  Tiny int32 index prep only.
    tok_pad = jnp.full((B, l_pad), -1, jnp.int32).at[:, PAD:PAD + L].set(
        tokens.astype(jnp.int32))
    pos = jnp.arange(l_out_pad)
    tap = jnp.arange(KSIZE)
    gidx = jnp.minimum(pos[:, None] + tap[None, :], l_pad - 1)    # (l_out_pad, K)
    toks = tok_pad[:, gidx]                                       # (B, l_out_pad, K)
    valid = (toks >= 0) & (toks < VOCAB) & (pos[:, None] < l_out)[None]
    codes = jnp.where(valid, tap[None, None, :] * VOCAB_PAD + toks, sentinel)
    codes = codes.reshape(B * l_out_pad, KSIZE).astype(jnp.int32)

    out_pad = pl.pallas_call(
        functools.partial(scanner_kernel, B=B, l_out_pad=l_out_pad, t_out=t_out),
        out_shape=jax.ShapeDtypeStruct((B, HPAD), jnp.float32),
        grid=(1,),
        in_specs=[
            pl.BlockSpec((B * l_out_pad, KSIZE), lambda i: (0, 0)),        # codes
            pl.BlockSpec((KSIZE * VOCAB_PAD, CONV_PAD), lambda i: (0, 0)),  # fused table
            pl.BlockSpec((1, CONV_PAD), lambda i: (0, 0)),                  # conv bias
            pl.BlockSpec((1, 4 * HPAD), lambda i: (0, 0)),                  # lstm bias
            pl.BlockSpec((1, HPAD), lambda i: (0, 0)),                      # linear bias
            pl.BlockSpec(memory_space=pl.ANY),                              # W_ih (HBM)
            pl.BlockSpec(memory_space=pl.ANY),                              # W_hh (HBM)
            pl.BlockSpec(memory_space=pl.ANY),                              # W_lin (HBM)
        ],
        out_specs=pl.BlockSpec((B, HPAD), lambda i: (0, 0)),
        scratch_shapes=[
            pltpu.VMEM((CONV_PAD, 4 * HPAD), jnp.bfloat16),   # W_ih landing buffer
            pltpu.VMEM((HPAD, 4 * HPAD), jnp.bfloat16),       # W_hh landing buffer
            pltpu.VMEM((HPAD, HPAD), jnp.bfloat16),           # W_lin landing buffer
            pltpu.SemaphoreType.DMA((3,)),
        ],
        compiler_params=pltpu.CompilerParams(
            dimension_semantics=("arbitrary",),
            vmem_limit_bytes=32 * 1024 * 1024),                # safe on v7x's 64 MiB VMEM
    )(codes, params["conv_table"], params["conv_b"], params["lstm_b"], params["lin_b"],
      params["lstm_wih"], params["lstm_whh"], params["lin_w"])

    # drop zero padding lanes, then match PyTorch's final .squeeze()
    return jnp.squeeze(out_pad[:, :NCLS])


def init_params(key):
    ks = jax.random.split(key, 8)
    s = 0.05
    # --- "real" (unpadded) parameters: identical semantics to the PyTorch module ---
    embedding = jax.random.normal(ks[0], (VOCAB, EMB), jnp.float32)        # nn.Embedding(21,128)
    conv_w = s * jax.random.normal(ks[1], (KSIZE, EMB, CONV_OUT), jnp.float32)  # torch (Cout,Cin,K).permute(2,1,0)
    conv_b = s * jax.random.normal(ks[2], (CONV_OUT,), jnp.float32)
    wih = s * jax.random.normal(ks[3], (CONV_OUT, 4 * HID), jnp.float32)   # weight_ih.T, gates i,f,g,o
    whh = s * jax.random.normal(ks[4], (HID, 4 * HID), jnp.float32)        # weight_hh.T
    b_g = s * jax.random.normal(ks[5], (4 * HID,), jnp.float32)            # bias_ih + bias_hh
    lin_w = s * jax.random.normal(ks[6], (HID, NCLS), jnp.float32)         # linear weight.T
    lin_b = s * jax.random.normal(ks[7], (NCLS,), jnp.float32)

    # --- fused embedding+conv table: table[k*32+v, c] = sum_e emb[v,e]*conv_w[k,e,c] ---
    tbl = jnp.einsum('ve,keo->kvo', embedding, conv_w)                     # (K, VOCAB, 64)
    tbl_pad = jnp.zeros((KSIZE, VOCAB_PAD, CONV_PAD), jnp.float32)
    tbl_pad = tbl_pad.at[:, :VOCAB, :CONV_OUT].set(tbl)
    conv_table = tbl_pad.reshape(KSIZE * VOCAB_PAD, CONV_PAD).astype(jnp.bfloat16)

    conv_b_pad = jnp.zeros((1, CONV_PAD), jnp.float32).at[0, :CONV_OUT].set(conv_b)

    # --- lane-aligned, zero-padded LSTM / linear weights (bf16 for the MXU) ---
    def pad_gate_cols(w, rows_in, rows_pad):
        out = jnp.zeros((rows_pad, 4 * HPAD), jnp.float32)
        for g in range(4):
            out = out.at[:rows_in, g * HPAD:g * HPAD + HID].set(w[:, g * HID:(g + 1) * HID])
        return out

    wih_pad = pad_gate_cols(wih, CONV_OUT, CONV_PAD).astype(jnp.bfloat16)
    whh_pad = pad_gate_cols(whh, HID, HPAD).astype(jnp.bfloat16)
    bg_pad = jnp.zeros((1, 4 * HPAD), jnp.float32)
    for g in range(4):
        bg_pad = bg_pad.at[0, g * HPAD:g * HPAD + HID].set(b_g[g * HID:(g + 1) * HID])
    lin_w_pad = (jnp.zeros((HPAD, HPAD), jnp.float32)
                 .at[:HID, :NCLS].set(lin_w).astype(jnp.bfloat16))
    lin_b_pad = jnp.zeros((1, HPAD), jnp.float32).at[0, :NCLS].set(lin_b)

    return {
        "conv_table": conv_table,
        "conv_b": conv_b_pad,
        "lstm_wih": wih_pad,
        "lstm_whh": whh_pad,
        "lstm_b": bg_pad,
        "lin_w": lin_w_pad,
        "lin_b": lin_b_pad,
    }
    # TODO(synk): nn.LSTM(dropout=0.1) is a no-op for a single-layer LSTM in
    # PyTorch (dropout only applies between stacked layers), so it is omitted.


if __name__ == "__main__":
    key = jax.random.PRNGKey(0)
    k_tok, k_par = jax.random.split(key)

    B, L = 2, 24                      # conv -> 25 positions, pool(5,5) -> 5 timesteps
    tokens = jax.random.randint(k_tok, (B, L), 0, VOCAB, dtype=jnp.int32)
    params = init_params(k_par)

    out = jax.jit(scanner_net_forward)(tokens, params)
    out = jax.block_until_ready(out)
    assert out.shape == (B, NCLS), out.shape
    print("KERNEL_OK")
</pallas_src>

<mosaic_0001>
module attributes {stable_mosaic.version = 11 : i64} {
  func.func @scanner_kernel(%arg0: i32, %arg1: memref<64x16xi32, #tpu.memory_space<vmem>>, %arg2: memref<512x128xbf16, #tpu.memory_space<vmem>>, %arg3: memref<1x128xf32, #tpu.memory_space<vmem>>, %arg4: memref<1x512xf32, #tpu.memory_space<vmem>>, %arg5: memref<1x128xf32, #tpu.memory_space<vmem>>, %arg6: memref<128x512xbf16, #tpu.memory_space<any>>, %arg7: memref<128x512xbf16, #tpu.memory_space<any>>, %arg8: memref<128x128xbf16, #tpu.memory_space<any>>, %arg9: memref<2x128xf32, #tpu.memory_space<vmem>>, %arg10: memref<128x512xbf16, #tpu.memory_space<vmem>>, %arg11: memref<128x512xbf16, #tpu.memory_space<vmem>>, %arg12: memref<128x128xbf16, #tpu.memory_space<vmem>>, %arg13: memref<3x!tpu.dma_semaphore, #tpu.memory_space<semaphore_mem>>) attributes {dimension_semantics = [#tpu.dimension_semantics<arbitrary>], iteration_bounds = array<i64: 1>, scalar_prefetch = 0 : i64, scratch_operands = 4 : i64, tpu.core_type = #tpu.core_type<tc>, window_params = [{pipeline_mode = #tpu.pipeline_mode<synchronous>, transform_indices = @transform_0, window_bounds = array<i64: 64, 16>}, {pipeline_mode = #tpu.pipeline_mode<synchronous>, transform_indices = @transform_1, window_bounds = array<i64: 512, 128>}, {pipeline_mode = #tpu.pipeline_mode<synchronous>, transform_indices = @transform_2, window_bounds = array<i64: 1, 128>}, {pipeline_mode = #tpu.pipeline_mode<synchronous>, transform_indices = @transform_3, window_bounds = array<i64: 1, 512>}, {pipeline_mode = #tpu.pipeline_mode<synchronous>, transform_indices = @transform_4, window_bounds = array<i64: 1, 128>}, {}, {}, {}, {pipeline_mode = #tpu.pipeline_mode<synchronous>, transform_indices = @transform_8, window_bounds = array<i64: 2, 128>}]} {
    %c0_i32 = arith.constant 0 : i32
    %0 = tpu.memref_slice %arg13[%c0_i32] : memref<3x!tpu.dma_semaphore, #tpu.memory_space<semaphore_mem>> -> memref<1x!tpu.dma_semaphore, #tpu.memory_space<semaphore_mem>>
    %1 = tpu.memref_squeeze %0 : memref<1x!tpu.dma_semaphore, #tpu.memory_space<semaphore_mem>> -> memref<!tpu.dma_semaphore, #tpu.memory_space<semaphore_mem>>
    tpu.enqueue_dma source(%arg6 : memref<128x512xbf16, #tpu.memory_space<any>>) target(%arg10 : memref<128x512xbf16, #tpu.memory_space<vmem>>) target_semaphore(%1 : memref<!tpu.dma_semaphore, #tpu.memory_space<semaphore_mem>>)
    %c1_i32 = arith.constant 1 : i32
    %2 = tpu.memref_slice %arg13[%c1_i32] : memref<3x!tpu.dma_semaphore, #tpu.memory_space<semaphore_mem>> -> memref<1x!tpu.dma_semaphore, #tpu.memory_space<semaphore_mem>>
    %3 = tpu.memref_squeeze %2 : memref<1x!tpu.dma_semaphore, #tpu.memory_space<semaphore_mem>> -> memref<!tpu.dma_semaphore, #tpu.memory_space<semaphore_mem>>
    tpu.enqueue_dma source(%arg7 : memref<128x512xbf16, #tpu.memory_space<any>>) target(%arg11 : memref<128x512xbf16, #tpu.memory_space<vmem>>) target_semaphore(%3 : memref<!tpu.dma_semaphore, #tpu.memory_space<semaphore_mem>>)
    %c2_i32 = arith.constant 2 : i32
    %4 = tpu.memref_slice %arg13[%c2_i32] : memref<3x!tpu.dma_semaphore, #tpu.memory_space<semaphore_mem>> -> memref<1x!tpu.dma_semaphore, #tpu.memory_space<semaphore_mem>>
    %5 = tpu.memref_squeeze %4 : memref<1x!tpu.dma_semaphore, #tpu.memory_space<semaphore_mem>> -> memref<!tpu.dma_semaphore, #tpu.memory_space<semaphore_mem>>
    tpu.enqueue_dma source(%arg8 : memref<128x128xbf16, #tpu.memory_space<any>>) target(%arg12 : memref<128x128xbf16, #tpu.memory_space<vmem>>) target_semaphore(%5 : memref<!tpu.dma_semaphore, #tpu.memory_space<semaphore_mem>>)
    %6 = tpu.iota {dimensions = array<i32: 1>} : vector<64x512xi32>
    %c0 = arith.constant 0 : index
    %c0_0 = arith.constant 0 : index
    %7 = vector.load %arg1[%c0, %c0_0] : memref<64x16xi32, #tpu.memory_space<vmem>>, vector<64x1xi32>
    %8 = vector.broadcast %7 : vector<64x1xi32> to vector<64x512xi32>
    %9 = arith.cmpi eq, %6, %8 : vector<64x512xi32>
    %c0_1 = arith.constant 0 : index
    %c1 = arith.constant 1 : index
    %10 = vector.load %arg1[%c0_1, %c1] : memref<64x16xi32, #tpu.memory_space<vmem>>, vector<64x1xi32>
    %11 = vector.broadcast %10 : vector<64x1xi32> to vector<64x512xi32>
    %12 = arith.cmpi eq, %6, %11 : vector<64x512xi32>
    %13 = arith.ori %9, %12 : vector<64x512xi1>
    %c0_2 = arith.constant 0 : index
    %c2 = arith.constant 2 : index
    %14 = vector.load %arg1[%c0_2, %c2] : memref<64x16xi32, #tpu.memory_space<vmem>>, vector<64x1xi32>
    %15 = vector.broadcast %14 : vector<64x1xi32> to vector<64x512xi32>
    %16 = arith.cmpi eq, %6, %15 : vector<64x512xi32>
    %17 = arith.ori %13, %16 : vector<64x512xi1>
    %c0_3 = arith.constant 0 : index
    %c3 = arith.constant 3 : index
    %18 = vector.load %arg1[%c0_3, %c3] : memref<64x16xi32, #tpu.memory_space<vmem>>, vector<64x1xi32>
    %19 = vector.broadcast %18 : vector<64x1xi32> to vector<64x512xi32>
    %20 = arith.cmpi eq, %6, %19 : vector<64x512xi32>
    %21 = arith.ori %17, %20 : vector<64x512xi1>
    %c0_4 = arith.constant 0 : index
    %c4 = arith.constant 4 : index
    %22 = vector.load %arg1[%c0_4, %c4] : memref<64x16xi32, #tpu.memory_space<vmem>>, vector<64x1xi32>
    %23 = vector.broadcast %22 : vector<64x1xi32> to vector<64x512xi32>
    %24 = arith.cmpi eq, %6, %23 : vector<64x512xi32>
    %25 = arith.ori %21, %24 : vector<64x512xi1>
    %c0_5 = arith.constant 0 : index
    %c5 = arith.constant 5 : index
    %26 = vector.load %arg1[%c0_5, %c5] : memref<64x16xi32, #tpu.memory_space<vmem>>, vector<64x1xi32>
    %27 = vector.broadcast %26 : vector<64x1xi32> to vector<64x512xi32>
    %28 = arith.cmpi eq, %6, %27 : vector<64x512xi32>
    %29 = arith.ori %25, %28 : vector<64x512xi1>
    %c0_6 = arith.constant 0 : index
    %c6 = arith.constant 6 : index
    %30 = vector.load %arg1[%c0_6, %c6] : memref<64x16xi32, #tpu.memory_space<vmem>>, vector<64x1xi32>
    %31 = vector.broadcast %30 : vector<64x1xi32> to vector<64x512xi32>
    %32 = arith.cmpi eq, %6, %31 : vector<64x512xi32>
    %33 = arith.ori %29, %32 : vector<64x512xi1>
    %c0_7 = arith.constant 0 : index
    %c7 = arith.constant 7 : index
    %34 = vector.load %arg1[%c0_7, %c7] : memref<64x16xi32, #tpu.memory_space<vmem>>, vector<64x1xi32>
    %35 = vector.broadcast %34 : vector<64x1xi32> to vector<64x512xi32>
    %36 = arith.cmpi eq, %6, %35 : vector<64x512xi32>
    %37 = arith.ori %33, %36 : vector<64x512xi1>
    %c0_8 = arith.constant 0 : index
    %c8 = arith.constant 8 : index
    %38 = vector.load %arg1[%c0_8, %c8] : memref<64x16xi32, #tpu.memory_space<vmem>>, vector<64x1xi32>
    %39 = vector.broadcast %38 : vector<64x1xi32> to vector<64x512xi32>
    %40 = arith.cmpi eq, %6, %39 : vector<64x512xi32>
    %41 = arith.ori %37, %40 : vector<64x512xi1>
    %c0_9 = arith.constant 0 : index
    %c9 = arith.constant 9 : index
    %42 = vector.load %arg1[%c0_9, %c9] : memref<64x16xi32, #tpu.memory_space<vmem>>, vector<64x1xi32>
    %43 = vector.broadcast %42 : vector<64x1xi32> to vector<64x512xi32>
    %44 = arith.cmpi eq, %6, %43 : vector<64x512xi32>
    %45 = arith.ori %41, %44 : vector<64x512xi1>
    %c0_10 = arith.constant 0 : index
    %c10 = arith.constant 10 : index
    %46 = vector.load %arg1[%c0_10, %c10] : memref<64x16xi32, #tpu.memory_space<vmem>>, vector<64x1xi32>
    %47 = vector.broadcast %46 : vector<64x1xi32> to vector<64x512xi32>
    %48 = arith.cmpi eq, %6, %47 : vector<64x512xi32>
    %49 = arith.ori %45, %48 : vector<64x512xi1>
    %c0_11 = arith.constant 0 : index
    %c11 = arith.constant 11 : index
    %50 = vector.load %arg1[%c0_11, %c11] : memref<64x16xi32, #tpu.memory_space<vmem>>, vector<64x1xi32>
    %51 = vector.broadcast %50 : vector<64x1xi32> to vector<64x512xi32>
    %52 = arith.cmpi eq, %6, %51 : vector<64x512xi32>
    %53 = arith.ori %49, %52 : vector<64x512xi1>
    %c0_12 = arith.constant 0 : index
    %c12 = arith.constant 12 : index
    %54 = vector.load %arg1[%c0_12, %c12] : memref<64x16xi32, #tpu.memory_space<vmem>>, vector<64x1xi32>
    %55 = vector.broadcast %54 : vector<64x1xi32> to vector<64x512xi32>
    %56 = arith.cmpi eq, %6, %55 : vector<64x512xi32>
    %57 = arith.ori %53, %56 : vector<64x512xi1>
    %c0_13 = arith.constant 0 : index
    %c13 = arith.constant 13 : index
    %58 = vector.load %arg1[%c0_13, %c13] : memref<64x16xi32, #tpu.memory_space<vmem>>, vector<64x1xi32>
    %59 = vector.broadcast %58 : vector<64x1xi32> to vector<64x512xi32>
    %60 = arith.cmpi eq, %6, %59 : vector<64x512xi32>
    %61 = arith.ori %57, %60 : vector<64x512xi1>
    %c0_14 = arith.constant 0 : index
    %c14 = arith.constant 14 : index
    %62 = vector.load %arg1[%c0_14, %c14] : memref<64x16xi32, #tpu.memory_space<vmem>>, vector<64x1xi32>
    %63 = vector.broadcast %62 : vector<64x1xi32> to vector<64x512xi32>
    %64 = arith.cmpi eq, %6, %63 : vector<64x512xi32>
    %65 = arith.ori %61, %64 : vector<64x512xi1>
    %c0_15 = arith.constant 0 : index
    %c15 = arith.constant 15 : index
    %66 = vector.load %arg1[%c0_15, %c15] : memref<64x16xi32, #tpu.memory_space<vmem>>, vector<64x1xi32>
    %67 = vector.broadcast %66 : vector<64x1xi32> to vector<64x512xi32>
    %68 = arith.cmpi eq, %6, %67 : vector<64x512xi32>
    %69 = arith.ori %65, %68 : vector<64x512xi1>
    %70 = arith.extui %69 : vector<64x512xi1> to vector<64x512xi32>
    %71 = arith.sitofp %70 : vector<64x512xi32> to vector<64x512xf32>
    %72 = arith.truncf %71 : vector<64x512xf32> to vector<64x512xbf16>
    %c0_16 = arith.constant 0 : index
    %c0_17 = arith.constant 0 : index
    %73 = vector.load %arg2[%c0_16, %c0_17] : memref<512x128xbf16, #tpu.memory_space<vmem>>, vector<512x128xbf16>
    %cst = arith.constant dense<0.000000e+00> : vector<64x128xf32>
    %74 = tpu.matmul %72, %73, %cst {dimension_numbers = #tpu.dot_dimension_numbers<[1], [0], [0], [1], [0, 0, 1, 1], [], []>} : vector<64x512xbf16>, vector<512x128xbf16>, vector<64x128xf32> -> vector<64x128xf32>
    %c0_18 = arith.constant 0 : index
    %c0_19 = arith.constant 0 : index
    %75 = vector.load %arg3[%c0_18, %c0_19] : memref<1x128xf32, #tpu.memory_space<vmem>>, vector<1x128xf32>
    %76 = vector.shape_cast %75 : vector<1x128xf32> to vector<128xf32>
    %77 = vector.shape_cast %76 : vector<128xf32> to vector<1x128xf32>
    %78 = vector.broadcast %77 : vector<1x128xf32> to vector<64x128xf32>
    %79 = arith.addf %74, %78 : vector<64x128xf32>
    %cst_20 = arith.constant 0.000000e+00 : f32
    %80 = vector.broadcast %cst_20 : f32 to vector<64x128xf32>
    %81 = arith.maximumf %79, %80 : vector<64x128xf32>
    %82 = vector.shape_cast %81 : vector<64x128xf32> to vector<2x32x128xf32>
    %83 = vector.extract_strided_slice %82 {offsets = [0, 0, 0], sizes = [2, 1, 128], strides = [1, 1, 1]} : vector<2x32x128xf32> to vector<2x1x128xf32>
    %84 = vector.shape_cast %83 : vector<2x1x128xf32> to vector<2x128xf32>
    %85 = vector.extract_strided_slice %82 {offsets = [0, 1, 0], sizes = [2, 1, 128], strides = [1, 1, 1]} : vector<2x32x128xf32> to vector<2x1x128xf32>
    %86 = vector.shape_cast %85 : vector<2x1x128xf32> to vector<2x128xf32>
    %87 = arith.maximumf %84, %86 : vector<2x128xf32>
    %88 = vector.extract_strided_slice %82 {offsets = [0, 2, 0], sizes = [2, 1, 128], strides = [1, 1, 1]} : vector<2x32x128xf32> to vector<2x1x128xf32>
    %89 = vector.shape_cast %88 : vector<2x1x128xf32> to vector<2x128xf32>
    %90 = arith.maximumf %87, %89 : vector<2x128xf32>
    %91 = vector.extract_strided_slice %82 {offsets = [0, 3, 0], sizes = [2, 1, 128], strides = [1, 1, 1]} : vector<2x32x128xf32> to vector<2x1x128xf32>
    %92 = vector.shape_cast %91 : vector<2x1x128xf32> to vector<2x128xf32>
    %93 = arith.maximumf %90, %92 : vector<2x128xf32>
    %94 = vector.extract_strided_slice %82 {offsets = [0, 4, 0], sizes = [2, 1, 128], strides = [1, 1, 1]} : vector<2x32x128xf32> to vector<2x1x128xf32>
    %95 = vector.shape_cast %94 : vector<2x1x128xf32> to vector<2x128xf32>
    %96 = arith.maximumf %93, %95 : vector<2x128xf32>
    %97 = vector.extract_strided_slice %82 {offsets = [0, 5, 0], sizes = [2, 1, 128], strides = [1, 1, 1]} : vector<2x32x128xf32> to vector<2x1x128xf32>
    %98 = vector.shape_cast %97 : vector<2x1x128xf32> to vector<2x128xf32>
    %99 = vector.extract_strided_slice %82 {offsets = [0, 6, 0], sizes = [2, 1, 128], strides = [1, 1, 1]} : vector<2x32x128xf32> to vector<2x1x128xf32>
    %100 = vector.shape_cast %99 : vector<2x1x128xf32> to vector<2x128xf32>
    %101 = arith.maximumf %98, %100 : vector<2x128xf32>
    %102 = vector.extract_strided_slice %82 {offsets = [0, 7, 0], sizes = [2, 1, 128], strides = [1, 1, 1]} : vector<2x32x128xf32> to vector<2x1x128xf32>
    %103 = vector.shape_cast %102 : vector<2x1x128xf32> to vector<2x128xf32>
    %104 = arith.maximumf %101, %103 : vector<2x128xf32>
    %105 = vector.extract_strided_slice %82 {offsets = [0, 8, 0], sizes = [2, 1, 128], strides = [1, 1, 1]} : vector<2x32x128xf32> to vector<2x1x128xf32>
    %106 = vector.shape_cast %105 : vector<2x1x128xf32> to vector<2x128xf32>
    %107 = arith.maximumf %104, %106 : vector<2x128xf32>
    %108 = vector.extract_strided_slice %82 {offsets = [0, 9, 0], sizes = [2, 1, 128], strides = [1, 1, 1]} : vector<2x32x128xf32> to vector<2x1x128xf32>
    %109 = vector.shape_cast %108 : vector<2x1x128xf32> to vector<2x128xf32>
    %110 = arith.maximumf %107, %109 : vector<2x128xf32>
    %111 = vector.extract_strided_slice %82 {offsets = [0, 10, 0], sizes = [2, 1, 128], strides = [1, 1, 1]} : vector<2x32x128xf32> to vector<2x1x128xf32>
    %112 = vector.shape_cast %111 : vector<2x1x128xf32> to vector<2x128xf32>
    %113 = vector.extract_strided_slice %82 {offsets = [0, 11, 0], sizes = [2, 1, 128], strides = [1, 1, 1]} : vector<2x32x128xf32> to vector<2x1x128xf32>
    %114 = vector.shape_cast %113 : vector<2x1x128xf32> to vector<2x128xf32>
    %115 = arith.maximumf %112, %114 : vector<2x128xf32>
    %116 = vector.extract_strided_slice %82 {offsets = [0, 12, 0], sizes = [2, 1, 128], strides = [1, 1, 1]} : vector<2x32x128xf32> to vector<2x1x128xf32>
    %117 = vector.shape_cast %116 : vector<2x1x128xf32> to vector<2x128xf32>
    %118 = arith.maximumf %115, %117 : vector<2x128xf32>
    %119 = vector.extract_strided_slice %82 {offsets = [0, 13, 0], sizes = [2, 1, 128], strides = [1, 1, 1]} : vector<2x32x128xf32> to vector<2x1x128xf32>
    %120 = vector.shape_cast %119 : vector<2x1x128xf32> to vector<2x128xf32>
    %121 = arith.maximumf %118, %120 : vector<2x128xf32>
    %122 = vector.extract_strided_slice %82 {offsets = [0, 14, 0], sizes = [2, 1, 128], strides = [1, 1, 1]} : vector<2x32x128xf32> to vector<2x1x128xf32>
    %123 = vector.shape_cast %122 : vector<2x1x128xf32> to vector<2x128xf32>
    %124 = arith.maximumf %121, %123 : vector<2x128xf32>
    %125 = vector.extract_strided_slice %82 {offsets = [0, 15, 0], sizes = [2, 1, 128], strides = [1, 1, 1]} : vector<2x32x128xf32> to vector<2x1x128xf32>
    %126 = vector.shape_cast %125 : vector<2x1x128xf32> to vector<2x128xf32>
    %127 = vector.extract_strided_slice %82 {offsets = [0, 16, 0], sizes = [2, 1, 128], strides = [1, 1, 1]} : vector<2x32x128xf32> to vector<2x1x128xf32>
    %128 = vector.shape_cast %127 : vector<2x1x128xf32> to vector<2x128xf32>
    %129 = arith.maximumf %126, %128 : vector<2x128xf32>
    %130 = vector.extract_strided_slice %82 {offsets = [0, 17, 0], sizes = [2, 1, 128], strides = [1, 1, 1]} : vector<2x32x128xf32> to vector<2x1x128xf32>
    %131 = vector.shape_cast %130 : vector<2x1x128xf32> to vector<2x128xf32>
    %132 = arith.maximumf %129, %131 : vector<2x128xf32>
    %133 = vector.extract_strided_slice %82 {offsets = [0, 18, 0], sizes = [2, 1, 128], strides = [1, 1, 1]} : vector<2x32x128xf32> to vector<2x1x128xf32>
    %134 = vector.shape_cast %133 : vector<2x1x128xf32> to vector<2x128xf32>
    %135 = arith.maximumf %132, %134 : vector<2x128xf32>
    %136 = vector.extract_strided_slice %82 {offsets = [0, 19, 0], sizes = [2, 1, 128], strides = [1, 1, 1]} : vector<2x32x128xf32> to vector<2x1x128xf32>
    %137 = vector.shape_cast %136 : vector<2x1x128xf32> to vector<2x128xf32>
    %138 = arith.maximumf %135, %137 : vector<2x128xf32>
    %139 = vector.extract_strided_slice %82 {offsets = [0, 20, 0], sizes = [2, 1, 128], strides = [1, 1, 1]} : vector<2x32x128xf32> to vector<2x1x128xf32>
    %140 = vector.shape_cast %139 : vector<2x1x128xf32> to vector<2x128xf32>
    %141 = vector.extract_strided_slice %82 {offsets = [0, 21, 0], sizes = [2, 1, 128], strides = [1, 1, 1]} : vector<2x32x128xf32> to vector<2x1x128xf32>
    %142 = vector.shape_cast %141 : vector<2x1x128xf32> to vector<2x128xf32>
    %143 = arith.maximumf %140, %142 : vector<2x128xf32>
    %144 = vector.extract_strided_slice %82 {offsets = [0, 22, 0], sizes = [2, 1, 128], strides = [1, 1, 1]} : vector<2x32x128xf32> to vector<2x1x128xf32>
    %145 = vector.shape_cast %144 : vector<2x1x128xf32> to vector<2x128xf32>
    %146 = arith.maximumf %143, %145 : vector<2x128xf32>
    %147 = vector.extract_strided_slice %82 {offsets = [0, 23, 0], sizes = [2, 1, 128], strides = [1, 1, 1]} : vector<2x32x128xf32> to vector<2x1x128xf32>
    %148 = vector.shape_cast %147 : vector<2x1x128xf32> to vector<2x128xf32>
    %149 = arith.maximumf %146, %148 : vector<2x128xf32>
    %150 = vector.extract_strided_slice %82 {offsets = [0, 24, 0], sizes = [2, 1, 128], strides = [1, 1, 1]} : vector<2x32x128xf32> to vector<2x1x128xf32>
    %151 = vector.shape_cast %150 : vector<2x1x128xf32> to vector<2x128xf32>
    %152 = arith.maximumf %149, %151 : vector<2x128xf32>
    %153 = tpu.concatenate %96, %110, %124, %138, %152 in 0 : vector<2x128xf32>, vector<2x128xf32>, vector<2x128xf32>, vector<2x128xf32>, vector<2x128xf32> -> vector<10x128xf32>
    %c0_i32_21 = arith.constant 0 : i32
    %154 = tpu.memref_slice %arg13[%c0_i32_21] : memref<3x!tpu.dma_semaphore, #tpu.memory_space<semaphore_mem>> -> memref<1x!tpu.dma_semaphore, #tpu.memory_space<semaphore_mem>>
    %155 = tpu.memref_squeeze %154 : memref<1x!tpu.dma_semaphore, #tpu.memory_space<semaphore_mem>> -> memref<!tpu.dma_semaphore, #tpu.memory_space<semaphore_mem>>
    tpu.wait_dma2 semaphore(%155 : memref<!tpu.dma_semaphore, #tpu.memory_space<semaphore_mem>>) src(%arg6 : memref<128x512xbf16, #tpu.memory_space<any>>) dst(%arg10 : memref<128x512xbf16, #tpu.memory_space<vmem>>)
    %156 = arith.truncf %153 : vector<10x128xf32> to vector<10x128xbf16>
    %c0_22 = arith.constant 0 : index
    %c0_23 = arith.constant 0 : index
    %157 = vector.load %arg10[%c0_22, %c0_23] : memref<128x512xbf16, #tpu.memory_space<vmem>>, vector<128x512xbf16>
    %cst_24 = arith.constant dense<0.000000e+00> : vector<10x512xf32>
    %158 = tpu.matmul %156, %157, %cst_24 {dimension_numbers = #tpu.dot_dimension_numbers<[1], [0], [0], [1], [0, 0, 1, 1], [], []>} : vector<10x128xbf16>, vector<128x512xbf16>, vector<10x512xf32> -> vector<10x512xf32>
    %c0_25 = arith.constant 0 : index
    %c0_26 = arith.constant 0 : index
    %159 = vector.load %arg4[%c0_25, %c0_26] : memref<1x512xf32, #tpu.memory_space<vmem>>, vector<1x512xf32>
    %160 = vector.shape_cast %159 : vector<1x512xf32> to vector<512xf32>
    %161 = vector.shape_cast %160 : vector<512xf32> to vector<1x512xf32>
    %162 = vector.broadcast %161 : vector<1x512xf32> to vector<10x512xf32>
    %163 = arith.addf %158, %162 : vector<10x512xf32>
    %c1_i32_27 = arith.constant 1 : i32
    %164 = tpu.memref_slice %arg13[%c1_i32_27] : memref<3x!tpu.dma_semaphore, #tpu.memory_space<semaphore_mem>> -> memref<1x!tpu.dma_semaphore, #tpu.memory_space<semaphore_mem>>
    %165 = tpu.memref_squeeze %164 : memref<1x!tpu.dma_semaphore, #tpu.memory_space<semaphore_mem>> -> memref<!tpu.dma_semaphore, #tpu.memory_space<semaphore_mem>>
    tpu.wait_dma2 semaphore(%165 : memref<!tpu.dma_semaphore, #tpu.memory_space<semaphore_mem>>) src(%arg7 : memref<128x512xbf16, #tpu.memory_space<any>>) dst(%arg11 : memref<128x512xbf16, #tpu.memory_space<vmem>>)
    %cst_28 = arith.constant 0.000000e+00 : f32
    %166 = vector.broadcast %cst_28 : f32 to vector<2x128xf32>
    %cst_29 = arith.constant 0.000000e+00 : f32
    %167 = vector.broadcast %cst_29 : f32 to vector<2x128xf32>
    %168 = vector.extract_strided_slice %163 {offsets = [0, 0], sizes = [2, 512], strides = [1, 1]} : vector<10x512xf32> to vector<2x512xf32>
    %169 = arith.truncf %166 : vector<2x128xf32> to vector<2x128xbf16>
    %c0_30 = arith.constant 0 : index
    %c0_31 = arith.constant 0 : index
    %170 = vector.load %arg11[%c0_30, %c0_31] : memref<128x512xbf16, #tpu.memory_space<vmem>>, vector<128x512xbf16>
    %cst_32 = arith.constant dense<0.000000e+00> : vector<2x512xf32>
    %171 = tpu.matmul %169, %170, %cst_32 {dimension_numbers = #tpu.dot_dimension_numbers<[1], [0], [0], [1], [0, 0, 1, 1], [], []>} : vector<2x128xbf16>, vector<128x512xbf16>, vector<2x512xf32> -> vector<2x512xf32>
    %172 = arith.addf %168, %171 : vector<2x512xf32>
    %173 = vector.extract_strided_slice %172 {offsets = [0, 0], sizes = [2, 128], strides = [1, 1]} : vector<2x512xf32> to vector<2x128xf32>
    %174 = arith.negf %173 : vector<2x128xf32>
    %175 = math.exp %174 : vector<2x128xf32>
    %cst_33 = arith.constant 1.000000e+00 : f32
    %176 = vector.broadcast %cst_33 : f32 to vector<2x128xf32>
    %177 = arith.addf %176, %175 : vector<2x128xf32>
    %178 = arith.divf %176, %177 : vector<2x128xf32>
    %179 = vector.extract_strided_slice %172 {offsets = [0, 128], sizes = [2, 128], strides = [1, 1]} : vector<2x512xf32> to vector<2x128xf32>
    %180 = arith.negf %179 : vector<2x128xf32>
    %181 = math.exp %180 : vector<2x128xf32>
    %cst_34 = arith.constant 1.000000e+00 : f32
    %182 = vector.broadcast %cst_34 : f32 to vector<2x128xf32>
    %183 = arith.addf %182, %181 : vector<2x128xf32>
    %184 = arith.divf %182, %183 : vector<2x128xf32>
    %185 = vector.extract_strided_slice %172 {offsets = [0, 256], sizes = [2, 128], strides = [1, 1]} : vector<2x512xf32> to vector<2x128xf32>
    %186 = math.tanh %185 : vector<2x128xf32>
    %187 = vector.extract_strided_slice %172 {offsets = [0, 384], sizes = [2, 128], strides = [1, 1]} : vector<2x512xf32> to vector<2x128xf32>
    %188 = arith.negf %187 : vector<2x128xf32>
    %189 = math.exp %188 : vector<2x128xf32>
    %cst_35 = arith.constant 1.000000e+00 : f32
    %190 = vector.broadcast %cst_35 : f32 to vector<2x128xf32>
    %191 = arith.addf %190, %189 : vector<2x128xf32>
    %192 = arith.divf %190, %191 : vector<2x128xf32>
    %193 = arith.mulf %184, %167 : vector<2x128xf32>
    %194 = arith.mulf %178, %186 : vector<2x128xf32>
    %195 = arith.addf %193, %194 : vector<2x128xf32>
    %196 = math.tanh %195 : vector<2x128xf32>
    %197 = arith.mulf %192, %196 : vector<2x128xf32>
    %198 = vector.extract_strided_slice %163 {offsets = [2, 0], sizes = [2, 512], strides = [1, 1]} : vector<10x512xf32> to vector<2x512xf32>
    %199 = arith.truncf %197 : vector<2x128xf32> to vector<2x128xbf16>
    %c0_36 = arith.constant 0 : index
    %c0_37 = arith.constant 0 : index
    %200 = vector.load %arg11[%c0_36, %c0_37] : memref<128x512xbf16, #tpu.memory_space<vmem>>, vector<128x512xbf16>
    %cst_38 = arith.constant dense<0.000000e+00> : vector<2x512xf32>
    %201 = tpu.matmul %199, %200, %cst_38 {dimension_numbers = #tpu.dot_dimension_numbers<[1], [0], [0], [1], [0, 0, 1, 1], [], []>} : vector<2x128xbf16>, vector<128x512xbf16>, vector<2x512xf32> -> vector<2x512xf32>
    %202 = arith.addf %198, %201 : vector<2x512xf32>
    %203 = vector.extract_strided_slice %202 {offsets = [0, 0], sizes = [2, 128], strides = [1, 1]} : vector<2x512xf32> to vector<2x128xf32>
    %204 = arith.negf %203 : vector<2x128xf32>
    %205 = math.exp %204 : vector<2x128xf32>
    %cst_39 = arith.constant 1.000000e+00 : f32
    %206 = vector.broadcast %cst_39 : f32 to vector<2x128xf32>
    %207 = arith.addf %206, %205 : vector<2x128xf32>
    %208 = arith.divf %206, %207 : vector<2x128xf32>
    %209 = vector.extract_strided_slice %202 {offsets = [0, 128], sizes = [2, 128], strides = [1, 1]} : vector<2x512xf32> to vector<2x128xf32>
    %210 = arith.negf %209 : vector<2x128xf32>
    %211 = math.exp %210 : vector<2x128xf32>
    %cst_40 = arith.constant 1.000000e+00 : f32
    %212 = vector.broadcast %cst_40 : f32 to vector<2x128xf32>
    %213 = arith.addf %212, %211 : vector<2x128xf32>
    %214 = arith.divf %212, %213 : vector<2x128xf32>
    %215 = vector.extract_strided_slice %202 {offsets = [0, 256], sizes = [2, 128], strides = [1, 1]} : vector<2x512xf32> to vector<2x128xf32>
    %216 = math.tanh %215 : vector<2x128xf32>
    %217 = vector.extract_strided_slice %202 {offsets = [0, 384], sizes = [2, 128], strides = [1, 1]} : vector<2x512xf32> to vector<2x128xf32>
    %218 = arith.negf %217 : vector<2x128xf32>
    %219 = math.exp %218 : vector<2x128xf32>
    %cst_41 = arith.constant 1.000000e+00 : f32
    %220 = vector.broadcast %cst_41 : f32 to vector<2x128xf32>
    %221 = arith.addf %220, %219 : vector<2x128xf32>
    %222 = arith.divf %220, %221 : vector<2x128xf32>
    %223 = arith.mulf %214, %195 : vector<2x128xf32>
    %224 = arith.mulf %208, %216 : vector<2x128xf32>
    %225 = arith.addf %223, %224 : vector<2x128xf32>
    %226 = math.tanh %225 : vector<2x128xf32>
    %227 = arith.mulf %222, %226 : vector<2x128xf32>
    %228 = vector.extract_strided_slice %163 {offsets = [4, 0], sizes = [2, 512], strides = [1, 1]} : vector<10x512xf32> to vector<2x512xf32>
    %229 = arith.truncf %227 : vector<2x128xf32> to vector<2x128xbf16>
    %c0_42 = arith.constant 0 : index
    %c0_43 = arith.constant 0 : index
    %230 = vector.load %arg11[%c0_42, %c0_43] : memref<128x512xbf16, #tpu.memory_space<vmem>>, vector<128x512xbf16>
    %cst_44 = arith.constant dense<0.000000e+00> : vector<2x512xf32>
    %231 = tpu.matmul %229, %230, %cst_44 {dimension_numbers = #tpu.dot_dimension_numbers<[1], [0], [0], [1], [0, 0, 1, 1], [], []>} : vector<2x128xbf16>, vector<128x512xbf16>, vector<2x512xf32> -> vector<2x512xf32>
    %232 = arith.addf %228, %231 : vector<2x512xf32>
    %233 = vector.extract_strided_slice %232 {offsets = [0, 0], sizes = [2, 128], strides = [1, 1]} : vector<2x512xf32> to vector<2x128xf32>
    %234 = arith.negf %233 : vector<2x128xf32>
    %235 = math.exp %234 : vector<2x128xf32>
    %cst_45 = arith.constant 1.000000e+00 : f32
    %236 = vector.broadcast %cst_45 : f32 to vector<2x128xf32>
    %237 = arith.addf %236, %235 : vector<2x128xf32>
    %238 = arith.divf %236, %237 : vector<2x128xf32>
    %239 = vector.extract_strided_slice %232 {offsets = [0, 128], sizes = [2, 128], strides = [1, 1]} : vector<2x512xf32> to vector<2x128xf32>
    %240 = arith.negf %239 : vector<2x128xf32>
    %241 = math.exp %240 : vector<2x128xf32>
    %cst_46 = arith.constant 1.000000e+00 : f32
    %242 = vector.broadcast %cst_46 : f32 to vector<2x128xf32>
    %243 = arith.addf %242, %241 : vector<2x128xf32>
    %244 = arith.divf %242, %243 : vector<2x128xf32>
    %245 = vector.extract_strided_slice %232 {offsets = [0, 256], sizes = [2, 128], strides = [1, 1]} : vector<2x512xf32> to vector<2x128xf32>
    %246 = math.tanh %245 : vector<2x128xf32>
    %247 = vector.extract_strided_slice %232 {offsets = [0, 384], sizes = [2, 128], strides = [1, 1]} : vector<2x512xf32> to vector<2x128xf32>
    %248 = arith.negf %247 : vector<2x128xf32>
    %249 = math.exp %248 : vector<2x128xf32>
    %cst_47 = arith.constant 1.000000e+00 : f32
    %250 = vector.broadcast %cst_47 : f32 to vector<2x128xf32>
    %251 = arith.addf %250, %249 : vector<2x128xf32>
    %252 = arith.divf %250, %251 : vector<2x128xf32>
    %253 = arith.mulf %244, %225 : vector<2x128xf32>
    %254 = arith.mulf %238, %246 : vector<2x128xf32>
    %255 = arith.addf %253, %254 : vector<2x128xf32>
    %256 = math.tanh %255 : vector<2x128xf32>
    %257 = arith.mulf %252, %256 : vector<2x128xf32>
    %258 = vector.extract_strided_slice %163 {offsets = [6, 0], sizes = [2, 512], strides = [1, 1]} : vector<10x512xf32> to vector<2x512xf32>
    %259 = arith.truncf %257 : vector<2x128xf32> to vector<2x128xbf16>
    %c0_48 = arith.constant 0 : index
    %c0_49 = arith.constant 0 : index
    %260 = vector.load %arg11[%c0_48, %c0_49] : memref<128x512xbf16, #tpu.memory_space<vmem>>, vector<128x512xbf16>
    %cst_50 = arith.constant dense<0.000000e+00> : vector<2x512xf32>
    %261 = tpu.matmul %259, %260, %cst_50 {dimension_numbers = #tpu.dot_dimension_numbers<[1], [0], [0], [1], [0, 0, 1, 1], [], []>} : vector<2x128xbf16>, vector<128x512xbf16>, vector<2x512xf32> -> vector<2x512xf32>
    %262 = arith.addf %258, %261 : vector<2x512xf32>
    %263 = vector.extract_strided_slice %262 {offsets = [0, 0], sizes = [2, 128], strides = [1, 1]} : vector<2x512xf32> to vector<2x128xf32>
    %264 = arith.negf %263 : vector<2x128xf32>
    %265 = math.exp %264 : vector<2x128xf32>
    %cst_51 = arith.constant 1.000000e+00 : f32
    %266 = vector.broadcast %cst_51 : f32 to vector<2x128xf32>
    %267 = arith.addf %266, %265 : vector<2x128xf32>
    %268 = arith.divf %266, %267 : vector<2x128xf32>
    %269 = vector.extract_strided_slice %262 {offsets = [0, 128], sizes = [2, 128], strides = [1, 1]} : vector<2x512xf32> to vector<2x128xf32>
    %270 = arith.negf %269 : vector<2x128xf32>
    %271 = math.exp %270 : vector<2x128xf32>
    %cst_52 = arith.constant 1.000000e+00 : f32
    %272 = vector.broadcast %cst_52 : f32 to vector<2x128xf32>
    %273 = arith.addf %272, %271 : vector<2x128xf32>
    %274 = arith.divf %272, %273 : vector<2x128xf32>
    %275 = vector.extract_strided_slice %262 {offsets = [0, 256], sizes = [2, 128], strides = [1, 1]} : vector<2x512xf32> to vector<2x128xf32>
    %276 = math.tanh %275 : vector<2x128xf32>
    %277 = vector.extract_strided_slice %262 {offsets = [0, 384], sizes = [2, 128], strides = [1, 1]} : vector<2x512xf32> to vector<2x128xf32>
    %278 = arith.negf %277 : vector<2x128xf32>
    %279 = math.exp %278 : vector<2x128xf32>
    %cst_53 = arith.constant 1.000000e+00 : f32
    %280 = vector.broadcast %cst_53 : f32 to vector<2x128xf32>
    %281 = arith.addf %280, %279 : vector<2x128xf32>
    %282 = arith.divf %280, %281 : vector<2x128xf32>
    %283 = arith.mulf %274, %255 : vector<2x128xf32>
    %284 = arith.mulf %268, %276 : vector<2x128xf32>
    %285 = arith.addf %283, %284 : vector<2x128xf32>
    %286 = math.tanh %285 : vector<2x128xf32>
    %287 = arith.mulf %282, %286 : vector<2x128xf32>
    %288 = vector.extract_strided_slice %163 {offsets = [8, 0], sizes = [2, 512], strides = [1, 1]} : vector<10x512xf32> to vector<2x512xf32>
    %289 = arith.truncf %287 : vector<2x128xf32> to vector<2x128xbf16>
    %c0_54 = arith.constant 0 : index
    %c0_55 = arith.constant 0 : index
    %290 = vector.load %arg11[%c0_54, %c0_55] : memref<128x512xbf16, #tpu.memory_space<vmem>>, vector<128x512xbf16>
    %cst_56 = arith.constant dense<0.000000e+00> : vector<2x512xf32>
    %291 = tpu.matmul %289, %290, %cst_56 {dimension_numbers = #tpu.dot_dimension_numbers<[1], [0], [0], [1], [0, 0, 1, 1], [], []>} : vector<2x128xbf16>, vector<128x512xbf16>, vector<2x512xf32> -> vector<2x512xf32>
    %292 = arith.addf %288, %291 : vector<2x512xf32>
    %293 = vector.extract_strided_slice %292 {offsets = [0, 0], sizes = [2, 128], strides = [1, 1]} : vector<2x512xf32> to vector<2x128xf32>
    %294 = arith.negf %293 : vector<2x128xf32>
    %295 = math.exp %294 : vector<2x128xf32>
    %cst_57 = arith.constant 1.000000e+00 : f32
    %296 = vector.broadcast %cst_57 : f32 to vector<2x128xf32>
    %297 = arith.addf %296, %295 : vector<2x128xf32>
    %298 = arith.divf %296, %297 : vector<2x128xf32>
    %299 = vector.extract_strided_slice %292 {offsets = [0, 128], sizes = [2, 128], strides = [1, 1]} : vector<2x512xf32> to vector<2x128xf32>
    %300 = arith.negf %299 : vector<2x128xf32>
    %301 = math.exp %300 : vector<2x128xf32>
    %cst_58 = arith.constant 1.000000e+00 : f32
    %302 = vector.broadcast %cst_58 : f32 to vector<2x128xf32>
    %303 = arith.addf %302, %301 : vector<2x128xf32>
    %304 = arith.divf %302, %303 : vector<2x128xf32>
    %305 = vector.extract_strided_slice %292 {offsets = [0, 256], sizes = [2, 128], strides = [1, 1]} : vector<2x512xf32> to vector<2x128xf32>
    %306 = math.tanh %305 : vector<2x128xf32>
    %307 = vector.extract_strided_slice %292 {offsets = [0, 384], sizes = [2, 128], strides = [1, 1]} : vector<2x512xf32> to vector<2x128xf32>
    %308 = arith.negf %307 : vector<2x128xf32>
    %309 = math.exp %308 : vector<2x128xf32>
    %cst_59 = arith.constant 1.000000e+00 : f32
    %310 = vector.broadcast %cst_59 : f32 to vector<2x128xf32>
    %311 = arith.addf %310, %309 : vector<2x128xf32>
    %312 = arith.divf %310, %311 : vector<2x128xf32>
    %313 = arith.mulf %304, %285 : vector<2x128xf32>
    %314 = arith.mulf %298, %306 : vector<2x128xf32>
    %315 = arith.addf %313, %314 : vector<2x128xf32>
    %316 = math.tanh %315 : vector<2x128xf32>
    %317 = arith.mulf %312, %316 : vector<2x128xf32>
    %c2_i32_60 = arith.constant 2 : i32
    %318 = tpu.memref_slice %arg13[%c2_i32_60] : memref<3x!tpu.dma_semaphore, #tpu.memory_space<semaphore_mem>> -> memref<1x!tpu.dma_semaphore, #tpu.memory_space<semaphore_mem>>
    %319 = tpu.memref_squeeze %318 : memref<1x!tpu.dma_semaphore, #tpu.memory_space<semaphore_mem>> -> memref<!tpu.dma_semaphore, #tpu.memory_space<semaphore_mem>>
    tpu.wait_dma2 semaphore(%319 : memref<!tpu.dma_semaphore, #tpu.memory_space<semaphore_mem>>) src(%arg8 : memref<128x128xbf16, #tpu.memory_space<any>>) dst(%arg12 : memref<128x128xbf16, #tpu.memory_space<vmem>>)
    %320 = arith.truncf %317 : vector<2x128xf32> to vector<2x128xbf16>
    %c0_61 = arith.constant 0 : index
    %c0_62 = arith.constant 0 : index
    %321 = vector.load %arg12[%c0_61, %c0_62] : memref<128x128xbf16, #tpu.memory_space<vmem>>, vector<128x128xbf16>
    %cst_63 = arith.constant dense<0.000000e+00> : vector<2x128xf32>
    %322 = tpu.matmul %320, %321, %cst_63 {dimension_numbers = #tpu.dot_dimension_numbers<[1], [0], [0], [1], [0, 0, 1, 1], [], []>} : vector<2x128xbf16>, vector<128x128xbf16>, vector<2x128xf32> -> vector<2x128xf32>
    %c0_64 = arith.constant 0 : index
    %c0_65 = arith.constant 0 : index
    %323 = vector.load %arg5[%c0_64, %c0_65] : memref<1x128xf32, #tpu.memory_space<vmem>>, vector<1x128xf32>
    %324 = vector.shape_cast %323 : vector<1x128xf32> to vector<128xf32>
    %325 = vector.shape_cast %324 : vector<128xf32> to vector<1x128xf32>
    %326 = vector.broadcast %325 : vector<1x128xf32> to vector<2x128xf32>
    %327 = arith.addf %322, %326 : vector<2x128xf32>
    %c0_66 = arith.constant 0 : index
    %c0_67 = arith.constant 0 : index
    %328 = vector.load %arg9[%c0_66, %c0_67] : memref<2x128xf32, #tpu.memory_space<vmem>>, vector<2x128xf32>
    tpu.vector_store %arg9[%c0_66, %c0_67], %327 {strides = array<i32>} : memref<2x128xf32, #tpu.memory_space<vmem>>, vector<2x128xf32>,
    return
  }
  func.func @transform_0(%arg0: i32) -> (i32, i32) {
    %c0_i32 = arith.constant 0 : i32
    %c0_i32_0 = arith.constant 0 : i32
    %c0_i32_1 = arith.constant 0 : i32
    return %c0_i32, %c0_i32_0 : i32, i32
  }
  func.func @transform_1(%arg0: i32) -> (i32, i32) {
    %c0_i32 = arith.constant 0 : i32
    %c0_i32_0 = arith.constant 0 : i32
    %c0_i32_1 = arith.constant 0 : i32
    return %c0_i32, %c0_i32_0 : i32, i32
  }
  func.func @transform_2(%arg0: i32) -> (i32, i32) {
    %c0_i32 = arith.constant 0 : i32
    %c0_i32_0 = arith.constant 0 : i32
    %c0_i32_1 = arith.constant 0 : i32
    return %c0_i32, %c0_i32_0 : i32, i32
  }
  func.func @transform_3(%arg0: i32) -> (i32, i32) {
    %c0_i32 = arith.constant 0 : i32
    %c0_i32_0 = arith.constant 0 : i32
    %c0_i32_1 = arith.constant 0 : i32
    return %c0_i32, %c0_i32_0 : i32, i32
  }
  func.func @transform_4(%arg0: i32) -> (i32, i32) {
    %c0_i32 = arith.constant 0 : i32
    %c0_i32_0 = arith.constant 0 : i32
    %c0_i32_1 = arith.constant 0 : i32
    return %c0_i32, %c0_i32_0 : i32, i32
  }
  func.func @transform_8(%arg0: i32) -> (i32, i32) {
    %c0_i32 = arith.constant 0 : i32
    %c0_i32_0 = arith.constant 0 : i32
    %c0_i32_1 = arith.constant 0 : i32
    return %c0_i32, %c0_i32_0 : i32, i32
  }
}

</mosaic_0001>

<llo_original>
// kernel: scanner_net_forward.1
$region0: #{scanner_net_forward.1}
  #allocation0 [shape = 'u32[]', space=smem, size = 0x4, offset = 0x4, fixed_abs, tag = 'smem constant byte address 0x4 - core index']
  #allocation1 [shape = 'u32[72,128]{1,0:T(1,128)}', space=vmem, size = 0x9000, scoped, tag = 'internal scratch']
  #allocation2 [shape = 'bf16[128,512]{1,0:T(8,128)(2,1)}', space=vmem, size = 0x20000, scoped, tag = 'scratch operand']
  #allocation3 [shape = 'bf16[128,512]{1,0:T(8,128)(2,1)}', space=vmem, size = 0x20000, scoped, tag = 'scratch operand']
  #allocation4 [shape = 'bf16[128,128]{1,0:T(8,128)(2,1)}', space=vmem, size = 0x8000, scoped, tag = 'scratch operand']
  #allocation5 [shape = 's32[3]{0}', space=sflag, size = 0xc, scoped, tag = 'scratch operand']
  #allocation8 [shape = 's32[]', space=sflag, size = 0x4, offset = 0, fixed_abs, tag = 'sflag constant byte address 0x0 - dummy sync flag']
  #allocation9 [shape = 's32[]', space=sflag, size = 0x4, offset = 0, fixed_abs, tag = 'sflag constant byte address 0x0 - dummy sync flag']
  #allocation10 [shape = 's32[]', space=sflag, size = 0x4, offset = 0, fixed_abs, tag = 'sflag constant byte address 0x0 - dummy sync flag']
  %s0 = inlined_call_operand.vmem [shape: s32[64,16], index: 0, kind: input, shape index: {}]
  %s1 = inlined_call_operand.vmem [shape: bf16[512,128], index: 1, kind: input, shape index: {}]
  %s2 = inlined_call_operand.vmem [shape: f32[1,128], index: 2, kind: input, shape index: {}]
  %s3 = inlined_call_operand.vmem [shape: f32[1,512], index: 3, kind: input, shape index: {}]
  %s4 = inlined_call_operand.vmem [shape: f32[1,128], index: 4, kind: input, shape index: {}]
  %s5 = inlined_call_operand.vmem [shape: bf16[128,512], index: 5, kind: input, shape index: {}]
  %s6 = inlined_call_operand.vmem [shape: bf16[128,512], index: 6, kind: input, shape index: {}]
  %s7 = inlined_call_operand.vmem [shape: bf16[128,128], index: 7, kind: input, shape index: {}]
  %s8 = inlined_call_operand.hbm [shape: f32[2,128], index: 8, kind: output, shape index: {}]
  %s9 = sld [smem:[#allocation0]]
  $region87: #{scanner_net_forward.1} parent=0
    _
  %s11 = ssub.s32 1, %s9
  %s12 = scalar_select 0, %s11, %s9
  $region1: #{scanner_net_forward.1} parent=0
    #allocation6 [shape = 'u8[1024]{0}', space=vmem, size = 0x400, scoped, tag = 'output window, operand 0, single buffered']
    #allocation7 [shape = 's32[1]{0}', space=sflag, size = 0x4, scoped, tag = 'scoped memory for scanner_net_forward.1']
    %13 = vsyncpa [#allocation7], 0
    // Predicated region
    $region2: #{scanner_net_forward.1} parent=1 // pred_check
      _
    $region3: #{scanner_net_forward.1} parent=1 // pred_check_branch
      %15 = sbr.rel (0) target = $region5
    $region4: #{scanner_net_forward.1} parent=1 // pred_region
      _
    $region5: #{scanner_net_forward.1} parent=1 // pred_fallthru
      _
    // Predicated region
    $region6: #{scanner_net_forward.1} parent=1 // pred_check
      _
    $region7: #{scanner_net_forward.1} parent=1 // pred_check_branch
      %17 = sbr.rel (0) target = $region9
    $region8: #{scanner_net_forward.1} parent=1 // pred_region
      _
    $region9: #{scanner_net_forward.1} parent=1 // pred_fallthru
      _
    // Predicated region
    $region10: #{scanner_net_forward.1} parent=1 // pred_check
      _
    $region11: #{scanner_net_forward.1} parent=1 // pred_check_branch
      %19 = sbr.rel (0) target = $region13
    $region12: #{scanner_net_forward.1} parent=1 // pred_region
      _
    $region13: #{scanner_net_forward.1} parent=1 // pred_fallthru
      _
    // Predicated region
    $region14: #{scanner_net_forward.1} parent=1 // pred_check
      _
    $region15: #{scanner_net_forward.1} parent=1 // pred_check_branch
      %21 = sbr.rel (0) target = $region17
    $region16: #{scanner_net_forward.1} parent=1 // pred_region
      _
    $region17: #{scanner_net_forward.1} parent=1 // pred_fallthru
      _
    // Predicated region
    $region18: #{scanner_net_forward.1} parent=1 // pred_check
      _
    $region19: #{scanner_net_forward.1} parent=1 // pred_check_branch
      %23 = sbr.rel (0) target = $region21
    $region20: #{scanner_net_forward.1} parent=1 // pred_region
      _
    $region21: #{scanner_net_forward.1} parent=1 // pred_fallthru
      _
    // Predicated region
    $region22: #{scanner_net_forward.1} parent=1 // pred_check
      _
    $region23: #{scanner_net_forward.1} parent=1 // pred_check_branch
      %26 = sbr.rel (0) target = $region25
    $region24: #{scanner_net_forward.1} parent=1 // pred_region
      loop: start=0, step=1, limit=1
      $region26: #{scanner_net_forward.1} parent=24 // loop_pre_header
        _
      $region27: #{scanner_net_forward.1} parent=24 // loop_header
        %s28 = sphi 0, %s32
        %p29 = scmp.ge.s32.totalorder %s28, 1
        %s33 = sphi %s5, %s5
        %s34 = sphi [#allocation2], [#allocation2]
      $region28: #{scanner_net_forward.1} parent=24 // loop_header_branch
        %31 = sbr.rel (%p29) target = $region32
      $region29: #{scanner_net_forward.1} parent=24 // loop_body
        %v35 = vld [vmem:[%s33] sm:$0xff]
        %36 = vst [vmem:[%s34] sm:$0xff] %v35
        %v37 = vld [vmem:[%s33 + $0x8] sm:$0xff]
        %38 = vst [vmem:[%s34 + $0x8] sm:$0xff] %v37
        %v39 = vld [vmem:[%s33 + $0x10] sm:$0xff]
        %40 = vst [vmem:[%s34 + $0x10] sm:$0xff] %v39
        %v41 = vld [vmem:[%s33 + $0x18] sm:$0xff]
        %42 = vst [vmem:[%s34 + $0x18] sm:$0xff] %v41
        %v43 = vld [vmem:[%s33 + $0x20] sm:$0xff]
        %44 = vst [vmem:[%s34 + $0x20] sm:$0xff] %v43
        %v45 = vld [vmem:[%s33 + $0x28] sm:$0xff]
        %46 = vst [vmem:[%s34 + $0x28] sm:$0xff] %v45
        %v47 = vld [vmem:[%s33 + $0x30] sm:$0xff]
        %48 = vst [vmem:[%s34 + $0x30] sm:$0xff] %v47
        %v49 = vld [vmem:[%s33 + $0x38] sm:$0xff]
        %50 = vst [vmem:[%s34 + $0x38] sm:$0xff] %v49
        %v51 = vld [vmem:[%s33 + $0x40] sm:$0xff]
        %52 = vst [vmem:[%s34 + $0x40] sm:$0xff] %v51
        %v53 = vld [vmem:[%s33 + $0x48] sm:$0xff]
        %54 = vst [vmem:[%s34 + $0x48] sm:$0xff] %v53
        %v55 = vld [vmem:[%s33 + $0x50] sm:$0xff]
        %56 = vst [vmem:[%s34 + $0x50] sm:$0xff] %v55
        %v57 = vld [vmem:[%s33 + $0x58] sm:$0xff]
        %58 = vst [vmem:[%s34 + $0x58] sm:$0xff] %v57
        %v59 = vld [vmem:[%s33 + $0x60] sm:$0xff]
        %60 = vst [vmem:[%s34 + $0x60] sm:$0xff] %v59
        %v61 = vld [vmem:[%s33 + $0x68] sm:$0xff]
        %62 = vst [vmem:[%s34 + $0x68] sm:$0xff] %v61
        %v63 = vld [vmem:[%s33 + $0x70] sm:$0xff]
        %64 = vst [vmem:[%s34 + $0x70] sm:$0xff] %v63
        %v65 = vld [vmem:[%s33 + $0x78] sm:$0xff]
        %66 = vst [vmem:[%s34 + $0x78] sm:$0xff] %v65
        %v67 = vld [vmem:[%s33 + $0x80] sm:$0xff]
        %68 = vst [vmem:[%s34 + $0x80] sm:$0xff] %v67
        %v69 = vld [vmem:[%s33 + $0x88] sm:$0xff]
        %70 = vst [vmem:[%s34 + $0x88] sm:$0xff] %v69
        %v71 = vld [vmem:[%s33 + $0x90] sm:$0xff]
        %72 = vst [vmem:[%s34 + $0x90] sm:$0xff] %v71
        %v73 = vld [vmem:[%s33 + $0x98] sm:$0xff]
        %74 = vst [vmem:[%s34 + $0x98] sm:$0xff] %v73
        %v75 = vld [vmem:[%s33 + $0xa0] sm:$0xff]
        %76 = vst [vmem:[%s34 + $0xa0] sm:$0xff] %v75
        %v77 = vld [vmem:[%s33 + $0xa8] sm:$0xff]
        %78 = vst [vmem:[%s34 + $0xa8] sm:$0xff] %v77
        %v79 = vld [vmem:[%s33 + $0xb0] sm:$0xff]
        %80 = vst [vmem:[%s34 + $0xb0] sm:$0xff] %v79
        %v81 = vld [vmem:[%s33 + $0xb8] sm:$0xff]
        %82 = vst [vmem:[%s34 + $0xb8] sm:$0xff] %v81
        %v83 = vld [vmem:[%s33 + $0xc0] sm:$0xff]
        %84 = vst [vmem:[%s34 + $0xc0] sm:$0xff] %v83
        %v85 = vld [vmem:[%s33 + $0xc8] sm:$0xff]
        %86 = vst [vmem:[%s34 + $0xc8] sm:$0xff] %v85
        %v87 = vld [vmem:[%s33 + $0xd0] sm:$0xff]
        %88 = vst [vmem:[%s34 + $0xd0] sm:$0xff] %v87
        %v89 = vld [vmem:[%s33 + $0xd8] sm:$0xff]
        %90 = vst [vmem:[%s34 + $0xd8] sm:$0xff] %v89
        %v91 = vld [vmem:[%s33 + $0xe0] sm:$0xff]
        %92 = vst [vmem:[%s34 + $0xe0] sm:$0xff] %v91
        %v93 = vld [vmem:[%s33 + $0xe8] sm:$0xff]
        %94 = vst [vmem:[%s34 + $0xe8] sm:$0xff] %v93
        %v95 = vld [vmem:[%s33 + $0xf0] sm:$0xff]
        %96 = vst [vmem:[%s34 + $0xf0] sm:$0xff] %v95
        %v97 = vld [vmem:[%s33 + $0xf8] sm:$0xff]
        %98 = vst [vmem:[%s34 + $0xf8] sm:$0xff] %v97
      $region30: #{scanner_net_forward.1} parent=24 // loop_footer
        %s32 = sadd.s32 1, %s28
      $region31: #{scanner_net_forward.1} parent=24 // loop_footer_branch
        %27 = sbr.rel target = $region27
      $region32: #{scanner_net_forward.1} parent=24 // loop_exit
        _
    $region25: #{scanner_net_forward.1} parent=1 // pred_fallthru
      _
    // Predicated region
    $region33: #{scanner_net_forward.1} parent=1 // pred_check
      _
    $region34: #{scanner_net_forward.1} parent=1 // pred_check_branch
      %100 = sbr.rel target = $region36
    $region35: #{scanner_net_forward.1} parent=1 // pred_region
      _
    $region36: #{scanner_net_forward.1} parent=1 // pred_fallthru
      _
    // Predicated region
    $region37: #{scanner_net_forward.1} parent=1 // pred_check
      _
    $region38: #{scanner_net_forward.1} parent=1 // pred_check_branch
      %103 = sbr.rel (0) target = $region40
    $region39: #{scanner_net_forward.1} parent=1 // pred_region
      %104 = vsyncadd [#allocation5], 4096
    $region40: #{scanner_net_forward.1} parent=1 // pred_fallthru
      _
    %s105 = scalar_lea.sflag [#allocation5], 1
    // Predicated region
    $region41: #{scanner_net_forward.1} parent=1 // pred_check
      _
    $region42: #{scanner_net_forward.1} parent=1 // pred_check_branch
      %107 = sbr.rel (0) target = $region44
    $region43: #{scanner_net_forward.1} parent=1 // pred_region
      loop: start=0, step=1, limit=1
      $region45: #{scanner_net_forward.1} parent=43 // loop_pre_header
        _
      $region46: #{scanner_net_forward.1} parent=43 // loop_header
        %s109 = sphi 0, %s113
        %p110 = scmp.ge.s32.totalorder %s109, 1
        %s114 = sphi %s6, %s6
        %s115 = sphi [#allocation3], [#allocation3]
      $region47: #{scanner_net_forward.1} parent=43 // loop_header_branch
        %112 = sbr.rel (%p110) target = $region51
      $region48: #{scanner_net_forward.1} parent=43 // loop_body
        %v116 = vld [vmem:[%s114] sm:$0xff]
        %117 = vst [vmem:[%s115] sm:$0xff] %v116
        %v118 = vld [vmem:[%s114 + $0x8] sm:$0xff]
        %119 = vst [vmem:[%s115 + $0x8] sm:$0xff] %v118
        %v120 = vld [vmem:[%s114 + $0x10] sm:$0xff]
        %121 = vst [vmem:[%s115 + $0x10] sm:$0xff] %v120
        %v122 = vld [vmem:[%s114 + $0x18] sm:$0xff]
        %123 = vst [vmem:[%s115 + $0x18] sm:$0xff] %v122
        %v124 = vld [vmem:[%s114 + $0x20] sm:$0xff]
        %125 = vst [vmem:[%s115 + $0x20] sm:$0xff] %v124
        %v126 = vld [vmem:[%s114 + $0x28] sm:$0xff]
        %127 = vst [vmem:[%s115 + $0x28] sm:$0xff] %v126
        %v128 = vld [vmem:[%s114 + $0x30] sm:$0xff]
        %129 = vst [vmem:[%s115 + $0x30] sm:$0xff] %v128
        %v130 = vld [vmem:[%s114 + $0x38] sm:$0xff]
        %131 = vst [vmem:[%s115 + $0x38] sm:$0xff] %v130
        %v132 = vld [vmem:[%s114 + $0x40] sm:$0xff]
        %133 = vst [vmem:[%s115 + $0x40] sm:$0xff] %v132
        %v134 = vld [vmem:[%s114 + $0x48] sm:$0xff]
        %135 = vst [vmem:[%s115 + $0x48] sm:$0xff] %v134
        %v136 = vld [vmem:[%s114 + $0x50] sm:$0xff]
        %137 = vst [vmem:[%s115 + $0x50] sm:$0xff] %v136
        %v138 = vld [vmem:[%s114 + $0x58] sm:$0xff]
        %139 = vst [vmem:[%s115 + $0x58] sm:$0xff] %v138
        %v140 = vld [vmem:[%s114 + $0x60] sm:$0xff]
        %141 = vst [vmem:[%s115 + $0x60] sm:$0xff] %v140
        %v142 = vld [vmem:[%s114 + $0x68] sm:$0xff]
        %143 = vst [vmem:[%s115 + $0x68] sm:$0xff] %v142
        %v144 = vld [vmem:[%s114 + $0x70] sm:$0xff]
        %145 = vst [vmem:[%s115 + $0x70] sm:$0xff] %v144
        %v146 = vld [vmem:[%s114 + $0x78] sm:$0xff]
        %147 = vst [vmem:[%s115 + $0x78] sm:$0xff] %v146
        %v148 = vld [vmem:[%s114 + $0x80] sm:$0xff]
        %149 = vst [vmem:[%s115 + $0x80] sm:$0xff] %v148
        %v150 = vld [vmem:[%s114 + $0x88] sm:$0xff]
        %151 = vst [vmem:[%s115 + $0x88] sm:$0xff] %v150
        %v152 = vld [vmem:[%s114 + $0x90] sm:$0xff]
        %153 = vst [vmem:[%s115 + $0x90] sm:$0xff] %v152
        %v154 = vld [vmem:[%s114 + $0x98] sm:$0xff]
        %155 = vst [vmem:[%s115 + $0x98] sm:$0xff] %v154
        %v156 = vld [vmem:[%s114 + $0xa0] sm:$0xff]
        %157 = vst [vmem:[%s115 + $0xa0] sm:$0xff] %v156
        %v158 = vld [vmem:[%s114 + $0xa8] sm:$0xff]
        %159 = vst [vmem:[%s115 + $0xa8] sm:$0xff] %v158
        %v160 = vld [vmem:[%s114 + $0xb0] sm:$0xff]
        %161 = vst [vmem:[%s115 + $0xb0] sm:$0xff] %v160
        %v162 = vld [vmem:[%s114 + $0xb8] sm:$0xff]
        %163 = vst [vmem:[%s115 + $0xb8] sm:$0xff] %v162
        %v164 = vld [vmem:[%s114 + $0xc0] sm:$0xff]
        %165 = vst [vmem:[%s115 + $0xc0] sm:$0xff] %v164
        %v166 = vld [vmem:[%s114 + $0xc8] sm:$0xff]
        %167 = vst [vmem:[%s115 + $0xc8] sm:$0xff] %v166
        %v168 = vld [vmem:[%s114 + $0xd0] sm:$0xff]
        %169 = vst [vmem:[%s115 + $0xd0] sm:$0xff] %v168
        %v170 = vld [vmem:[%s114 + $0xd8] sm:$0xff]
        %171 = vst [vmem:[%s115 + $0xd8] sm:$0xff] %v170
        %v172 = vld [vmem:[%s114 + $0xe0] sm:$0xff]
        %173 = vst [vmem:[%s115 + $0xe0] sm:$0xff] %v172
        %v174 = vld [vmem:[%s114 + $0xe8] sm:$0xff]
        %175 = vst [vmem:[%s115 + $0xe8] sm:$0xff] %v174
        %v176 = vld [vmem:[%s114 + $0xf0] sm:$0xff]
        %177 = vst [vmem:[%s115 + $0xf0] sm:$0xff] %v176
        %v178 = vld [vmem:[%s114 + $0xf8] sm:$0xff]
        %179 = vst [vmem:[%s115 + $0xf8] sm:$0xff] %v178
      $region49: #{scanner_net_forward.1} parent=43 // loop_footer
        %s113 = sadd.s32 1, %s109
      $region50: #{scanner_net_forward.1} parent=43 // loop_footer_branch
        %108 = sbr.rel target = $region46
      $region51: #{scanner_net_forward.1} parent=43 // loop_exit
        _
    $region44: #{scanner_net_forward.1} parent=1 // pred_fallthru
      _
    // Predicated region
    $region52: #{scanner_net_forward.1} parent=1 // pred_check
      _
    $region53: #{scanner_net_forward.1} parent=1 // pred_check_branch
      %181 = sbr.rel target = $region55
    $region54: #{scanner_net_forward.1} parent=1 // pred_region
      _
    $region55: #{scanner_net_forward.1} parent=1 // pred_fallthru
      _
    // Predicated region
    $region56: #{scanner_net_forward.1} parent=1 // pred_check
      _
    $region57: #{scanner_net_forward.1} parent=1 // pred_check_branch
      %184 = sbr.rel (0) target = $region59
    $region58: #{scanner_net_forward.1} parent=1 // pred_region
      %185 = vsyncadd %s105, 4096
    $region59: #{scanner_net_forward.1} parent=1 // pred_fallthru
      _
    %s186 = scalar_lea.sflag [#allocation5], 2
    // Predicated region
    $region60: #{scanner_net_forward.1} parent=1 // pred_check
      _
    $region61: #{scanner_net_forward.1} parent=1 // pred_check_branch
      %188 = sbr.rel (0) target = $region63
    $region62: #{scanner_net_forward.1} parent=1 // pred_region
      loop: start=0, step=1, limit=1
      $region64: #{scanner_net_forward.1} parent=62 // loop_pre_header
        _
      $region65: #{scanner_net_forward.1} parent=62 // loop_header
        %s190 = sphi 0, %s194
        %p191 = scmp.ge.s32.totalorder %s190, 1
        %s195 = sphi %s7, %s7
        %s196 = sphi [#allocation4], [#allocation4]
      $region66: #{scanner_net_forward.1} parent=62 // loop_header_branch
        %193 = sbr.rel (%p191) target = $region70
      $region67: #{scanner_net_forward.1} parent=62 // loop_body
        %v197 = vld [vmem:[%s195] sm:$0xff]
        %198 = vst [vmem:[%s196] sm:$0xff] %v197
        %v199 = vld [vmem:[%s195 + $0x8] sm:$0xff]
        %200 = vst [vmem:[%s196 + $0x8] sm:$0xff] %v199
        %v201 = vld [vmem:[%s195 + $0x10] sm:$0xff]
        %202 = vst [vmem:[%s196 + $0x10] sm:$0xff] %v201
        %v203 = vld [vmem:[%s195 + $0x18] sm:$0xff]
        %204 = vst [vmem:[%s196 + $0x18] sm:$0xff] %v203
        %v205 = vld [vmem:[%s195 + $0x20] sm:$0xff]
        %206 = vst [vmem:[%s196 + $0x20] sm:$0xff] %v205
        %v207 = vld [vmem:[%s195 + $0x28] sm:$0xff]
        %208 = vst [vmem:[%s196 + $0x28] sm:$0xff] %v207
        %v209 = vld [vmem:[%s195 + $0x30] sm:$0xff]
        %210 = vst [vmem:[%s196 + $0x30] sm:$0xff] %v209
        %v211 = vld [vmem:[%s195 + $0x38] sm:$0xff]
        %212 = vst [vmem:[%s196 + $0x38] sm:$0xff] %v211
      $region68: #{scanner_net_forward.1} parent=62 // loop_footer
        %s194 = sadd.s32 1, %s190
      $region69: #{scanner_net_forward.1} parent=62 // loop_footer_branch
        %189 = sbr.rel target = $region65
      $region70: #{scanner_net_forward.1} parent=62 // loop_exit
        _
    $region63: #{scanner_net_forward.1} parent=1 // pred_fallthru
      _
    // Predicated region
    $region71: #{scanner_net_forward.1} parent=1 // pred_check
      _
    $region72: #{scanner_net_forward.1} parent=1 // pred_check_branch
      %214 = sbr.rel target = $region74
    $region73: #{scanner_net_forward.1} parent=1 // pred_region
      _
    $region74: #{scanner_net_forward.1} parent=1 // pred_fallthru
      _
    // Predicated region
    $region75: #{scanner_net_forward.1} parent=1 // pred_check
      _
    $region76: #{scanner_net_forward.1} parent=1 // pred_check_branch
      %217 = sbr.rel (0) target = $region78
    $region77: #{scanner_net_forward.1} parent=1 // pred_region
      %218 = vsyncadd %s186, 1024
    $region78: #{scanner_net_forward.1} parent=1 // pred_fallthru
      _
    %v219 = vlaneseq
    %v220 = vand.u32 %v219, 127
    %v221 = vadd.s32 %v220, 128
    %v222 = vadd.s32 %v220, 256
    %v223 = vadd.s32 %v220, 384
    %v224 = vld [vmem:[%s0] sm:$0xff]
    %v225 = vld [vmem:[%s0 + $0x8] sm:$0xff]
    %v226 = vld [vmem:[%s0 + $0x10] sm:$0xff]
    %v227 = vld [vmem:[%s0 + $0x18] sm:$0xff]
    %v228 = vld [vmem:[%s0 + $0x20] sm:$0xff]
    %v229 = vld [vmem:[%s0 + $0x28] sm:$0xff]
    %v230 = vld [vmem:[%s0 + $0x30] sm:$0xff]
    %v231 = vld [vmem:[%s0 + $0x38] sm:$0xff]
    %232 = vset.pattern.permute.xlu0 0
    %233 = vperm.xlu0 %232, %v224
    %v234 = vpop.permute.xlu0 %233
    %235 = vset.pattern.permute.xlu0 0
    %236 = vperm.xlu0 %235, %v225
    %v237 = vpop.permute.xlu0 %236
    %238 = vset.pattern.permute.xlu0 0
    %239 = vperm.xlu0 %238, %v226
    %v240 = vpop.permute.xlu0 %239
    %241 = vset.pattern.permute.xlu0 0
    %242 = vperm.xlu0 %241, %v227
    %v243 = vpop.permute.xlu0 %242
    %244 = vset.pattern.permute.xlu0 0
    %245 = vperm.xlu0 %244, %v228
    %v246 = vpop.permute.xlu0 %245
    %247 = vset.pattern.permute.xlu0 0
    %248 = vperm.xlu0 %247, %v229
    %v249 = vpop.permute.xlu0 %248
    %250 = vset.pattern.permute.xlu0 0
    %251 = vperm.xlu0 %250, %v230
    %v252 = vpop.permute.xlu0 %251
    %253 = vset.pattern.permute.xlu0 0
    %254 = vperm.xlu0 %253, %v231
    %v255 = vpop.permute.xlu0 %254
    %vm256 = vcmp.eq.s32.totalorder %v220, %v234
    %vm257 = vcmp.eq.s32.totalorder %v221, %v234
    %vm258 = vcmp.eq.s32.totalorder %v222, %v234
    %vm259 = vcmp.eq.s32.totalorder %v223, %v234
    %vm260 = vcmp.eq.s32.totalorder %v220, %v237
    %vm261 = vcmp.eq.s32.totalorder %v221, %v237
    %vm262 = vcmp.eq.s32.totalorder %v222, %v237
    %vm263 = vcmp.eq.s32.totalorder %v223, %v237
    %vm264 = vcmp.eq.s32.totalorder %v220, %v240
    %vm265 = vcmp.eq.s32.totalorder %v221, %v240
    %vm266 = vcmp.eq.s32.totalorder %v222, %v240
    %vm267 = vcmp.eq.s32.totalorder %v223, %v240
    %vm268 = vcmp.eq.s32.totalorder %v220, %v243
    %vm269 = vcmp.eq.s32.totalorder %v221, %v243
    %vm270 = vcmp.eq.s32.totalorder %v222, %v243
    %vm271 = vcmp.eq.s32.totalorder %v223, %v243
    %vm272 = vcmp.eq.s32.totalorder %v220, %v246
    %vm273 = vcmp.eq.s32.totalorder %v221, %v246
    %vm274 = vcmp.eq.s32.totalorder %v222, %v246
    %vm275 = vcmp.eq.s32.totalorder %v223, %v246
    %vm276 = vcmp.eq.s32.totalorder %v220, %v249
    %vm277 = vcmp.eq.s32.totalorder %v221, %v249
    %vm278 = vcmp.eq.s32.totalorder %v222, %v249
    %vm279 = vcmp.eq.s32.totalorder %v223, %v249
    %vm280 = vcmp.eq.s32.totalorder %v220, %v252
    %vm281 = vcmp.eq.s32.totalorder %v221, %v252
    %vm282 = vcmp.eq.s32.totalorder %v222, %v252
    %vm283 = vcmp.eq.s32.totalorder %v223, %v252
    %vm284 = vcmp.eq.s32.totalorder %v220, %v255
    %vm285 = vcmp.eq.s32.totalorder %v221, %v255
    %vm286 = vcmp.eq.s32.totalorder %v222, %v255
    %vm287 = vcmp.eq.s32.totalorder %v223, %v255
    %288 = vset.pattern.permute.xlu0 1
    %289 = vperm.xlu0 %288, %v224
    %v290 = vpop.permute.xlu0 %289
    %291 = vset.pattern.permute.xlu0 1
    %292 = vperm.xlu0 %291, %v225
    %v293 = vpop.permute.xlu0 %292
    %294 = vset.pattern.permute.xlu0 1
    %295 = vperm.xlu0 %294, %v226
    %v296 = vpop.permute.xlu0 %295
    %297 = vset.pattern.permute.xlu0 1
    %298 = vperm.xlu0 %297, %v227
    %v299 = vpop.permute.xlu0 %298
    %300 = vset.pattern.permute.xlu0 1
    %301 = vperm.xlu0 %300, %v228
    %v302 = vpop.permute.xlu0 %301
    %303 = vset.pattern.permute.xlu0 1
    %304 = vperm.xlu0 %303, %v229
    %v305 = vpop.permute.xlu0 %304
    %306 = vset.pattern.permute.xlu0 1
    %307 = vperm.xlu0 %306, %v230
    %v308 = vpop.permute.xlu0 %307
    %309 = vset.pattern.permute.xlu0 1
    %310 = vperm.xlu0 %309, %v231
    %v311 = vpop.permute.xlu0 %310
    %vm312 = vcmp.eq.s32.totalorder %v220, %v290
    %vm313 = vcmp.eq.s32.totalorder %v221, %v290
    %vm314 = vcmp.eq.s32.totalorder %v222, %v290
    %vm315 = vcmp.eq.s32.totalorder %v223, %v290
    %vm316 = vcmp.eq.s32.totalorder %v220, %v293
    %vm317 = vcmp.eq.s32.totalorder %v221, %v293
    %vm318 = vcmp.eq.s32.totalorder %v222, %v293
    %vm319 = vcmp.eq.s32.totalorder %v223, %v293
    %vm320 = vcmp.eq.s32.totalorder %v220, %v296
    %vm321 = vcmp.eq.s32.totalorder %v221, %v296
    %vm322 = vcmp.eq.s32.totalorder %v222, %v296
    %vm323 = vcmp.eq.s32.totalorder %v223, %v296
    %vm324 = vcmp.eq.s32.totalorder %v220, %v299
    %vm325 = vcmp.eq.s32.totalorder %v221, %v299
    %vm326 = vcmp.eq.s32.totalorder %v222, %v299
    %vm327 = vcmp.eq.s32.totalorder %v223, %v299
    %vm328 = vcmp.eq.s32.totalorder %v220, %v302
    %vm329 = vcmp.eq.s32.totalorder %v221, %v302
    %vm330 = vcmp.eq.s32.totalorder %v222, %v302
    %vm331 = vcmp.eq.s32.totalorder %v223, %v302
    %vm332 = vcmp.eq.s32.totalorder %v220, %v305
    %vm333 = vcmp.eq.s32.totalorder %v221, %v305
    %vm334 = vcmp.eq.s32.totalorder %v222, %v305
    %vm335 = vcmp.eq.s32.totalorder %v223, %v305
    %vm336 = vcmp.eq.s32.totalorder %v220, %v308
    %vm337 = vcmp.eq.s32.totalorder %v221, %v308
    %vm338 = vcmp.eq.s32.totalorder %v222, %v308
    %vm339 = vcmp.eq.s32.totalorder %v223, %v308
    %vm340 = vcmp.eq.s32.totalorder %v220, %v311
    %vm341 = vcmp.eq.s32.totalorder %v221, %v311
    %vm342 = vcmp.eq.s32.totalorder %v222, %v311
    %vm343 = vcmp.eq.s32.totalorder %v223, %v311
    %vm344 = vmor %vm256, %vm312
    %vm345 = vmor %vm257, %vm313
    %vm346 = vmor %vm258, %vm314
    %vm347 = vmor %vm259, %vm315
    %vm348 = vmor %vm260, %vm316
    %vm349 = vmor %vm261, %vm317
    %vm350 = vmor %vm262, %vm318
    %vm351 = vmor %vm263, %vm319
    %vm352 = vmor %vm264, %vm320
    %vm353 = vmor %vm265, %vm321
    %vm354 = vmor %vm266, %vm322
    %vm355 = vmor %vm267, %vm323
    %vm356 = vmor %vm268, %vm324
    %vm357 = vmor %vm269, %vm325
    %vm358 = vmor %vm270, %vm326
    %vm359 = vmor %vm271, %vm327
    %vm360 = vmor %vm272, %vm328
    %vm361 = vmor %vm273, %vm329
    %vm362 = vmor %vm274, %vm330
    %vm363 = vmor %vm275, %vm331
    %vm364 = vmor %vm276, %vm332
    %vm365 = vmor %vm277, %vm333
    %vm366 = vmor %vm278, %vm334
    %vm367 = vmor %vm279, %vm335
    %vm368 = vmor %vm280, %vm336
    %vm369 = vmor %vm281, %vm337
    %vm370 = vmor %vm282, %vm338
    %vm371 = vmor %vm283, %vm339
    %vm372 = vmor %vm284, %vm340
    %vm373 = vmor %vm285, %vm341
    %vm374 = vmor %vm286, %vm342
    %vm375 = vmor %vm287, %vm343
    %376 = vset.pattern.permute.xlu0 2
    %377 = vperm.xlu0 %376, %v224
    %v378 = vpop.permute.xlu0 %377
    %379 = vset.pattern.permute.xlu0 2
    %380 = vperm.xlu0 %379, %v225
    %v381 = vpop.permute.xlu0 %380
    %382 = vset.pattern.permute.xlu0 2
    %383 = vperm.xlu0 %382, %v226
    %v384 = vpop.permute.xlu0 %383
    %385 = vset.pattern.permute.xlu0 2
    %386 = vperm.xlu0 %385, %v227
    %v387 = vpop.permute.xlu0 %386
    %388 = vset.pattern.permute.xlu0 2
    %389 = vperm.xlu0 %388, %v228
    %v390 = vpop.permute.xlu0 %389
    %391 = vset.pattern.permute.xlu0 2
    %392 = vperm.xlu0 %391, %v229
    %v393 = vpop.permute.xlu0 %392
    %394 = vset.pattern.permute.xlu0 2
    %395 = vperm.xlu0 %394, %v230
    %v396 = vpop.permute.xlu0 %395
    %397 = vset.pattern.permute.xlu0 2
    %398 = vperm.xlu0 %397, %v231
    %v399 = vpop.permute.xlu0 %398
    %vm400 = vcmp.eq.s32.totalorder %v220, %v378
    %vm401 = vcmp.eq.s32.totalorder %v221, %v378
    %vm402 = vcmp.eq.s32.totalorder %v222, %v378
    %vm403 = vcmp.eq.s32.totalorder %v223, %v378
    %vm404 = vcmp.eq.s32.totalorder %v220, %v381
    %vm405 = vcmp.eq.s32.totalorder %v221, %v381
    %vm406 = vcmp.eq.s32.totalorder %v222, %v381
    %vm407 = vcmp.eq.s32.totalorder %v223, %v381
    %vm408 = vcmp.eq.s32.totalorder %v220, %v384
    %vm409 = vcmp.eq.s32.totalorder %v221, %v384
    %vm410 = vcmp.eq.s32.totalorder %v222, %v384
    %vm411 = vcmp.eq.s32.totalorder %v223, %v384
    %vm412 = vcmp.eq.s32.totalorder %v220, %v387
    %vm413 = vcmp.eq.s32.totalorder %v221, %v387
    %vm414 = vcmp.eq.s32.totalorder %v222, %v387
    %vm415 = vcmp.eq.s32.totalorder %v223, %v387
    %vm416 = vcmp.eq.s32.totalorder %v220, %v390
    %vm417 = vcmp.eq.s32.totalorder %v221, %v390
    %vm418 = vcmp.eq.s32.totalorder %v222, %v390
    %vm419 = vcmp.eq.s32.totalorder %v223, %v390
    %vm420 = vcmp.eq.s32.totalorder %v220, %v393
    %vm421 = vcmp.eq.s32.totalorder %v221, %v393
    %vm422 = vcmp.eq.s32.totalorder %v222, %v393
    %vm423 = vcmp.eq.s32.totalorder %v223, %v393
    %vm424 = vcmp.eq.s32.totalorder %v220, %v396
    %vm425 = vcmp.eq.s32.totalorder %v221, %v396
    %vm426 = vcmp.eq.s32.totalorder %v222, %v396
    %vm427 = vcmp.eq.s32.totalorder %v223, %v396
    %vm428 = vcmp.eq.s32.totalorder %v220, %v399
    %vm429 = vcmp.eq.s32.totalorder %v221, %v399
    %vm430 = vcmp.eq.s32.totalorder %v222, %v399
    %vm431 = vcmp.eq.s32.totalorder %v223, %v399
    %vm432 = vmor %vm344, %vm400
    %vm433 = vmor %vm345, %vm401
    %vm434 = vmor %vm346, %vm402
    %vm435 = vmor %vm347, %vm403
    %vm436 = vmor %vm348, %vm404
    %vm437 = vmor %vm349, %vm405
    %vm438 = vmor %vm350, %vm406
    %vm439 = vmor %vm351, %vm407
    %vm440 = vmor %vm352, %vm408
    %vm441 = vmor %vm353, %vm409
    %vm442 = vmor %vm354, %vm410
    %vm443 = vmor %vm355, %vm411
    %vm444 = vmor %vm356, %vm412
    %vm445 = vmor %vm357, %vm413
    %vm446 = vmor %vm358, %vm414
    %vm447 = vmor %vm359, %vm415
    %vm448 = vmor %vm360, %vm416
    %vm449 = vmor %vm361, %vm417
    %vm450 = vmor %vm362, %vm418
    %vm451 = vmor %vm363, %vm419
    %vm452 = vmor %vm364, %vm420
    %vm453 = vmor %vm365, %vm421
    %vm454 = vmor %vm366, %vm422
    %vm455 = vmor %vm367, %vm423
    %vm456 = vmor %vm368, %vm424
    %vm457 = vmor %vm369, %vm425
    %vm458 = vmor %vm370, %vm426
    %vm459 = vmor %vm371, %vm427
    %vm460 = vmor %vm372, %vm428
    %vm461 = vmor %vm373, %vm429
    %vm462 = vmor %vm374, %vm430
    %vm463 = vmor %vm375, %vm431
    %464 = vset.pattern.permute.xlu0 3
    %465 = vperm.xlu0 %464, %v224
    %v466 = vpop.permute.xlu0 %465
    %467 = vset.pattern.permute.xlu0 3
    %468 = vperm.xlu0 %467, %v225
    %v469 = vpop.permute.xlu0 %468
    %470 = vset.pattern.permute.xlu0 3
    %471 = vperm.xlu0 %470, %v226
    %v472 = vpop.permute.xlu0 %471
    %473 = vset.pattern.permute.xlu0 3
    %474 = vperm.xlu0 %473, %v227
    %v475 = vpop.permute.xlu0 %474
    %476 = vset.pattern.permute.xlu0 3
    %477 = vperm.xlu0 %476, %v228
    %v478 = vpop.permute.xlu0 %477
    %479 = vset.pattern.permute.xlu0 3
    %480 = vperm.xlu0 %479, %v229
    %v481 = vpop.permute.xlu0 %480
    %482 = vset.pattern.permute.xlu0 3
    %483 = vperm.xlu0 %482, %v230
    %v484 = vpop.permute.xlu0 %483
    %485 = vset.pattern.permute.xlu0 3
    %486 = vperm.xlu0 %485, %v231
    %v487 = vpop.permute.xlu0 %486
    %vm488 = vcmp.eq.s32.totalorder %v220, %v466
    %vm489 = vcmp.eq.s32.totalorder %v221, %v466
    %vm490 = vcmp.eq.s32.totalorder %v222, %v466
    %vm491 = vcmp.eq.s32.totalorder %v223, %v466
    %vm492 = vcmp.eq.s32.totalorder %v220, %v469
    %vm493 = vcmp.eq.s32.totalorder %v221, %v469
    %vm494 = vcmp.eq.s32.totalorder %v222, %v469
    %vm495 = vcmp.eq.s32.totalorder %v223, %v469
    %vm496 = vcmp.eq.s32.totalorder %v220, %v472
    %vm497 = vcmp.eq.s32.totalorder %v221, %v472
    %vm498 = vcmp.eq.s32.totalorder %v222, %v472
    %vm499 = vcmp.eq.s32.totalorder %v223, %v472
    %vm500 = vcmp.eq.s32.totalorder %v220, %v475
    %vm501 = vcmp.eq.s32.totalorder %v221, %v475
    %vm502 = vcmp.eq.s32.totalorder %v222, %v475
    %vm503 = vcmp.eq.s32.totalorder %v223, %v475
    %vm504 = vcmp.eq.s32.totalorder %v220, %v478
    %vm505 = vcmp.eq.s32.totalorder %v221, %v478
    %vm506 = vcmp.eq.s32.totalorder %v222, %v478
    %vm507 = vcmp.eq.s32.totalorder %v223, %v478
    %vm508 = vcmp.eq.s32.totalorder %v220, %v481
    %vm509 = vcmp.eq.s32.totalorder %v221, %v481
    %vm510 = vcmp.eq.s32.totalorder %v222, %v481
    %vm511 = vcmp.eq.s32.totalorder %v223, %v481
    %vm512 = vcmp.eq.s32.totalorder %v220, %v484
    %vm513 = vcmp.eq.s32.totalorder %v221, %v484
    %vm514 = vcmp.eq.s32.totalorder %v222, %v484
    %vm515 = vcmp.eq.s32.totalorder %v223, %v484
    %vm516 = vcmp.eq.s32.totalorder %v220, %v487
    %vm517 = vcmp.eq.s32.totalorder %v221, %v487
    %vm518 = vcmp.eq.s32.totalorder %v222, %v487
    %vm519 = vcmp.eq.s32.totalorder %v223, %v487
    %vm520 = vmor %vm432, %vm488
    %vm521 = vmor %vm433, %vm489
    %vm522 = vmor %vm434, %vm490
    %vm523 = vmor %vm435, %vm491
    %vm524 = vmor %vm436, %vm492
    %vm525 = vmor %vm437, %vm493
    %vm526 = vmor %vm438, %vm494
    %vm527 = vmor %vm439, %vm495
    %vm528 = vmor %vm440, %vm496
    %vm529 = vmor %vm441, %vm497
    %vm530 = vmor %vm442, %vm498
    %vm531 = vmor %vm443, %vm499
    %vm532 = vmor %vm444, %vm500
    %vm533 = vmor %vm445, %vm501
    %vm534 = vmor %vm446, %vm502
    %vm535 = vmor %vm447, %vm503
    %vm536 = vmor %vm448, %vm504
    %vm537 = vmor %vm449, %vm505
    %vm538 = vmor %vm450, %vm506
    %vm539 = vmor %vm451, %vm507
    %vm540 = vmor %vm452, %vm508
    %vm541 = vmor %vm453, %vm509
    %vm542 = vmor %vm454, %vm510
    %vm543 = vmor %vm455, %vm511
    %vm544 = vmor %vm456, %vm512
    %vm545 = vmor %vm457, %vm513
    %vm546 = vmor %vm458, %vm514
    %vm547 = vmor %vm459, %vm515
    %vm548 = vmor %vm460, %vm516
    %vm549 = vmor %vm461, %vm517
    %vm550 = vmor %vm462, %vm518
    %vm551 = vmor %vm463, %vm519
    %552 = vset.pattern.permute.xlu0 4
    %553 = vperm.xlu0 %552, %v224
    %v554 = vpop.permute.xlu0 %553
    %555 = vset.pattern.permute.xlu0 4
    %556 = vperm.xlu0 %555, %v225
    %v557 = vpop.permute.xlu0 %556
    %558 = vset.pattern.permute.xlu0 4
    %559 = vperm.xlu0 %558, %v226
    %v560 = vpop.permute.xlu0 %559
    %561 = vset.pattern.permute.xlu0 4
    %562 = vperm.xlu0 %561, %v227
    %v563 = vpop.permute.xlu0 %562
    %564 = vset.pattern.permute.xlu0 4
    %565 = vperm.xlu0 %564, %v228
    %v566 = vpop.permute.xlu0 %565
    %567 = vset.pattern.permute.xlu0 4
    %568 = vperm.xlu0 %567, %v229
    %v569 = vpop.permute.xlu0 %568
    %570 = vset.pattern.permute.xlu0 4
    %571 = vperm.xlu0 %570, %v230
    %v572 = vpop.permute.xlu0 %571
    %573 = vset.pattern.permute.xlu0 4
    %574 = vperm.xlu0 %573, %v231
    %v575 = vpop.permute.xlu0 %574
    %vm576 = vcmp.eq.s32.totalorder %v220, %v554
    %vm577 = vcmp.eq.s32.totalorder %v221, %v554
    %vm578 = vcmp.eq.s32.totalorder %v222, %v554
    %vm579 = vcmp.eq.s32.totalorder %v223, %v554
    %vm580 = vcmp.eq.s32.totalorder %v220, %v557
    %vm581 = vcmp.eq.s32.totalorder %v221, %v557
    %vm582 = vcmp.eq.s32.totalorder %v222, %v557
    %vm583 = vcmp.eq.s32.totalorder %v223, %v557
    %vm584 = vcmp.eq.s32.totalorder %v220, %v560
    %vm585 = vcmp.eq.s32.totalorder %v221, %v560
    %vm586 = vcmp.eq.s32.totalorder %v222, %v560
    %vm587 = vcmp.eq.s32.totalorder %v223, %v560
    %vm588 = vcmp.eq.s32.totalorder %v220, %v563
    %vm589 = vcmp.eq.s32.totalorder %v221, %v563
    %vm590 = vcmp.eq.s32.totalorder %v222, %v563
    %vm591 = vcmp.eq.s32.totalorder %v223, %v563
    %vm592 = vcmp.eq.s32.totalorder %v220, %v566
    %vm593 = vcmp.eq.s32.totalorder %v221, %v566
    %vm594 = vcmp.eq.s32.totalorder %v222, %v566
    %vm595 = vcmp.eq.s32.totalorder %v223, %v566
    %vm596 = vcmp.eq.s32.totalorder %v220, %v569
    %vm597 = vcmp.eq.s32.totalorder %v221, %v569
    %vm598 = vcmp.eq.s32.totalorder %v222, %v569
    %vm599 = vcmp.eq.s32.totalorder %v223, %v569
    %vm600 = vcmp.eq.s32.totalorder %v220, %v572
    %vm601 = vcmp.eq.s32.totalorder %v221, %v572
    %vm602 = vcmp.eq.s32.totalorder %v222, %v572
    %vm603 = vcmp.eq.s32.totalorder %v223, %v572
    %vm604 = vcmp.eq.s32.totalorder %v220, %v575
    %vm605 = vcmp.eq.s32.totalorder %v221, %v575
    %vm606 = vcmp.eq.s32.totalorder %v222, %v575
    %vm607 = vcmp.eq.s32.totalorder %v223, %v575
    %vm608 = vmor %vm520, %vm576
    %vm609 = vmor %vm521, %vm577
    %vm610 = vmor %vm522, %vm578
    %vm611 = vmor %vm523, %vm579
    %vm612 = vmor %vm524, %vm580
    %vm613 = vmor %vm525, %vm581
    %vm614 = vmor %vm526, %vm582
    %vm615 = vmor %vm527, %vm583
    %vm616 = vmor %vm528, %vm584
    %vm617 = vmor %vm529, %vm585
    %vm618 = vmor %vm530, %vm586
    %vm619 = vmor %vm531, %vm587
    %vm620 = vmor %vm532, %vm588
    %vm621 = vmor %vm533, %vm589
    %vm622 = vmor %vm534, %vm590
    %vm623 = vmor %vm535, %vm591
    %vm624 = vmor %vm536, %vm592
    %vm625 = vmor %vm537, %vm593
    %vm626 = vmor %vm538, %vm594
    %vm627 = vmor %vm539, %vm595
    %vm628 = vmor %vm540, %vm596
    %vm629 = vmor %vm541, %vm597
    %vm630 = vmor %vm542, %vm598
    %vm631 = vmor %vm543, %vm599
    %vm632 = vmor %vm544, %vm600
    %vm633 = vmor %vm545, %vm601
    %vm634 = vmor %vm546, %vm602
    %vm635 = vmor %vm547, %vm603
    %vm636 = vmor %vm548, %vm604
    %vm637 = vmor %vm549, %vm605
    %vm638 = vmor %vm550, %vm606
    %vm639 = vmor %vm551, %vm607
    %640 = vset.pattern.permute.xlu0 5
    %641 = vperm.xlu0 %640, %v224
    %v642 = vpop.permute.xlu0 %641
    %643 = vset.pattern.permute.xlu0 5
    %644 = vperm.xlu0 %643, %v225
    %v645 = vpop.permute.xlu0 %644
    %646 = vset.pattern.permute.xlu0 5
    %647 = vperm.xlu0 %646, %v226
    %v648 = vpop.permute.xlu0 %647
    %649 = vset.pattern.permute.xlu0 5
    %650 = vperm.xlu0 %649, %v227
    %v651 = vpop.permute.xlu0 %650
    %652 = vset.pattern.permute.xlu0 5
    %653 = vperm.xlu0 %652, %v228
    %v654 = vpop.permute.xlu0 %653
    %655 = vset.pattern.permute.xlu0 5
    %656 = vperm.xlu0 %655, %v229
    %v657 = vpop.permute.xlu0 %656
    %658 = vset.pattern.permute.xlu0 5
    %659 = vperm.xlu0 %658, %v230
    %v660 = vpop.permute.xlu0 %659
    %661 = vset.pattern.permute.xlu0 5
    %662 = vperm.xlu0 %661, %v231
    %v663 = vpop.permute.xlu0 %662
    %vm664 = vcmp.eq.s32.totalorder %v220, %v642
    %vm665 = vcmp.eq.s32.totalorder %v221, %v642
    %vm666 = vcmp.eq.s32.totalorder %v222, %v642
    %vm667 = vcmp.eq.s32.totalorder %v223, %v642
    %vm668 = vcmp.eq.s32.totalorder %v220, %v645
    %vm669 = vcmp.eq.s32.totalorder %v221, %v645
    %vm670 = vcmp.eq.s32.totalorder %v222, %v645
    %vm671 = vcmp.eq.s32.totalorder %v223, %v645
    %vm672 = vcmp.eq.s32.totalorder %v220, %v648
    %vm673 = vcmp.eq.s32.totalorder %v221, %v648
    %vm674 = vcmp.eq.s32.totalorder %v222, %v648
    %vm675 = vcmp.eq.s32.totalorder %v223, %v648
    %vm676 = vcmp.eq.s32.totalorder %v220, %v651
    %vm677 = vcmp.eq.s32.totalorder %v221, %v651
    %vm678 = vcmp.eq.s32.totalorder %v222, %v651
    %vm679 = vcmp.eq.s32.totalorder %v223, %v651
    %vm680 = vcmp.eq.s32.totalorder %v220, %v654
    %vm681 = vcmp.eq.s32.totalorder %v221, %v654
    %vm682 = vcmp.eq.s32.totalorder %v222, %v654
    %vm683 = vcmp.eq.s32.totalorder %v223, %v654
    %vm684 = vcmp.eq.s32.totalorder %v220, %v657
    %vm685 = vcmp.eq.s32.totalorder %v221, %v657
    %vm686 = vcmp.eq.s32.totalorder %v222, %v657
    %vm687 = vcmp.eq.s32.totalorder %v223, %v657
    %vm688 = vcmp.eq.s32.totalorder %v220, %v660
    %vm689 = vcmp.eq.s32.totalorder %v221, %v660
    %vm690 = vcmp.eq.s32.totalorder %v222, %v660
    %vm691 = vcmp.eq.s32.totalorder %v223, %v660
    %vm692 = vcmp.eq.s32.totalorder %v220, %v663
    %vm693 = vcmp.eq.s32.totalorder %v221, %v663
    %vm694 = vcmp.eq.s32.totalorder %v222, %v663
    %vm695 = vcmp.eq.s32.totalorder %v223, %v663
    %vm696 = vmor %vm608, %vm664
    %vm697 = vmor %vm609, %vm665
    %vm698 = vmor %vm610, %vm666
    %vm699 = vmor %vm611, %vm667
    %vm700 = vmor %vm612, %vm668
    %vm701 = vmor %vm613, %vm669
    %vm702 = vmor %vm614, %vm670
    %vm703 = vmor %vm615, %vm671
    %vm704 = vmor %vm616, %vm672
    %vm705 = vmor %vm617, %vm673
    %vm706 = vmor %vm618, %vm674
    %vm707 = vmor %vm619, %vm675
    %vm708 = vmor %vm620, %vm676
    %vm709 = vmor %vm621, %vm677
    %vm710 = vmor %vm622, %vm678
    %vm711 = vmor %vm623, %vm679
    %vm712 = vmor %vm624, %vm680
    %vm713 = vmor %vm625, %vm681
    %vm714 = vmor %vm626, %vm682
    %vm715 = vmor %vm627, %vm683
    %vm716 = vmor %vm628, %vm684
    %vm717 = vmor %vm629, %vm685
    %vm718 = vmor %vm630, %vm686
    %vm719 = vmor %vm631, %vm687
    %vm720 = vmor %vm632, %vm688
    %vm721 = vmor %vm633, %vm689
    %vm722 = vmor %vm634, %vm690
    %vm723 = vmor %vm635, %vm691
    %vm724 = vmor %vm636, %vm692
    %vm725 = vmor %vm637, %vm693
    %vm726 = vmor %vm638, %vm694
    %vm727 = vmor %vm639, %vm695
    %728 = vset.pattern.permute.xlu0 6
    %729 = vperm.xlu0 %728, %v224
    %v730 = vpop.permute.xlu0 %729
    %731 = vset.pattern.permute.xlu0 6
    %732 = vperm.xlu0 %731, %v225
    %v733 = vpop.permute.xlu0 %732
    %734 = vset.pattern.permute.xlu0 6
    %735 = vperm.xlu0 %734, %v226
    %v736 = vpop.permute.xlu0 %735
    %737 = vset.pattern.permute.xlu0 6
    %738 = vperm.xlu0 %737, %v227
    %v739 = vpop.permute.xlu0 %738
    %740 = vset.pattern.permute.xlu0 6
    %741 = vperm.xlu0 %740, %v228
    %v742 = vpop.permute.xlu0 %741
    %743 = vset.pattern.permute.xlu0 6
    %744 = vperm.xlu0 %743, %v229
    %v745 = vpop.permute.xlu0 %744
    %746 = vset.pattern.permute.xlu0 6
    %747 = vperm.xlu0 %746, %v230
    %v748 = vpop.permute.xlu0 %747
    %749 = vset.pattern.permute.xlu0 6
    %750 = vperm.xlu0 %749, %v231
    %v751 = vpop.permute.xlu0 %750
    %vm752 = vcmp.eq.s32.totalorder %v220, %v730
    %vm753 = vcmp.eq.s32.totalorder %v221, %v730
    %vm754 = vcmp.eq.s32.totalorder %v222, %v730
    %vm755 = vcmp.eq.s32.totalorder %v223, %v730
    %vm756 = vcmp.eq.s32.totalorder %v220, %v733
    %vm757 = vcmp.eq.s32.totalorder %v221, %v733
    %vm758 = vcmp.eq.s32.totalorder %v222, %v733
    %vm759 = vcmp.eq.s32.totalorder %v223, %v733
    %vm760 = vcmp.eq.s32.totalorder %v220, %v736
    %vm761 = vcmp.eq.s32.totalorder %v221, %v736
    %vm762 = vcmp.eq.s32.totalorder %v222, %v736
    %vm763 = vcmp.eq.s32.totalorder %v223, %v736
    %vm764 = vcmp.eq.s32.totalorder %v220, %v739
    %vm765 = vcmp.eq.s32.totalorder %v221, %v739
    %vm766 = vcmp.eq.s32.totalorder %v222, %v739
    %vm767 = vcmp.eq.s32.totalorder %v223, %v739
    %vm768 = vcmp.eq.s32.totalorder %v220, %v742
    %vm769 = vcmp.eq.s32.totalorder %v221, %v742
    %vm770 = vcmp.eq.s32.totalorder %v222, %v742
    %vm771 = vcmp.eq.s32.totalorder %v223, %v742
    %vm772 = vcmp.eq.s32.totalorder %v220, %v745
    %vm773 = vcmp.eq.s32.totalorder %v221, %v745
    %vm774 = vcmp.eq.s32.totalorder %v222, %v745
    %vm775 = vcmp.eq.s32.totalorder %v223, %v745
    %vm776 = vcmp.eq.s32.totalorder %v220, %v748
    %vm777 = vcmp.eq.s32.totalorder %v221, %v748
    %vm778 = vcmp.eq.s32.totalorder %v222, %v748
    %vm779 = vcmp.eq.s32.totalorder %v223, %v748
    %vm780 = vcmp.eq.s32.totalorder %v220, %v751
    %vm781 = vcmp.eq.s32.totalorder %v221, %v751
    %vm782 = vcmp.eq.s32.totalorder %v222, %v751
    %vm783 = vcmp.eq.s32.totalorder %v223, %v751
    %vm784 = vmor %vm696, %vm752
    %vm785 = vmor %vm697, %vm753
    %vm786 = vmor %vm698, %vm754
    %vm787 = vmor %vm699, %vm755
    %vm788 = vmor %vm700, %vm756
    %vm789 = vmor %vm701, %vm757
    %vm790 = vmor %vm702, %vm758
    %vm791 = vmor %vm703, %vm759
    %vm792 = vmor %vm704, %vm760
    %vm793 = vmor %vm705, %vm761
    %vm794 = vmor %vm706, %vm762
    %vm795 = vmor %vm707, %vm763
    %vm796 = vmor %vm708, %vm764
    %vm797 = vmor %vm709, %vm765
    %vm798 = vmor %vm710, %vm766
    %vm799 = vmor %vm711, %vm767
    %vm800 = vmor %vm712, %vm768
    %vm801 = vmor %vm713, %vm769
    %vm802 = vmor %vm714, %vm770
    %vm803 = vmor %vm715, %vm771
    %vm804 = vmor %vm716, %vm772
    %vm805 = vmor %vm717, %vm773
    %vm806 = vmor %vm718, %vm774
    %vm807 = vmor %vm719, %vm775
    %vm808 = vmor %vm720, %vm776
    %vm809 = vmor %vm721, %vm777
    %vm810 = vmor %vm722, %vm778
    %vm811 = vmor %vm723, %vm779
    %vm812 = vmor %vm724, %vm780
    %vm813 = vmor %vm725, %vm781
    %vm814 = vmor %vm726, %vm782
    %vm815 = vmor %vm727, %vm783
    %816 = vset.pattern.permute.xlu0 7
    %817 = vperm.xlu0 %816, %v224
    %v818 = vpop.permute.xlu0 %817
    %819 = vset.pattern.permute.xlu0 7
    %820 = vperm.xlu0 %819, %v225
    %v821 = vpop.permute.xlu0 %820
    %822 = vset.pattern.permute.xlu0 7
    %823 = vperm.xlu0 %822, %v226
    %v824 = vpop.permute.xlu0 %823
    %825 = vset.pattern.permute.xlu0 7
    %826 = vperm.xlu0 %825, %v227
    %v827 = vpop.permute.xlu0 %826
    %828 = vset.pattern.permute.xlu0 7
    %829 = vperm.xlu0 %828, %v228
    %v830 = vpop.permute.xlu0 %829
    %831 = vset.pattern.permute.xlu0 7
    %832 = vperm.xlu0 %831, %v229
    %v833 = vpop.permute.xlu0 %832
    %834 = vset.pattern.permute.xlu0 7
    %835 = vperm.xlu0 %834, %v230
    %v836 = vpop.permute.xlu0 %835
    %837 = vset.pattern.permute.xlu0 7
    %838 = vperm.xlu0 %837, %v231
    %v839 = vpop.permute.xlu0 %838
    %vm840 = vcmp.eq.s32.totalorder %v220, %v818
    %vm841 = vcmp.eq.s32.totalorder %v221, %v818
    %vm842 = vcmp.eq.s32.totalorder %v222, %v818
    %vm843 = vcmp.eq.s32.totalorder %v223, %v818
    %vm844 = vcmp.eq.s32.totalorder %v220, %v821
    %vm845 = vcmp.eq.s32.totalorder %v221, %v821
    %vm846 = vcmp.eq.s32.totalorder %v222, %v821
    %vm847 = vcmp.eq.s32.totalorder %v223, %v821
    %vm848 = vcmp.eq.s32.totalorder %v220, %v824
    %vm849 = vcmp.eq.s32.totalorder %v221, %v824
    %vm850 = vcmp.eq.s32.totalorder %v222, %v824
    %vm851 = vcmp.eq.s32.totalorder %v223, %v824
    %vm852 = vcmp.eq.s32.totalorder %v220, %v827
    %vm853 = vcmp.eq.s32.totalorder %v221, %v827
    %vm854 = vcmp.eq.s32.totalorder %v222, %v827
    %vm855 = vcmp.eq.s32.totalorder %v223, %v827
    %vm856 = vcmp.eq.s32.totalorder %v220, %v830
    %vm857 = vcmp.eq.s32.totalorder %v221, %v830
    %vm858 = vcmp.eq.s32.totalorder %v222, %v830
    %vm859 = vcmp.eq.s32.totalorder %v223, %v830
    %vm860 = vcmp.eq.s32.totalorder %v220, %v833
    %vm861 = vcmp.eq.s32.totalorder %v221, %v833
    %vm862 = vcmp.eq.s32.totalorder %v222, %v833
    %vm863 = vcmp.eq.s32.totalorder %v223, %v833
    %vm864 = vcmp.eq.s32.totalorder %v220, %v836
    %vm865 = vcmp.eq.s32.totalorder %v221, %v836
    %vm866 = vcmp.eq.s32.totalorder %v222, %v836
    %vm867 = vcmp.eq.s32.totalorder %v223, %v836
    %vm868 = vcmp.eq.s32.totalorder %v220, %v839
    %vm869 = vcmp.eq.s32.totalorder %v221, %v839
    %vm870 = vcmp.eq.s32.totalorder %v222, %v839
    %vm871 = vcmp.eq.s32.totalorder %v223, %v839
    %vm872 = vmor %vm784, %vm840
    %vm873 = vmor %vm785, %vm841
    %vm874 = vmor %vm786, %vm842
    %vm875 = vmor %vm787, %vm843
    %vm876 = vmor %vm788, %vm844
    %vm877 = vmor %vm789, %vm845
    %vm878 = vmor %vm790, %vm846
    %vm879 = vmor %vm791, %vm847
    %vm880 = vmor %vm792, %vm848
    %vm881 = vmor %vm793, %vm849
    %vm882 = vmor %vm794, %vm850
    %vm883 = vmor %vm795, %vm851
    %vm884 = vmor %vm796, %vm852
    %vm885 = vmor %vm797, %vm853
    %vm886 = vmor %vm798, %vm854
    %vm887 = vmor %vm799, %vm855
    %vm888 = vmor %vm800, %vm856
    %vm889 = vmor %vm801, %vm857
    %vm890 = vmor %vm802, %vm858
    %vm891 = vmor %vm803, %vm859
    %vm892 = vmor %vm804, %vm860
    %vm893 = vmor %vm805, %vm861
    %vm894 = vmor %vm806, %vm862
    %vm895 = vmor %vm807, %vm863
    %vm896 = vmor %vm808, %vm864
    %vm897 = vmor %vm809, %vm865
    %vm898 = vmor %vm810, %vm866
    %vm899 = vmor %vm811, %vm867
    %vm900 = vmor %vm812, %vm868
    %vm901 = vmor %vm813, %vm869
    %vm902 = vmor %vm814, %vm870
    %vm903 = vmor %vm815, %vm871
    %904 = vset.pattern.permute.xlu0 8
    %905 = vperm.xlu0 %904, %v224
    %v906 = vpop.permute.xlu0 %905
    %907 = vset.pattern.permute.xlu0 8
    %908 = vperm.xlu0 %907, %v225
    %v909 = vpop.permute.xlu0 %908
    %910 = vset.pattern.permute.xlu0 8
    %911 = vperm.xlu0 %910, %v226
    %v912 = vpop.permute.xlu0 %911
    %913 = vset.pattern.permute.xlu0 8
    %914 = vperm.xlu0 %913, %v227
    %v915 = vpop.permute.xlu0 %914
    %916 = vset.pattern.permute.xlu0 8
    %917 = vperm.xlu0 %916, %v228
    %v918 = vpop.permute.xlu0 %917
    %919 = vset.pattern.permute.xlu0 8
    %920 = vperm.xlu0 %919, %v229
    %v921 = vpop.permute.xlu0 %920
    %922 = vset.pattern.permute.xlu0 8
    %923 = vperm.xlu0 %922, %v230
    %v924 = vpop.permute.xlu0 %923
    %925 = vset.pattern.permute.xlu0 8
    %926 = vperm.xlu0 %925, %v231
    %v927 = vpop.permute.xlu0 %926
    %vm928 = vcmp.eq.s32.totalorder %v220, %v906
    %vm929 = vcmp.eq.s32.totalorder %v221, %v906
    %vm930 = vcmp.eq.s32.totalorder %v222, %v906
    %vm931 = vcmp.eq.s32.totalorder %v223, %v906
    %vm932 = vcmp.eq.s32.totalorder %v220, %v909
    %vm933 = vcmp.eq.s32.totalorder %v221, %v909
    %vm934 = vcmp.eq.s32.totalorder %v222, %v909
    %vm935 = vcmp.eq.s32.totalorder %v223, %v909
    %vm936 = vcmp.eq.s32.totalorder %v220, %v912
    %vm937 = vcmp.eq.s32.totalorder %v221, %v912
    %vm938 = vcmp.eq.s32.totalorder %v222, %v912
    %vm939 = vcmp.eq.s32.totalorder %v223, %v912
    %vm940 = vcmp.eq.s32.totalorder %v220, %v915
    %vm941 = vcmp.eq.s32.totalorder %v221, %v915
    %vm942 = vcmp.eq.s32.totalorder %v222, %v915
    %vm943 = vcmp.eq.s32.totalorder %v223, %v915
    %vm944 = vcmp.eq.s32.totalorder %v220, %v918
    %vm945 = vcmp.eq.s32.totalorder %v221, %v918
    %vm946 = vcmp.eq.s32.totalorder %v222, %v918
    %vm947 = vcmp.eq.s32.totalorder %v223, %v918
    %vm948 = vcmp.eq.s32.totalorder %v220, %v921
    %vm949 = vcmp.eq.s32.totalorder %v221, %v921
    %vm950 = vcmp.eq.s32.totalorder %v222, %v921
    %vm951 = vcmp.eq.s32.totalorder %v223, %v921
    %vm952 = vcmp.eq.s32.totalorder %v220, %v924
    %vm953 = vcmp.eq.s32.totalorder %v221, %v924
    %vm954 = vcmp.eq.s32.totalorder %v222, %v924
    %vm955 = vcmp.eq.s32.totalorder %v223, %v924
    %vm956 = vcmp.eq.s32.totalorder %v220, %v927
    %vm957 = vcmp.eq.s32.totalorder %v221, %v927
    %vm958 = vcmp.eq.s32.totalorder %v222, %v927
    %vm959 = vcmp.eq.s32.totalorder %v223, %v927
    %vm960 = vmor %vm872, %vm928
    %vm961 = vmor %vm873, %vm929
    %vm962 = vmor %vm874, %vm930
    %vm963 = vmor %vm875, %vm931
    %vm964 = vmor %vm876, %vm932
    %vm965 = vmor %vm877, %vm933
    %vm966 = vmor %vm878, %vm934
    %vm967 = vmor %vm879, %vm935
    %vm968 = vmor %vm880, %vm936
    %vm969 = vmor %vm881, %vm937
    %vm970 = vmor %vm882, %vm938
    %vm971 = vmor %vm883, %vm939
    %vm972 = vmor %vm884, %vm940
    %vm973 = vmor %vm885, %vm941
    %vm974 = vmor %vm886, %vm942
    %vm975 = vmor %vm887, %vm943
    %vm976 = vmor %vm888, %vm944
    %vm977 = vmor %vm889, %vm945
    %vm978 = vmor %vm890, %vm946
    %vm979 = vmor %vm891, %vm947
    %vm980 = vmor %vm892, %vm948
    %vm981 = vmor %vm893, %vm949
    %vm982 = vmor %vm894, %vm950
    %vm983 = vmor %vm895, %vm951
    %vm984 = vmor %vm896, %vm952
    %vm985 = vmor %vm897, %vm953
    %vm986 = vmor %vm898, %vm954
    %vm987 = vmor %vm899, %vm955
    %vm988 = vmor %vm900, %vm956
    %vm989 = vmor %vm901, %vm957
    %vm990 = vmor %vm902, %vm958
    %vm991 = vmor %vm903, %vm959
    %992 = vset.pattern.permute.xlu0 9
    %993 = vperm.xlu0 %992, %v224
    %v994 = vpop.permute.xlu0 %993
    %995 = vset.pattern.permute.xlu0 9
    %996 = vperm.xlu0 %995, %v225
    %v997 = vpop.permute.xlu0 %996
    %998 = vset.pattern.permute.xlu0 9
    %999 = vperm.xlu0 %998, %v226
    %v1000 = vpop.permute.xlu0 %999
    %1001 = vset.pattern.permute.xlu0 9
    %1002 = vperm.xlu0 %1001, %v227
    %v1003 = vpop.permute.xlu0 %1002
    %1004 = vset.pattern.permute.xlu0 9
    %1005 = vperm.xlu0 %1004, %v228
    %v1006 = vpop.permute.xlu0 %1005
    %1007 = vset.pattern.permute.xlu0 9
    %1008 = vperm.xlu0 %1007, %v229
    %v1009 = vpop.permute.xlu0 %1008
    %1010 = vset.pattern.permute.xlu0 9
    %1011 = vperm.xlu0 %1010, %v230
    %v1012 = vpop.permute.xlu0 %1011
    %1013 = vset.pattern.permute.xlu0 9
    %1014 = vperm.xlu0 %1013, %v231
    %v1015 = vpop.permute.xlu0 %1014
    %vm1016 = vcmp.eq.s32.totalorder %v220, %v994
    %vm1017 = vcmp.eq.s32.totalorder %v221, %v994
    %vm1018 = vcmp.eq.s32.totalorder %v222, %v994
    %vm1019 = vcmp.eq.s32.totalorder %v223, %v994
    %vm1020 = vcmp.eq.s32.totalorder %v220, %v997
    %vm1021 = vcmp.eq.s32.totalorder %v221, %v997
    %vm1022 = vcmp.eq.s32.totalorder %v222, %v997
    %vm1023 = vcmp.eq.s32.totalorder %v223, %v997
    %vm1024 = vcmp.eq.s32.totalorder %v220, %v1000
    %vm1025 = vcmp.eq.s32.totalorder %v221, %v1000
    %vm1026 = vcmp.eq.s32.totalorder %v222, %v1000
    %vm1027 = vcmp.eq.s32.totalorder %v223, %v1000
    %vm1028 = vcmp.eq.s32.totalorder %v220, %v1003
    %vm1029 = vcmp.eq.s32.totalorder %v221, %v1003
    %vm1030 = vcmp.eq.s32.totalorder %v222, %v1003
    %vm1031 = vcmp.eq.s32.totalorder %v223, %v1003
    %vm1032 = vcmp.eq.s32.totalorder %v220, %v1006
    %vm1033 = vcmp.eq.s32.totalorder %v221, %v1006
    %vm1034 = vcmp.eq.s32.totalorder %v222, %v1006
    %vm1035 = vcmp.eq.s32.totalorder %v223, %v1006
    %vm1036 = vcmp.eq.s32.totalorder %v220, %v1009
    %vm1037 = vcmp.eq.s32.totalorder %v221, %v1009
    %vm1038 = vcmp.eq.s32.totalorder %v222, %v1009
    %vm1039 = vcmp.eq.s32.totalorder %v223, %v1009
    %vm1040 = vcmp.eq.s32.totalorder %v220, %v1012
    %vm1041 = vcmp.eq.s32.totalorder %v221, %v1012
    %vm1042 = vcmp.eq.s32.totalorder %v222, %v1012
    %vm1043 = vcmp.eq.s32.totalorder %v223, %v1012
    %vm1044 = vcmp.eq.s32.totalorder %v220, %v1015
    %vm1045 = vcmp.eq.s32.totalorder %v221, %v1015
    %vm1046 = vcmp.eq.s32.totalorder %v222, %v1015
    %vm1047 = vcmp.eq.s32.totalorder %v223, %v1015
    %vm1048 = vmor %vm960, %vm1016
    %vm1049 = vmor %vm961, %vm1017
    %vm1050 = vmor %vm962, %vm1018
    %vm1051 = vmor %vm963, %vm1019
    %vm1052 = vmor %vm964, %vm1020
    %vm1053 = vmor %vm965, %vm1021
    %vm1054 = vmor %vm966, %vm1022
    %vm1055 = vmor %vm967, %vm1023
    %vm1056 = vmor %vm968, %vm1024
    %vm1057 = vmor %vm969, %vm1025
    %vm1058 = vmor %vm970, %vm1026
    %vm1059 = vmor %vm971, %vm1027
    %vm1060 = vmor %vm972, %vm1028
    %vm1061 = vmor %vm973, %vm1029
    %vm1062 = vmor %vm974, %vm1030
    %vm1063 = vmor %vm975, %vm1031
    %vm1064 = vmor %vm976, %vm1032
    %vm1065 = vmor %vm977, %vm1033
    %vm1066 = vmor %vm978, %vm1034
    %vm1067 = vmor %vm979, %vm1035
    %vm1068 = vmor %vm980, %vm1036
    %vm1069 = vmor %vm981, %vm1037
    %vm1070 = vmor %vm982, %vm1038
    %vm1071 = vmor %vm983, %vm1039
    %vm1072 = vmor %vm984, %vm1040
    %vm1073 = vmor %vm985, %vm1041
    %vm1074 = vmor %vm986, %vm1042
    %vm1075 = vmor %vm987, %vm1043
    %vm1076 = vmor %vm988, %vm1044
    %vm1077 = vmor %vm989, %vm1045
    %vm1078 = vmor %vm990, %vm1046
    %vm1079 = vmor %vm991, %vm1047
    %1080 = vset.pattern.permute.xlu0 10
    %1081 = vperm.xlu0 %1080, %v224
    %v1082 = vpop.permute.xlu0 %1081
    %1083 = vset.pattern.permute.xlu0 10
    %1084 = vperm.xlu0 %1083, %v225
    %v1085 = vpop.permute.xlu0 %1084
    %1086 = vset.pattern.permute.xlu0 10
    %1087 = vperm.xlu0 %1086, %v226
    %v1088 = vpop.permute.xlu0 %1087
    %1089 = vset.pattern.permute.xlu0 10
    %1090 = vperm.xlu0 %1089, %v227
    %v1091 = vpop.permute.xlu0 %1090
    %1092 = vset.pattern.permute.xlu0 10
    %1093 = vperm.xlu0 %1092, %v228
    %v1094 = vpop.permute.xlu0 %1093
    %1095 = vset.pattern.permute.xlu0 10
    %1096 = vperm.xlu0 %1095, %v229
    %v1097 = vpop.permute.xlu0 %1096
    %1098 = vset.pattern.permute.xlu0 10
    %1099 = vperm.xlu0 %1098, %v230
    %v1100 = vpop.permute.xlu0 %1099
    %1101 = vset.pattern.permute.xlu0 10
    %1102 = vperm.xlu0 %1101, %v231
    %v1103 = vpop.permute.xlu0 %1102
    %vm1104 = vcmp.eq.s32.totalorder %v220, %v1082
    %vm1105 = vcmp.eq.s32.totalorder %v221, %v1082
    %vm1106 = vcmp.eq.s32.totalorder %v222, %v1082
    %vm1107 = vcmp.eq.s32.totalorder %v223, %v1082
    %vm1108 = vcmp.eq.s32.totalorder %v220, %v1085
    %vm1109 = vcmp.eq.s32.totalorder %v221, %v1085
    %vm1110 = vcmp.eq.s32.totalorder %v222, %v1085
    %vm1111 = vcmp.eq.s32.totalorder %v223, %v1085
    %vm1112 = vcmp.eq.s32.totalorder %v220, %v1088
    %vm1113 = vcmp.eq.s32.totalorder %v221, %v1088
    %vm1114 = vcmp.eq.s32.totalorder %v222, %v1088
    %vm1115 = vcmp.eq.s32.totalorder %v223, %v1088
    %vm1116 = vcmp.eq.s32.totalorder %v220, %v1091
    %vm1117 = vcmp.eq.s32.totalorder %v221, %v1091
    %vm1118 = vcmp.eq.s32.totalorder %v222, %v1091
    %vm1119 = vcmp.eq.s32.totalorder %v223, %v1091
    %vm1120 = vcmp.eq.s32.totalorder %v220, %v1094
    %vm1121 = vcmp.eq.s32.totalorder %v221, %v1094
    %vm1122 = vcmp.eq.s32.totalorder %v222, %v1094
    %vm1123 = vcmp.eq.s32.totalorder %v223, %v1094
    %vm1124 = vcmp.eq.s32.totalorder %v220, %v1097
    %vm1125 = vcmp.eq.s32.totalorder %v221, %v1097
    %vm1126 = vcmp.eq.s32.totalorder %v222, %v1097
    %vm1127 = vcmp.eq.s32.totalorder %v223, %v1097
    %vm1128 = vcmp.eq.s32.totalorder %v220, %v1100
    %vm1129 = vcmp.eq.s32.totalorder %v221, %v1100
    %vm1130 = vcmp.eq.s32.totalorder %v222, %v1100
    %vm1131 = vcmp.eq.s32.totalorder %v223, %v1100
    %vm1132 = vcmp.eq.s32.totalorder %v220, %v1103
    %vm1133 = vcmp.eq.s32.totalorder %v221, %v1103
    %vm1134 = vcmp.eq.s32.totalorder %v222, %v1103
    %vm1135 = vcmp.eq.s32.totalorder %v223, %v1103
    %vm1136 = vmor %vm1048, %vm1104
    %vm1137 = vmor %vm1049, %vm1105
    %vm1138 = vmor %vm1050, %vm1106
    %vm1139 = vmor %vm1051, %vm1107
    %vm1140 = vmor %vm1052, %vm1108
    %vm1141 = vmor %vm1053, %vm1109
    %vm1142 = vmor %vm1054, %vm1110
    %vm1143 = vmor %vm1055, %vm1111
    %vm1144 = vmor %vm1056, %vm1112
    %vm1145 = vmor %vm1057, %vm1113
    %vm1146 = vmor %vm1058, %vm1114
    %vm1147 = vmor %vm1059, %vm1115
    %vm1148 = vmor %vm1060, %vm1116
    %vm1149 = vmor %vm1061, %vm1117
    %vm1150 = vmor %vm1062, %vm1118
    %vm1151 = vmor %vm1063, %vm1119
    %vm1152 = vmor %vm1064, %vm1120
    %vm1153 = vmor %vm1065, %vm1121
    %vm1154 = vmor %vm1066, %vm1122
    %vm1155 = vmor %vm1067, %vm1123
    %vm1156 = vmor %vm1068, %vm1124
    %vm1157 = vmor %vm1069, %vm1125
    %vm1158 = vmor %vm1070, %vm1126
    %vm1159 = vmor %vm1071, %vm1127
    %vm1160 = vmor %vm1072, %vm1128
    %vm1161 = vmor %vm1073, %vm1129
    %vm1162 = vmor %vm1074, %vm1130
    %vm1163 = vmor %vm1075, %vm1131
    %vm1164 = vmor %vm1076, %vm1132
    %vm1165 = vmor %vm1077, %vm1133
    %vm1166 = vmor %vm1078, %vm1134
    %vm1167 = vmor %vm1079, %vm1135
    %1168 = vset.pattern.permute.xlu0 11
    %1169 = vperm.xlu0 %1168, %v224
    %v1170 = vpop.permute.xlu0 %1169
    %1171 = vset.pattern.permute.xlu0 11
    %1172 = vperm.xlu0 %1171, %v225
    %v1173 = vpop.permute.xlu0 %1172
    %1174 = vset.pattern.permute.xlu0 11
    %1175 = vperm.xlu0 %1174, %v226
    %v1176 = vpop.permute.xlu0 %1175
    %1177 = vset.pattern.permute.xlu0 11
    %1178 = vperm.xlu0 %1177, %v227
    %v1179 = vpop.permute.xlu0 %1178
    %1180 = vset.pattern.permute.xlu0 11
    %1181 = vperm.xlu0 %1180, %v228
    %v1182 = vpop.permute.xlu0 %1181
    %1183 = vset.pattern.permute.xlu0 11
    %1184 = vperm.xlu0 %1183, %v229
    %v1185 = vpop.permute.xlu0 %1184
    %1186 = vset.pattern.permute.xlu0 11
    %1187 = vperm.xlu0 %1186, %v230
    %v1188 = vpop.permute.xlu0 %1187
    %1189 = vset.pattern.permute.xlu0 11
    %1190 = vperm.xlu0 %1189, %v231
    %v1191 = vpop.permute.xlu0 %1190
    %vm1192 = vcmp.eq.s32.totalorder %v220, %v1170
    %vm1193 = vcmp.eq.s32.totalorder %v221, %v1170
    %vm1194 = vcmp.eq.s32.totalorder %v222, %v1170
    %vm1195 = vcmp.eq.s32.totalorder %v223, %v1170
    %vm1196 = vcmp.eq.s32.totalorder %v220, %v1173
    %vm1197 = vcmp.eq.s32.totalorder %v221, %v1173
    %vm1198 = vcmp.eq.s32.totalorder %v222, %v1173
    %vm1199 = vcmp.eq.s32.totalorder %v223, %v1173
    %vm1200 = vcmp.eq.s32.totalorder %v220, %v1176
    %vm1201 = vcmp.eq.s32.totalorder %v221, %v1176
    %vm1202 = vcmp.eq.s32.totalorder %v222, %v1176
    %vm1203 = vcmp.eq.s32.totalorder %v223, %v1176
    %vm1204 = vcmp.eq.s32.totalorder %v220, %v1179
    %vm1205 = vcmp.eq.s32.totalorder %v221, %v1179
    %vm1206 = vcmp.eq.s32.totalorder %v222, %v1179
    %vm1207 = vcmp.eq.s32.totalorder %v223, %v1179
    %vm1208 = vcmp.eq.s32.totalorder %v220, %v1182
    %vm1209 = vcmp.eq.s32.totalorder %v221, %v1182
    %vm1210 = vcmp.eq.s32.totalorder %v222, %v1182
    %vm1211 = vcmp.eq.s32.totalorder %v223, %v1182
    %vm1212 = vcmp.eq.s32.totalorder %v220, %v1185
    %vm1213 = vcmp.eq.s32.totalorder %v221, %v1185
    %vm1214 = vcmp.eq.s32.totalorder %v222, %v1185
    %vm1215 = vcmp.eq.s32.totalorder %v223, %v1185
    %vm1216 = vcmp.eq.s32.totalorder %v220, %v1188
    %vm1217 = vcmp.eq.s32.totalorder %v221, %v1188
    %vm1218 = vcmp.eq.s32.totalorder %v222, %v1188
    %vm1219 = vcmp.eq.s32.totalorder %v223, %v1188
    %vm1220 = vcmp.eq.s32.totalorder %v220, %v1191
    %vm1221 = vcmp.eq.s32.totalorder %v221, %v1191
    %vm1222 = vcmp.eq.s32.totalorder %v222, %v1191
    %vm1223 = vcmp.eq.s32.totalorder %v223, %v1191
    %vm1224 = vmor %vm1136, %vm1192
    %vm1225 = vmor %vm1137, %vm1193
    %vm1226 = vmor %vm1138, %vm1194
    %vm1227 = vmor %vm1139, %vm1195
    %vm1228 = vmor %vm1140, %vm1196
    %vm1229 = vmor %vm1141, %vm1197
    %vm1230 = vmor %vm1142, %vm1198
    %vm1231 = vmor %vm1143, %vm1199
    %vm1232 = vmor %vm1144, %vm1200
    %vm1233 = vmor %vm1145, %vm1201
    %vm1234 = vmor %vm1146, %vm1202
    %vm1235 = vmor %vm1147, %vm1203
    %vm1236 = vmor %vm1148, %vm1204
    %vm1237 = vmor %vm1149, %vm1205
    %vm1238 = vmor %vm1150, %vm1206
    %vm1239 = vmor %vm1151, %vm1207
    %vm1240 = vmor %vm1152, %vm1208
    %vm1241 = vmor %vm1153, %vm1209
    %vm1242 = vmor %vm1154, %vm1210
    %vm1243 = vmor %vm1155, %vm1211
    %vm1244 = vmor %vm1156, %vm1212
    %vm1245 = vmor %vm1157, %vm1213
    %vm1246 = vmor %vm1158, %vm1214
    %vm1247 = vmor %vm1159, %vm1215
    %vm1248 = vmor %vm1160, %vm1216
    %vm1249 = vmor %vm1161, %vm1217
    %vm1250 = vmor %vm1162, %vm1218
    %vm1251 = vmor %vm1163, %vm1219
    %vm1252 = vmor %vm1164, %vm1220
    %vm1253 = vmor %vm1165, %vm1221
    %vm1254 = vmor %vm1166, %vm1222
    %vm1255 = vmor %vm1167, %vm1223
    %1256 = vset.pattern.permute.xlu0 12
    %1257 = vperm.xlu0 %1256, %v224
    %v1258 = vpop.permute.xlu0 %1257
    %1259 = vset.pattern.permute.xlu0 12
    %1260 = vperm.xlu0 %1259, %v225
    %v1261 = vpop.permute.xlu0 %1260
    %1262 = vset.pattern.permute.xlu0 12
    %1263 = vperm.xlu0 %1262, %v226
    %v1264 = vpop.permute.xlu0 %1263
    %1265 = vset.pattern.permute.xlu0 12
    %1266 = vperm.xlu0 %1265, %v227
    %v1267 = vpop.permute.xlu0 %1266
    %1268 = vset.pattern.permute.xlu0 12
    %1269 = vperm.xlu0 %1268, %v228
    %v1270 = vpop.permute.xlu0 %1269
    %1271 = vset.pattern.permute.xlu0 12
    %1272 = vperm.xlu0 %1271, %v229
    %v1273 = vpop.permute.xlu0 %1272
    %1274 = vset.pattern.permute.xlu0 12
    %1275 = vperm.xlu0 %1274, %v230
    %v1276 = vpop.permute.xlu0 %1275
    %1277 = vset.pattern.permute.xlu0 12
    %1278 = vperm.xlu0 %1277, %v231
    %v1279 = vpop.permute.xlu0 %1278
    %vm1280 = vcmp.eq.s32.totalorder %v220, %v1258
    %vm1281 = vcmp.eq.s32.totalorder %v221, %v1258
    %vm1282 = vcmp.eq.s32.totalorder %v222, %v1258
    %vm1283 = vcmp.eq.s32.totalorder %v223, %v1258
    %vm1284 = vcmp.eq.s32.totalorder %v220, %v1261
    %vm1285 = vcmp.eq.s32.totalorder %v221, %v1261
    %vm1286 = vcmp.eq.s32.totalorder %v222, %v1261
    %vm1287 = vcmp.eq.s32.totalorder %v223, %v1261
    %vm1288 = vcmp.eq.s32.totalorder %v220, %v1264
    %vm1289 = vcmp.eq.s32.totalorder %v221, %v1264
    %vm1290 = vcmp.eq.s32.totalorder %v222, %v1264
    %vm1291 = vcmp.eq.s32.totalorder %v223, %v1264
    %vm1292 = vcmp.eq.s32.totalorder %v220, %v1267
    %vm1293 = vcmp.eq.s32.totalorder %v221, %v1267
    %vm1294 = vcmp.eq.s32.totalorder %v222, %v1267
    %vm1295 = vcmp.eq.s32.totalorder %v223, %v1267
    %vm1296 = vcmp.eq.s32.totalorder %v220, %v1270
    %vm1297 = vcmp.eq.s32.totalorder %v221, %v1270
    %vm1298 = vcmp.eq.s32.totalorder %v222, %v1270
    %vm1299 = vcmp.eq.s32.totalorder %v223, %v1270
    %vm1300 = vcmp.eq.s32.totalorder %v220, %v1273
    %vm1301 = vcmp.eq.s32.totalorder %v221, %v1273
    %vm1302 = vcmp.eq.s32.totalorder %v222, %v1273
    %vm1303 = vcmp.eq.s32.totalorder %v223, %v1273
    %vm1304 = vcmp.eq.s32.totalorder %v220, %v1276
    %vm1305 = vcmp.eq.s32.totalorder %v221, %v1276
    %vm1306 = vcmp.eq.s32.totalorder %v222, %v1276
    %vm1307 = vcmp.eq.s32.totalorder %v223, %v1276
    %vm1308 = vcmp.eq.s32.totalorder %v220, %v1279
    %vm1309 = vcmp.eq.s32.totalorder %v221, %v1279
    %vm1310 = vcmp.eq.s32.totalorder %v222, %v1279
    %vm1311 = vcmp.eq.s32.totalorder %v223, %v1279
    %vm1312 = vmor %vm1224, %vm1280
    %vm1313 = vmor %vm1225, %vm1281
    %vm1314 = vmor %vm1226, %vm1282
    %vm1315 = vmor %vm1227, %vm1283
    %vm1316 = vmor %vm1228, %vm1284
    %vm1317 = vmor %vm1229, %vm1285
    %vm1318 = vmor %vm1230, %vm1286
    %vm1319 = vmor %vm1231, %vm1287
    %vm1320 = vmor %vm1232, %vm1288
    %vm1321 = vmor %vm1233, %vm1289
    %vm1322 = vmor %vm1234, %vm1290
    %vm1323 = vmor %vm1235, %vm1291
    %vm1324 = vmor %vm1236, %vm1292
    %vm1325 = vmor %vm1237, %vm1293
    %vm1326 = vmor %vm1238, %vm1294
    %vm1327 = vmor %vm1239, %vm1295
    %vm1328 = vmor %vm1240, %vm1296
    %vm1329 = vmor %vm1241, %vm1297
    %vm1330 = vmor %vm1242, %vm1298
    %vm1331 = vmor %vm1243, %vm1299
    %vm1332 = vmor %vm1244, %vm1300
    %vm1333 = vmor %vm1245, %vm1301
    %vm1334 = vmor %vm1246, %vm1302
    %vm1335 = vmor %vm1247, %vm1303
    %vm1336 = vmor %vm1248, %vm1304
    %vm1337 = vmor %vm1249, %vm1305
    %vm1338 = vmor %vm1250, %vm1306
    %vm1339 = vmor %vm1251, %vm1307
    %vm1340 = vmor %vm1252, %vm1308
    %vm1341 = vmor %vm1253, %vm1309
    %vm1342 = vmor %vm1254, %vm1310
    %vm1343 = vmor %vm1255, %vm1311
    %1344 = vset.pattern.permute.xlu0 13
    %1345 = vperm.xlu0 %1344, %v224
    %v1346 = vpop.permute.xlu0 %1345
    %1347 = vset.pattern.permute.xlu0 13
    %1348 = vperm.xlu0 %1347, %v225
    %v1349 = vpop.permute.xlu0 %1348
    %1350 = vset.pattern.permute.xlu0 13
    %1351 = vperm.xlu0 %1350, %v226
    %v1352 = vpop.permute.xlu0 %1351
    %1353 = vset.pattern.permute.xlu0 13
    %1354 = vperm.xlu0 %1353, %v227
    %v1355 = vpop.permute.xlu0 %1354
    %1356 = vset.pattern.permute.xlu0 13
    %1357 = vperm.xlu0 %1356, %v228
    %v1358 = vpop.permute.xlu0 %1357
    %1359 = vset.pattern.permute.xlu0 13
    %1360 = vperm.xlu0 %1359, %v229
    %v1361 = vpop.permute.xlu0 %1360
    %1362 = vset.pattern.permute.xlu0 13
    %1363 = vperm.xlu0 %1362, %v230
    %v1364 = vpop.permute.xlu0 %1363
    %1365 = vset.pattern.permute.xlu0 13
    %1366 = vperm.xlu0 %1365, %v231
    %v1367 = vpop.permute.xlu0 %1366
    %vm1368 = vcmp.eq.s32.totalorder %v220, %v1346
    %vm1369 = vcmp.eq.s32.totalorder %v221, %v1346
    %vm1370 = vcmp.eq.s32.totalorder %v222, %v1346
    %vm1371 = vcmp.eq.s32.totalorder %v223, %v1346
    %vm1372 = vcmp.eq.s32.totalorder %v220, %v1349
    %vm1373 = vcmp.eq.s32.totalorder %v221, %v1349
    %vm1374 = vcmp.eq.s32.totalorder %v222, %v1349
    %vm1375 = vcmp.eq.s32.totalorder %v223, %v1349
    %vm1376 = vcmp.eq.s32.totalorder %v220, %v1352
    %vm1377 = vcmp.eq.s32.totalorder %v221, %v1352
    %vm1378 = vcmp.eq.s32.totalorder %v222, %v1352
    %vm1379 = vcmp.eq.s32.totalorder %v223, %v1352
    %vm1380 = vcmp.eq.s32.totalorder %v220, %v1355
    %vm1381 = vcmp.eq.s32.totalorder %v221, %v1355
    %vm1382 = vcmp.eq.s32.totalorder %v222, %v1355
    %vm1383 = vcmp.eq.s32.totalorder %v223, %v1355
    %vm1384 = vcmp.eq.s32.totalorder %v220, %v1358
    %vm1385 = vcmp.eq.s32.totalorder %v221, %v1358
    %vm1386 = vcmp.eq.s32.totalorder %v222, %v1358
    %vm1387 = vcmp.eq.s32.totalorder %v223, %v1358
    %vm1388 = vcmp.eq.s32.totalorder %v220, %v1361
    %vm1389 = vcmp.eq.s32.totalorder %v221, %v1361
    %vm1390 = vcmp.eq.s32.totalorder %v222, %v1361
    %vm1391 = vcmp.eq.s32.totalorder %v223, %v1361
    %vm1392 = vcmp.eq.s32.totalorder %v220, %v1364
    %vm1393 = vcmp.eq.s32.totalorder %v221, %v1364
    %vm1394 = vcmp.eq.s32.totalorder %v222, %v1364
    %vm1395 = vcmp.eq.s32.totalorder %v223, %v1364
    %vm1396 = vcmp.eq.s32.totalorder %v220, %v1367
    %vm1397 = vcmp.eq.s32.totalorder %v221, %v1367
    %vm1398 = vcmp.eq.s32.totalorder %v222, %v1367
    %vm1399 = vcmp.eq.s32.totalorder %v223, %v1367
    %vm1400 = vmor %vm1312, %vm1368
    %vm1401 = vmor %vm1313, %vm1369
    %vm1402 = vmor %vm1314, %vm1370
    %vm1403 = vmor %vm1315, %vm1371
    %vm1404 = vmor %vm1316, %vm1372
    %vm1405 = vmor %vm1317, %vm1373
    %vm1406 = vmor %vm1318, %vm1374
    %vm1407 = vmor %vm1319, %vm1375
    %vm1408 = vmor %vm1320, %vm1376
    %vm1409 = vmor %vm1321, %vm1377
    %vm1410 = vmor %vm1322, %vm1378
    %vm1411 = vmor %vm1323, %vm1379
    %vm1412 = vmor %vm1324, %vm1380
    %vm1413 = vmor %vm1325, %vm1381
    %vm1414 = vmor %vm1326, %vm1382
    %vm1415 = vmor %vm1327, %vm1383
    %vm1416 = vmor %vm1328, %vm1384
    %vm1417 = vmor %vm1329, %vm1385
    %vm1418 = vmor %vm1330, %vm1386
    %vm1419 = vmor %vm1331, %vm1387
    %vm1420 = vmor %vm1332, %vm1388
    %vm1421 = vmor %vm1333, %vm1389
    %vm1422 = vmor %vm1334, %vm1390
    %vm1423 = vmor %vm1335, %vm1391
    %vm1424 = vmor %vm1336, %vm1392
    %vm1425 = vmor %vm1337, %vm1393
    %vm1426 = vmor %vm1338, %vm1394
    %vm1427 = vmor %vm1339, %vm1395
    %vm1428 = vmor %vm1340, %vm1396
    %vm1429 = vmor %vm1341, %vm1397
    %vm1430 = vmor %vm1342, %vm1398
    %vm1431 = vmor %vm1343, %vm1399
    %1432 = vset.pattern.permute.xlu0 14
    %1433 = vperm.xlu0 %1432, %v224
    %v1434 = vpop.permute.xlu0 %1433
    %1435 = vset.pattern.permute.xlu0 14
    %1436 = vperm.xlu0 %1435, %v225
    %v1437 = vpop.permute.xlu0 %1436
    %1438 = vset.pattern.permute.xlu0 14
    %1439 = vperm.xlu0 %1438, %v226
    %v1440 = vpop.permute.xlu0 %1439
    %1441 = vset.pattern.permute.xlu0 14
    %1442 = vperm.xlu0 %1441, %v227
    %v1443 = vpop.permute.xlu0 %1442
    %1444 = vset.pattern.permute.xlu0 14
    %1445 = vperm.xlu0 %1444, %v228
    %v1446 = vpop.permute.xlu0 %1445
    %1447 = vset.pattern.permute.xlu0 14
    %1448 = vperm.xlu0 %1447, %v229
    %v1449 = vpop.permute.xlu0 %1448
    %1450 = vset.pattern.permute.xlu0 14
    %1451 = vperm.xlu0 %1450, %v230
    %v1452 = vpop.permute.xlu0 %1451
    %1453 = vset.pattern.permute.xlu0 14
    %1454 = vperm.xlu0 %1453, %v231
    %v1455 = vpop.permute.xlu0 %1454
    %vm1456 = vcmp.eq.s32.totalorder %v220, %v1434
    %vm1457 = vcmp.eq.s32.totalorder %v221, %v1434
    %vm1458 = vcmp.eq.s32.totalorder %v222, %v1434
    %vm1459 = vcmp.eq.s32.totalorder %v223, %v1434
    %vm1460 = vcmp.eq.s32.totalorder %v220, %v1437
    %vm1461 = vcmp.eq.s32.totalorder %v221, %v1437
    %vm1462 = vcmp.eq.s32.totalorder %v222, %v1437
    %vm1463 = vcmp.eq.s32.totalorder %v223, %v1437
    %vm1464 = vcmp.eq.s32.totalorder %v220, %v1440
    %vm1465 = vcmp.eq.s32.totalorder %v221, %v1440
    %vm1466 = vcmp.eq.s32.totalorder %v222, %v1440
    %vm1467 = vcmp.eq.s32.totalorder %v223, %v1440
    %vm1468 = vcmp.eq.s32.totalorder %v220, %v1443
    %vm1469 = vcmp.eq.s32.totalorder %v221, %v1443
    %vm1470 = vcmp.eq.s32.totalorder %v222, %v1443
    %vm1471 = vcmp.eq.s32.totalorder %v223, %v1443
    %vm1472 = vcmp.eq.s32.totalorder %v220, %v1446
    %vm1473 = vcmp.eq.s32.totalorder %v221, %v1446
    %vm1474 = vcmp.eq.s32.totalorder %v222, %v1446
    %vm1475 = vcmp.eq.s32.totalorder %v223, %v1446
    %vm1476 = vcmp.eq.s32.totalorder %v220, %v1449
    %vm1477 = vcmp.eq.s32.totalorder %v221, %v1449
    %vm1478 = vcmp.eq.s32.totalorder %v222, %v1449
    %vm1479 = vcmp.eq.s32.totalorder %v223, %v1449
    %vm1480 = vcmp.eq.s32.totalorder %v220, %v1452
    %vm1481 = vcmp.eq.s32.totalorder %v221, %v1452
    %vm1482 = vcmp.eq.s32.totalorder %v222, %v1452
    %vm1483 = vcmp.eq.s32.totalorder %v223, %v1452
    %vm1484 = vcmp.eq.s32.totalorder %v220, %v1455
    %vm1485 = vcmp.eq.s32.totalorder %v221, %v1455
    %vm1486 = vcmp.eq.s32.totalorder %v222, %v1455
    %vm1487 = vcmp.eq.s32.totalorder %v223, %v1455
    %vm1488 = vmor %vm1400, %vm1456
    %vm1489 = vmor %vm1401, %vm1457
    %vm1490 = vmor %vm1402, %vm1458
    %vm1491 = vmor %vm1403, %vm1459
    %vm1492 = vmor %vm1404, %vm1460
    %vm1493 = vmor %vm1405, %vm1461
    %vm1494 = vmor %vm1406, %vm1462
    %vm1495 = vmor %vm1407, %vm1463
    %vm1496 = vmor %vm1408, %vm1464
    %vm1497 = vmor %vm1409, %vm1465
    %vm1498 = vmor %vm1410, %vm1466
    %vm1499 = vmor %vm1411, %vm1467
    %vm1500 = vmor %vm1412, %vm1468
    %vm1501 = vmor %vm1413, %vm1469
    %vm1502 = vmor %vm1414, %vm1470
    %vm1503 = vmor %vm1415, %vm1471
    %vm1504 = vmor %vm1416, %vm1472
    %vm1505 = vmor %vm1417, %vm1473
    %vm1506 = vmor %vm1418, %vm1474
    %vm1507 = vmor %vm1419, %vm1475
    %vm1508 = vmor %vm1420, %vm1476
    %vm1509 = vmor %vm1421, %vm1477
    %vm1510 = vmor %vm1422, %vm1478
    %vm1511 = vmor %vm1423, %vm1479
    %vm1512 = vmor %vm1424, %vm1480
    %vm1513 = vmor %vm1425, %vm1481
    %vm1514 = vmor %vm1426, %vm1482
    %vm1515 = vmor %vm1427, %vm1483
    %vm1516 = vmor %vm1428, %vm1484
    %vm1517 = vmor %vm1429, %vm1485
    %vm1518 = vmor %vm1430, %vm1486
    %vm1519 = vmor %vm1431, %vm1487
    %1520 = vset.pattern.permute.xlu0 15
    %1521 = vperm.xlu0 %1520, %v224
    %v1522 = vpop.permute.xlu0 %1521
    %1523 = vset.pattern.permute.xlu0 15
    %1524 = vperm.xlu0 %1523, %v225
    %v1525 = vpop.permute.xlu0 %1524
    %1526 = vset.pattern.permute.xlu0 15
    %1527 = vperm.xlu0 %1526, %v226
    %v1528 = vpop.permute.xlu0 %1527
    %1529 = vset.pattern.permute.xlu0 15
    %1530 = vperm.xlu0 %1529, %v227
    %v1531 = vpop.permute.xlu0 %1530
    %1532 = vset.pattern.permute.xlu0 15
    %1533 = vperm.xlu0 %1532, %v228
    %v1534 = vpop.permute.xlu0 %1533
    %1535 = vset.pattern.permute.xlu0 15
    %1536 = vperm.xlu0 %1535, %v229
    %v1537 = vpop.permute.xlu0 %1536
    %1538 = vset.pattern.permute.xlu0 15
    %1539 = vperm.xlu0 %1538, %v230
    %v1540 = vpop.permute.xlu0 %1539
    %1541 = vset.pattern.permute.xlu0 15
    %1542 = vperm.xlu0 %1541, %v231
    %v1543 = vpop.permute.xlu0 %1542
    %vm1544 = vcmp.eq.s32.totalorder %v220, %v1522
    %vm1545 = vcmp.eq.s32.totalorder %v221, %v1522
    %vm1546 = vcmp.eq.s32.totalorder %v222, %v1522
    %vm1547 = vcmp.eq.s32.totalorder %v223, %v1522
    %vm1548 = vcmp.eq.s32.totalorder %v220, %v1525
    %vm1549 = vcmp.eq.s32.totalorder %v221, %v1525
    %vm1550 = vcmp.eq.s32.totalorder %v222, %v1525
    %vm1551 = vcmp.eq.s32.totalorder %v223, %v1525
    %vm1552 = vcmp.eq.s32.totalorder %v220, %v1528
    %vm1553 = vcmp.eq.s32.totalorder %v221, %v1528
    %vm1554 = vcmp.eq.s32.totalorder %v222, %v1528
    %vm1555 = vcmp.eq.s32.totalorder %v223, %v1528
    %vm1556 = vcmp.eq.s32.totalorder %v220, %v1531
    %vm1557 = vcmp.eq.s32.totalorder %v221, %v1531
    %vm1558 = vcmp.eq.s32.totalorder %v222, %v1531
    %vm1559 = vcmp.eq.s32.totalorder %v223, %v1531
    %vm1560 = vcmp.eq.s32.totalorder %v220, %v1534
    %vm1561 = vcmp.eq.s32.totalorder %v221, %v1534
    %vm1562 = vcmp.eq.s32.totalorder %v222, %v1534
    %vm1563 = vcmp.eq.s32.totalorder %v223, %v1534
    %vm1564 = vcmp.eq.s32.totalorder %v220, %v1537
    %vm1565 = vcmp.eq.s32.totalorder %v221, %v1537
    %vm1566 = vcmp.eq.s32.totalorder %v222, %v1537
    %vm1567 = vcmp.eq.s32.totalorder %v223, %v1537
    %vm1568 = vcmp.eq.s32.totalorder %v220, %v1540
    %vm1569 = vcmp.eq.s32.totalorder %v221, %v1540
    %vm1570 = vcmp.eq.s32.totalorder %v222, %v1540
    %vm1571 = vcmp.eq.s32.totalorder %v223, %v1540
    %vm1572 = vcmp.eq.s32.totalorder %v220, %v1543
    %vm1573 = vcmp.eq.s32.totalorder %v221, %v1543
    %vm1574 = vcmp.eq.s32.totalorder %v222, %v1543
    %vm1575 = vcmp.eq.s32.totalorder %v223, %v1543
    %vm1576 = vmor %vm1488, %vm1544
    %vm1577 = vmor %vm1489, %vm1545
    %vm1578 = vmor %vm1490, %vm1546
    %vm1579 = vmor %vm1491, %vm1547
    %vm1580 = vmor %vm1492, %vm1548
    %vm1581 = vmor %vm1493, %vm1549
    %vm1582 = vmor %vm1494, %vm1550
    %vm1583 = vmor %vm1495, %vm1551
    %vm1584 = vmor %vm1496, %vm1552
    %vm1585 = vmor %vm1497, %vm1553
    %vm1586 = vmor %vm1498, %vm1554
    %vm1587 = vmor %vm1499, %vm1555
    %vm1588 = vmor %vm1500, %vm1556
    %vm1589 = vmor %vm1501, %vm1557
    %vm1590 = vmor %vm1502, %vm1558
    %vm1591 = vmor %vm1503, %vm1559
    %vm1592 = vmor %vm1504, %vm1560
    %vm1593 = vmor %vm1505, %vm1561
    %vm1594 = vmor %vm1506, %vm1562
    %vm1595 = vmor %vm1507, %vm1563
    %vm1596 = vmor %vm1508, %vm1564
    %vm1597 = vmor %vm1509, %vm1565
    %vm1598 = vmor %vm1510, %vm1566
    %vm1599 = vmor %vm1511, %vm1567
    %vm1600 = vmor %vm1512, %vm1568
    %vm1601 = vmor %vm1513, %vm1569
    %vm1602 = vmor %vm1514, %vm1570
    %vm1603 = vmor %vm1515, %vm1571
    %vm1604 = vmor %vm1516, %vm1572
    %vm1605 = vmor %vm1517, %vm1573
    %vm1606 = vmor %vm1518, %vm1574
    %vm1607 = vmor %vm1519, %vm1575
    %v1608 = vsel %vm1576, 1, 0
    %v1609 = vsel %vm1577, 1, 0
    %v1610 = vsel %vm1578, 1, 0
    %v1611 = vsel %vm1579, 1, 0
    %v1612 = vsel %vm1580, 1, 0
    %v1613 = vsel %vm1581, 1, 0
    %v1614 = vsel %vm1582, 1, 0
    %v1615 = vsel %vm1583, 1, 0
    %v1616 = vsel %vm1584, 1, 0
    %v1617 = vsel %vm1585, 1, 0
    %v1618 = vsel %vm1586, 1, 0
    %v1619 = vsel %vm1587, 1, 0
    %v1620 = vsel %vm1588, 1, 0
    %v1621 = vsel %vm1589, 1, 0
    %v1622 = vsel %vm1590, 1, 0
    %v1623 = vsel %vm1591, 1, 0
    %v1624 = vsel %vm1592, 1, 0
    %v1625 = vsel %vm1593, 1, 0
    %v1626 = vsel %vm1594, 1, 0
    %v1627 = vsel %vm1595, 1, 0
    %v1628 = vsel %vm1596, 1, 0
    %v1629 = vsel %vm1597, 1, 0
    %v1630 = vsel %vm1598, 1, 0
    %v1631 = vsel %vm1599, 1, 0
    %v1632 = vsel %vm1600, 1, 0
    %v1633 = vsel %vm1601, 1, 0
    %v1634 = vsel %vm1602, 1, 0
    %v1635 = vsel %vm1603, 1, 0
    %v1636 = vsel %vm1604, 1, 0
    %v1637 = vsel %vm1605, 1, 0
    %v1638 = vsel %vm1606, 1, 0
    %v1639 = vsel %vm1607, 1, 0
    %v1640 = vcvt.s32.f32 %v1608
    %v1641 = vcvt.s32.f32 %v1609
    %v1642 = vcvt.s32.f32 %v1610
    %v1643 = vcvt.s32.f32 %v1611
    %v1644 = vcvt.s32.f32 %v1612
    %v1645 = vcvt.s32.f32 %v1613
    %v1646 = vcvt.s32.f32 %v1614
    %v1647 = vcvt.s32.f32 %v1615
    %v1648 = vcvt.s32.f32 %v1616
    %v1649 = vcvt.s32.f32 %v1617
    %v1650 = vcvt.s32.f32 %v1618
    %v1651 = vcvt.s32.f32 %v1619
    %v1652 = vcvt.s32.f32 %v1620
    %v1653 = vcvt.s32.f32 %v1621
    %v1654 = vcvt.s32.f32 %v1622
    %v1655 = vcvt.s32.f32 %v1623
    %v1656 = vcvt.s32.f32 %v1624
    %v1657 = vcvt.s32.f32 %v1625
    %v1658 = vcvt.s32.f32 %v1626
    %v1659 = vcvt.s32.f32 %v1627
    %v1660 = vcvt.s32.f32 %v1628
    %v1661 = vcvt.s32.f32 %v1629
    %v1662 = vcvt.s32.f32 %v1630
    %v1663 = vcvt.s32.f32 %v1631
    %v1664 = vcvt.s32.f32 %v1632
    %v1665 = vcvt.s32.f32 %v1633
    %v1666 = vcvt.s32.f32 %v1634
    %v1667 = vcvt.s32.f32 %v1635
    %v1668 = vcvt.s32.f32 %v1636
    %v1669 = vcvt.s32.f32 %v1637
    %v1670 = vcvt.s32.f32 %v1638
    %v1671 = vcvt.s32.f32 %v1639
    %v1672 = vpack.c.bf16 %v1644, %v1640
    %v1673 = vpack.c.bf16 %v1645, %v1641
    %v1674 = vpack.c.bf16 %v1646, %v1642
    %v1675 = vpack.c.bf16 %v1647, %v1643
    %v1676 = vpack.c.bf16 %v1652, %v1648
    %v1677 = vpack.c.bf16 %v1653, %v1649
    %v1678 = vpack.c.bf16 %v1654, %v1650
    %v1679 = vpack.c.bf16 %v1655, %v1651
    %v1680 = vpack.c.bf16 %v1660, %v1656
    %v1681 = vpack.c.bf16 %v1661, %v1657
    %v1682 = vpack.c.bf16 %v1662, %v1658
    %v1683 = vpack.c.bf16 %v1663, %v1659
    %v1684 = vpack.c.bf16 %v1668, %v1664
    %v1685 = vpack.c.bf16 %v1669, %v1665
    %v1686 = vpack.c.bf16 %v1670, %v1666
    %v1687 = vpack.c.bf16 %v1671, %v1667
    %v1688 = vld [vmem:[%s1] sm:$0xf]
    %v1689 = vld [vmem:[%s1 + $0x4] sm:$0xf]
    %v1690 = vld [vmem:[%s1 + $0x8] sm:$0xf]
    %v1691 = vld [vmem:[%s1 + $0xc] sm:$0xf]
    %v1692 = vld [vmem:[%s1 + $0x10] sm:$0xf]
    %v1693 = vld [vmem:[%s1 + $0x14] sm:$0xf]
    %v1694 = vld [vmem:[%s1 + $0x18] sm:$0xf]
    %v1695 = vld [vmem:[%s1 + $0x1c] sm:$0xf]
    %v1696 = vld [vmem:[%s1 + $0x20] sm:$0xf]
    %v1697 = vld [vmem:[%s1 + $0x24] sm:$0xf]
    %v1698 = vld [vmem:[%s1 + $0x28] sm:$0xf]
    %v1699 = vld [vmem:[%s1 + $0x2c] sm:$0xf]
    %v1700 = vld [vmem:[%s1 + $0x30] sm:$0xf]
    %v1701 = vld [vmem:[%s1 + $0x34] sm:$0xf]
    %v1702 = vld [vmem:[%s1 + $0x38] sm:$0xf]
    %v1703 = vld [vmem:[%s1 + $0x3c] sm:$0xf]
    %v1704 = vld [vmem:[%s1 + $0x40] sm:$0xf]
    %v1705 = vld [vmem:[%s1 + $0x44] sm:$0xf]
    %v1706 = vld [vmem:[%s1 + $0x48] sm:$0xf]
    %v1707 = vld [vmem:[%s1 + $0x4c] sm:$0xf]
    %v1708 = vld [vmem:[%s1 + $0x50] sm:$0xf]
    %v1709 = vld [vmem:[%s1 + $0x54] sm:$0xf]
    %v1710 = vld [vmem:[%s1 + $0x58] sm:$0xf]
    %v1711 = vld [vmem:[%s1 + $0x5c] sm:$0xf]
    %v1712 = vld [vmem:[%s1 + $0x60] sm:$0xf]
    %v1713 = vld [vmem:[%s1 + $0x64] sm:$0xf]
    %v1714 = vld [vmem:[%s1 + $0x68] sm:$0xf]
    %v1715 = vld [vmem:[%s1 + $0x6c] sm:$0xf]
    %v1716 = vld [vmem:[%s1 + $0x70] sm:$0xf]
    %v1717 = vld [vmem:[%s1 + $0x74] sm:$0xf]
    %v1718 = vld [vmem:[%s1 + $0x78] sm:$0xf]
    %v1719 = vld [vmem:[%s1 + $0x7c] sm:$0xf]
    %v1720 = vld [vmem:[%s1 + $0x80] sm:$0xf]
    %v1721 = vld [vmem:[%s1 + $0x84] sm:$0xf]
    %v1722 = vld [vmem:[%s1 + $0x88] sm:$0xf]
    %v1723 = vld [vmem:[%s1 + $0x8c] sm:$0xf]
    %v1724 = vld [vmem:[%s1 + $0x90] sm:$0xf]
    %v1725 = vld [vmem:[%s1 + $0x94] sm:$0xf]
    %v1726 = vld [vmem:[%s1 + $0x98] sm:$0xf]
    %v1727 = vld [vmem:[%s1 + $0x9c] sm:$0xf]
    %v1728 = vld [vmem:[%s1 + $0xa0] sm:$0xf]
    %v1729 = vld [vmem:[%s1 + $0xa4] sm:$0xf]
    %v1730 = vld [vmem:[%s1 + $0xa8] sm:$0xf]
    %v1731 = vld [vmem:[%s1 + $0xac] sm:$0xf]
    %v1732 = vld [vmem:[%s1 + $0xb0] sm:$0xf]
    %v1733 = vld [vmem:[%s1 + $0xb4] sm:$0xf]
    %v1734 = vld [vmem:[%s1 + $0xb8] sm:$0xf]
    %v1735 = vld [vmem:[%s1 + $0xbc] sm:$0xf]
    %v1736 = vld [vmem:[%s1 + $0xc0] sm:$0xf]
    %v1737 = vld [vmem:[%s1 + $0xc4] sm:$0xf]
    %v1738 = vld [vmem:[%s1 + $0xc8] sm:$0xf]
    %v1739 = vld [vmem:[%s1 + $0xcc] sm:$0xf]
    %v1740 = vld [vmem:[%s1 + $0xd0] sm:$0xf]
    %v1741 = vld [vmem:[%s1 + $0xd4] sm:$0xf]
    %v1742 = vld [vmem:[%s1 + $0xd8] sm:$0xf]
    %v1743 = vld [vmem:[%s1 + $0xdc] sm:$0xf]
    %v1744 = vld [vmem:[%s1 + $0xe0] sm:$0xf]
    %v1745 = vld [vmem:[%s1 + $0xe4] sm:$0xf]
    %v1746 = vld [vmem:[%s1 + $0xe8] sm:$0xf]
    %v1747 = vld [vmem:[%s1 + $0xec] sm:$0xf]
    %v1748 = vld [vmem:[%s1 + $0xf0] sm:$0xf]
    %v1749 = vld [vmem:[%s1 + $0xf4] sm:$0xf]
    %v1750 = vld [vmem:[%s1 + $0xf8] sm:$0xf]
    %v1751 = vld [vmem:[%s1 + $0xfc] sm:$0xf]
    %v1752 = vld [vmem:[%s2] sm:$0x1]
    %v1754 = vperm.slane %v1752, 0
    %v1820 = vunpack.c.l.b16 %v1688
    %v1821 = vunpack.c.l.b16 %v1689
    %v1822 = vunpack.c.l.b16 %v1690
    %v1823 = vunpack.c.l.b16 %v1691
    %v1824 = vunpack.c.l.b16 %v1692
    %v1825 = vunpack.c.l.b16 %v1693
    %v1826 = vunpack.c.l.b16 %v1694
    %v1827 = vunpack.c.l.b16 %v1695
    %v1828 = vunpack.c.l.b16 %v1696
    %v1829 = vunpack.c.l.b16 %v1697
    %v1830 = vunpack.c.l.b16 %v1698
    %v1831 = vunpack.c.l.b16 %v1699
    %v1832 = vunpack.c.l.b16 %v1700
    %v1833 = vunpack.c.l.b16 %v1701
    %v1834 = vunpack.c.l.b16 %v1702
    %v1835 = vunpack.c.l.b16 %v1703
    %v1836 = vunpack.c.l.b16 %v1704
    %v1837 = vunpack.c.l.b16 %v1705
    %v1838 = vunpack.c.l.b16 %v1706
    %v1839 = vunpack.c.l.b16 %v1707
    %v1840 = vunpack.c.l.b16 %v1708
    %v1841 = vunpack.c.l.b16 %v1709
    %v1842 = vunpack.c.l.b16 %v1710
    %v1843 = vunpack.c.l.b16 %v1711
    %v1844 = vunpack.c.l.b16 %v1712
    %v1845 = vunpack.c.l.b16 %v1713
    %v1846 = vunpack.c.l.b16 %v1714
    %v1847 = vunpack.c.l.b16 %v1715
    %v1848 = vunpack.c.l.b16 %v1716
    %v1849 = vunpack.c.l.b16 %v1717
    %v1850 = vunpack.c.l.b16 %v1718
    %v1851 = vunpack.c.l.b16 %v1719
    %v1852 = vunpack.c.l.b16 %v1720
    %v1853 = vunpack.c.l.b16 %v1721
    %v1854 = vunpack.c.l.b16 %v1722
    %v1855 = vunpack.c.l.b16 %v1723
    %v1856 = vunpack.c.l.b16 %v1724
    %v1857 = vunpack.c.l.b16 %v1725
    %v1858 = vunpack.c.l.b16 %v1726
    %v1859 = vunpack.c.l.b16 %v1727
    %v1860 = vunpack.c.l.b16 %v1728
    %v1861 = vunpack.c.l.b16 %v1729
    %v1862 = vunpack.c.l.b16 %v1730
    %v1863 = vunpack.c.l.b16 %v1731
    %v1864 = vunpack.c.l.b16 %v1732
    %v1865 = vunpack.c.l.b16 %v1733
    %v1866 = vunpack.c.l.b16 %v1734
    %v1867 = vunpack.c.l.b16 %v1735
    %v1868 = vunpack.c.l.b16 %v1736
    %v1869 = vunpack.c.l.b16 %v1737
    %v1870 = vunpack.c.l.b16 %v1738
    %v1871 = vunpack.c.l.b16 %v1739
    %v1872 = vunpack.c.l.b16 %v1740
    %v1873 = vunpack.c.l.b16 %v1741
    %v1874 = vunpack.c.l.b16 %v1742
    %v1875 = vunpack.c.l.b16 %v1743
    %v1876 = vunpack.c.l.b16 %v1744
    %v1877 = vunpack.c.l.b16 %v1745
    %v1878 = vunpack.c.l.b16 %v1746
    %v1879 = vunpack.c.l.b16 %v1747
    %v1880 = vunpack.c.l.b16 %v1748
    %v1881 = vunpack.c.l.b16 %v1749
    %v1882 = vunpack.c.l.b16 %v1750
    %v1883 = vunpack.c.l.b16 %v1751
    %v1884 = vpack.c.b16 %v1821, %v1820
    %v1885 = vpack.c.b16 %v1823, %v1822
    %v1886 = vpack.c.b16 %v1825, %v1824
    %v1887 = vpack.c.b16 %v1827, %v1826
    %v1888 = vpack.c.b16 %v1829, %v1828
    %v1889 = vpack.c.b16 %v1831, %v1830
    %v1890 = vpack.c.b16 %v1833, %v1832
    %v1891 = vpack.c.b16 %v1835, %v1834
    %v1892 = vpack.c.b16 %v1837, %v1836
    %v1893 = vpack.c.b16 %v1839, %v1838
    %v1894 = vpack.c.b16 %v1841, %v1840
    %v1895 = vpack.c.b16 %v1843, %v1842
    %v1896 = vpack.c.b16 %v1845, %v1844
    %v1897 = vpack.c.b16 %v1847, %v1846
    %v1898 = vpack.c.b16 %v1849, %v1848
    %v1899 = vpack.c.b16 %v1851, %v1850
    %v1900 = vpack.c.b16 %v1853, %v1852
    %v1901 = vpack.c.b16 %v1855, %v1854
    %v1902 = vpack.c.b16 %v1857, %v1856
    %v1903 = vpack.c.b16 %v1859, %v1858
    %v1904 = vpack.c.b16 %v1861, %v1860
    %v1905 = vpack.c.b16 %v1863, %v1862
    %v1906 = vpack.c.b16 %v1865, %v1864
    %v1907 = vpack.c.b16 %v1867, %v1866
    %v1908 = vpack.c.b16 %v1869, %v1868
    %v1909 = vpack.c.b16 %v1871, %v1870
    %v1910 = vpack.c.b16 %v1873, %v1872
    %v1911 = vpack.c.b16 %v1875, %v1874
    %v1912 = vpack.c.b16 %v1877, %v1876
    %v1913 = vpack.c.b16 %v1879, %v1878
    %v1914 = vpack.c.b16 %v1881, %v1880
    %v1915 = vpack.c.b16 %v1883, %v1882
    %1948 = vmatpush.bf16.msra.mxu0 %v1891
    %1949 = vmatpush.bf16.msra.mxu0 %v1890
    %1950 = vmatpush.bf16.msra.mxu0 %v1889
    %1951 = vmatpush.bf16.msra.mxu0 %v1888
    %1952 = vmatpush.bf16.msra.mxu0 %v1887
    %1953 = vmatpush.bf16.msra.mxu0 %v1886
    %1954 = vmatpush.bf16.msra.mxu0 %v1885
    %1955 = vmatpush.bf16.msra.mxu0 %v1884
    %1956 = vmatmul.bf16.gmra.mxu0 %v1672
    %v1957 = vpop.f32.mrf.mxu0
    %v1958 = vadd.f32 %v1754, %v1957
    %v1959 = vpop.f32.mrf.mxu0
    %v1960 = vadd.f32 %v1754, %v1959
    %1961 = vmatmul.bf16.gmra.mxu0 %v1676
    %v1962 = vpop.f32.mrf.mxu0
    %v1963 = vadd.f32 %v1754, %v1962
    %v1964 = vpop.f32.mrf.mxu0
    %v1965 = vadd.f32 %v1754, %v1964
    %1966 = vmatmul.bf16.gmra.mxu0 %v1680
    %v1967 = vpop.f32.mrf.mxu0
    %v1968 = vadd.f32 %v1754, %v1967
    %v1969 = vpop.f32.mrf.mxu0
    %v1970 = vadd.f32 %v1754, %v1969
    %1971 = vmatmul.bf16.gmra.mxu0 %v1684
    %v1972 = vpop.f32.mrf.mxu0
    %v1973 = vadd.f32 %v1754, %v1972
    %v1974 = vpop.f32.mrf.mxu0
    %v1975 = vadd.f32 %v1754, %v1974
    %1976 = vdwg.mxu0
    %1977 = vmatpush.bf16.msra.mxu0 %v1899
    %1978 = vmatpush.bf16.msra.mxu0 %v1898
    %1979 = vmatpush.bf16.msra.mxu0 %v1897
    %1980 = vmatpush.bf16.msra.mxu0 %v1896
    %1981 = vmatpush.bf16.msra.mxu0 %v1895
    %1982 = vmatpush.bf16.msra.mxu0 %v1894
    %1983 = vmatpush.bf16.msra.mxu0 %v1893
    %1984 = vmatpush.bf16.msra.mxu0 %v1892
    %1985 = vmatmul.bf16.gmra.mxu0 %v1673
    %v1986 = vpop.f32.mrf.mxu0
    %v1987 = vadd.f32 %v1958, %v1986
    %v1988 = vpop.f32.mrf.mxu0
    %v1989 = vadd.f32 %v1960, %v1988
    %1990 = vmatmul.bf16.gmra.mxu0 %v1677
    %v1991 = vpop.f32.mrf.mxu0
    %v1992 = vadd.f32 %v1963, %v1991
    %v1993 = vpop.f32.mrf.mxu0
    %v1994 = vadd.f32 %v1965, %v1993
    %1995 = vmatmul.bf16.gmra.mxu0 %v1681
    %v1996 = vpop.f32.mrf.mxu0
    %v1997 = vadd.f32 %v1968, %v1996
    %v1998 = vpop.f32.mrf.mxu0
    %v1999 = vadd.f32 %v1970, %v1998
    %2000 = vmatmul.bf16.gmra.mxu0 %v1685
    %v2001 = vpop.f32.mrf.mxu0
    %v2002 = vadd.f32 %v1973, %v2001
    %v2003 = vpop.f32.mrf.mxu0
    %v2004 = vadd.f32 %v1975, %v2003
    %2005 = vdwg.mxu0
    %2006 = vmatpush.bf16.msra.mxu0 %v1907
    %2007 = vmatpush.bf16.msra.mxu0 %v1906
    %2008 = vmatpush.bf16.msra.mxu0 %v1905
    %2009 = vmatpush.bf16.msra.mxu0 %v1904
    %2010 = vmatpush.bf16.msra.mxu0 %v1903
    %2011 = vmatpush.bf16.msra.mxu0 %v1902
    %2012 = vmatpush.bf16.msra.mxu0 %v1901
    %2013 = vmatpush.bf16.msra.mxu0 %v1900
    %2014 = vmatmul.bf16.gmra.mxu0 %v1674
    %v2015 = vpop.f32.mrf.mxu0
    %v2016 = vadd.f32 %v1987, %v2015
    %v2017 = vpop.f32.mrf.mxu0
    %v2018 = vadd.f32 %v1989, %v2017
    %2019 = vmatmul.bf16.gmra.mxu0 %v1678
    %v2020 = vpop.f32.mrf.mxu0
    %v2021 = vadd.f32 %v1992, %v2020
    %v2022 = vpop.f32.mrf.mxu0
    %v2023 = vadd.f32 %v1994, %v2022
    %2024 = vmatmul.bf16.gmra.mxu0 %v1682
    %v2025 = vpop.f32.mrf.mxu0
    %v2026 = vadd.f32 %v1997, %v2025
    %v2027 = vpop.f32.mrf.mxu0
    %v2028 = vadd.f32 %v1999, %v2027
    %2029 = vmatmul.bf16.gmra.mxu0 %v1686
    %v2030 = vpop.f32.mrf.mxu0
    %v2031 = vadd.f32 %v2002, %v2030
    %v2032 = vpop.f32.mrf.mxu0
    %v2033 = vadd.f32 %v2004, %v2032
    %2034 = vdwg.mxu0
    %2035 = vmatpush.bf16.msra.mxu0 %v1915
    %2036 = vmatpush.bf16.msra.mxu0 %v1914
    %2037 = vmatpush.bf16.msra.mxu0 %v1913
    %2038 = vmatpush.bf16.msra.mxu0 %v1912
    %2039 = vmatpush.bf16.msra.mxu0 %v1911
    %2040 = vmatpush.bf16.msra.mxu0 %v1910
    %2041 = vmatpush.bf16.msra.mxu0 %v1909
    %2042 = vmatpush.bf16.msra.mxu0 %v1908
    %2043 = vmatmul.bf16.gmra.mxu0 %v1675
    %v2044 = vpop.f32.mrf.mxu0
    %v2045 = vadd.f32 %v2016, %v2044
    %v2046 = vpop.f32.mrf.mxu0
    %v2047 = vadd.f32 %v2018, %v2046
    %2048 = vmatmul.bf16.gmra.mxu0 %v1679
    %v2049 = vpop.f32.mrf.mxu0
    %v2050 = vadd.f32 %v2021, %v2049
    %v2051 = vpop.f32.mrf.mxu0
    %v2052 = vadd.f32 %v2023, %v2051
    %2053 = vmatmul.bf16.gmra.mxu0 %v1683
    %v2054 = vpop.f32.mrf.mxu0
    %v2055 = vadd.f32 %v2026, %v2054
    %v2056 = vpop.f32.mrf.mxu0
    %v2057 = vadd.f32 %v2028, %v2056
    %2058 = vmatmul.bf16.gmra.mxu0 %v1687
    %v2059 = vpop.f32.mrf.mxu0
    %v2060 = vadd.f32 %v2031, %v2059
    %v2061 = vpop.f32.mrf.mxu0
    %v2062 = vadd.f32 %v2033, %v2061
    %2063 = vdwg.mxu0
    %v2064 = vmax.f32 %v2045, 0.0
    %v2065 = vmax.f32 %v2047, 0.0
    %v2066 = vmax.f32 %v2050, 0.0
    %v2067 = vmax.f32 %v2052, 0.0
    %v2068 = vmax.f32 %v2055, 0.0
    %v2069 = vmax.f32 %v2057, 0.0
    %v2070 = vmax.f32 %v2060, 0.0
    %v2071 = vmax.f32 %v2062, 0.0
    %v2074 = vrot.slane %v2064, 1
    %v2075 = vrot.slane %v2068, 1
    %v2078 = vmax.f32 %v2064, %v2074
    %v2079 = vmax.f32 %v2068, %v2075
    %v2080 = vrot.slane %v2064, 2
    %v2081 = vrot.slane %v2068, 2
    %v2084 = vmax.f32 %v2078, %v2080
    %v2085 = vmax.f32 %v2079, %v2081
    %v2086 = vrot.slane %v2064, 3
    %v2087 = vrot.slane %v2068, 3
    %v2090 = vmax.f32 %v2084, %v2086
    %v2091 = vmax.f32 %v2085, %v2087
    %v2092 = vrot.slane %v2064, 4
    %v2093 = vrot.slane %v2068, 4
    %v2096 = vmax.f32 %v2090, %v2092
    %v2097 = vmax.f32 %v2091, %v2093
    %v2100 = vrot.slane %v2065, 3
    %v2101 = vrot.slane %v2069, 3
    %v2104 = vmax.f32 %v2084, %v2100
    %v2105 = vmax.f32 %v2085, %v2101
    %v2106 = vrot.slane %v2065, 4
    %v2107 = vrot.slane %v2069, 4
    %v2110 = vmax.f32 %v2104, %v2106
    %v2111 = vmax.f32 %v2105, %v2107
    %v2112 = vrot.slane %v2065, 1
    %v2113 = vrot.slane %v2069, 1
    %v2116 = vmax.f32 %v2065, %v2112
    %v2117 = vmax.f32 %v2069, %v2113
    %v2118 = vrot.slane %v2065, 2
    %v2119 = vrot.slane %v2069, 2
    %v2122 = vmax.f32 %v2116, %v2118
    %v2123 = vmax.f32 %v2117, %v2119
    %v2124 = vmax.f32 %v2122, %v2100
    %v2125 = vmax.f32 %v2123, %v2101
    %v2126 = vmax.f32 %v2124, %v2106
    %v2127 = vmax.f32 %v2125, %v2107
    %v2130 = vrot.slane %v2066, 1
    %v2131 = vrot.slane %v2070, 1
    %v2134 = vmax.f32 %v2065, %v2130
    %v2135 = vmax.f32 %v2069, %v2131
    %v2136 = vrot.slane %v2066, 2
    %v2137 = vrot.slane %v2070, 2
    %v2140 = vmax.f32 %v2134, %v2136
    %v2141 = vmax.f32 %v2135, %v2137
    %v2142 = vrot.slane %v2066, 3
    %v2143 = vrot.slane %v2070, 3
    %v2146 = vmax.f32 %v2140, %v2142
    %v2147 = vmax.f32 %v2141, %v2143
    %v2148 = vrot.slane %v2066, 4
    %v2149 = vrot.slane %v2070, 4
    %v2152 = vmax.f32 %v2146, %v2148
    %v2153 = vmax.f32 %v2147, %v2149
    %v2154 = vmax.f32 %v2066, %v2130
    %v2155 = vmax.f32 %v2070, %v2131
    %v2156 = vmax.f32 %v2154, %v2136
    %v2157 = vmax.f32 %v2155, %v2137
    %v2158 = vmax.f32 %v2156, %v2142
    %v2159 = vmax.f32 %v2157, %v2143
    %v2162 = vrot.slane %v2067, 4
    %v2163 = vrot.slane %v2071, 4
    %v2166 = vmax.f32 %v2158, %v2162
    %v2167 = vmax.f32 %v2159, %v2163
    %v2170 = vrot.slane %v2097, 7
    %vm2171 = vcmask 1041409
    %v2172 = vsel %vm2171, %v2170, %v2096
    %v2176 = vrot.slane %v2110, 3
    %v2177 = vrot.slane %v2111, 2
    %vm2178 = vcmask 1043459
    %v2179 = vsel %vm2178, %v2177, %v2176
    %v2183 = vrot.slane %v2126, 6
    %v2184 = vrot.slane %v2127, 5
    %vm2185 = vcmask 1045509
    %v2186 = vsel %vm2185, %v2184, %v2183
    %v2190 = vrot.slane %v2152, 1
    %vm2191 = vcmask 1047559
    %v2192 = vsel %vm2191, %v2153, %v2190
    %v2196 = vrot.slane %v2166, 4
    %v2197 = vrot.slane %v2167, 3
    %v2198 = vsel %vm2171, %v2197, %v2196
    %vm2200 = vcmask 1041408
    %v2201 = vsel %vm2200, %v2172, %v2179
    %vm2202 = vcmask 1043456
    %v2203 = vsel %vm2202, %v2201, %v2186
    %vm2204 = vcmask 1045504
    %v2205 = vsel %vm2204, %v2203, %v2192
    %s2206 = smul.u32 4, 16
    %s2207 = smul.u32 %s2206, 4
    %s2208 = sshll.u32 %s2207, 4
    %2209 = dma.done [#allocation5], %s2208
    %v2210 = vpack.c.bf16 %v2198, %v2205
    %v2211 = vld [vmem:[#allocation2] sm:$0xff]
    %v2212 = vld [vmem:[#allocation2 + $0x8] sm:$0xff]
    %v2213 = vld [vmem:[#allocation2 + $0x10] sm:$0xff]
    %v2214 = vld [vmem:[#allocation2 + $0x18] sm:$0xff]
    %v2215 = vld [vmem:[#allocation2 + $0x20] sm:$0xff]
    %v2216 = vld [vmem:[#allocation2 + $0x28] sm:$0xff]
    %v2217 = vld [vmem:[#allocation2 + $0x30] sm:$0xff]
    %v2218 = vld [vmem:[#allocation2 + $0x38] sm:$0xff]
    %v2219 = vld [vmem:[#allocation2 + $0x40] sm:$0xff]
    %v2220 = vld [vmem:[#allocation2 + $0x48] sm:$0xff]
    %v2221 = vld [vmem:[#allocation2 + $0x50] sm:$0xff]
    %v2222 = vld [vmem:[#allocation2 + $0x58] sm:$0xff]
    %v2223 = vld [vmem:[#allocation2 + $0x60] sm:$0xff]
    %v2224 = vld [vmem:[#allocation2 + $0x68] sm:$0xff]
    %v2225 = vld [vmem:[#allocation2 + $0x70] sm:$0xff]
    %v2226 = vld [vmem:[#allocation2 + $0x78] sm:$0xff]
    %v2227 = vld [vmem:[#allocation2 + $0x80] sm:$0xff]
    %v2228 = vld [vmem:[#allocation2 + $0x88] sm:$0xff]
    %v2229 = vld [vmem:[#allocation2 + $0x90] sm:$0xff]
    %v2230 = vld [vmem:[#allocation2 + $0x98] sm:$0xff]
    %v2231 = vld [vmem:[#allocation2 + $0xa0] sm:$0xff]
    %v2232 = vld [vmem:[#allocation2 + $0xa8] sm:$0xff]
    %v2233 = vld [vmem:[#allocation2 + $0xb0] sm:$0xff]
    %v2234 = vld [vmem:[#allocation2 + $0xb8] sm:$0xff]
    %v2235 = vld [vmem:[#allocation2 + $0xc0] sm:$0xff]
    %v2236 = vld [vmem:[#allocation2 + $0xc8] sm:$0xff]
    %v2237 = vld [vmem:[#allocation2 + $0xd0] sm:$0xff]
    %v2238 = vld [vmem:[#allocation2 + $0xd8] sm:$0xff]
    %v2239 = vld [vmem:[#allocation2 + $0xe0] sm:$0xff]
    %v2240 = vld [vmem:[#allocation2 + $0xe8] sm:$0xff]
    %v2241 = vld [vmem:[#allocation2 + $0xf0] sm:$0xff]
    %v2242 = vld [vmem:[#allocation2 + $0xf8] sm:$0xff]
    %v2243 = vld [vmem:[%s3] sm:$0xf]
    %v2245 = vperm.slane %v2243, 0
    %v2246 = vperm.slane %v2243, 1
    %v2247 = vperm.slane %v2243, 2
    %v2248 = vperm.slane %v2243, 3
    %v2285 = vunpack.c.l.b16 %v2211
    %v2286 = vunpack.c.h.b16 %v2211
    %v2287 = vunpack.c.l.b16 %v2212
    %v2288 = vunpack.c.h.b16 %v2212
    %v2289 = vunpack.c.l.b16 %v2213
    %v2290 = vunpack.c.h.b16 %v2213
    %v2291 = vunpack.c.l.b16 %v2214
    %v2292 = vunpack.c.h.b16 %v2214
    %v2293 = vunpack.c.l.b16 %v2215
    %v2294 = vunpack.c.h.b16 %v2215
    %v2295 = vunpack.c.l.b16 %v2216
    %v2296 = vunpack.c.h.b16 %v2216
    %v2297 = vunpack.c.l.b16 %v2217
    %v2298 = vunpack.c.h.b16 %v2217
    %v2299 = vunpack.c.l.b16 %v2218
    %v2300 = vunpack.c.h.b16 %v2218
    %v2301 = vunpack.c.l.b16 %v2219
    %v2302 = vunpack.c.h.b16 %v2219
    %v2303 = vunpack.c.l.b16 %v2220
    %v2304 = vunpack.c.h.b16 %v2220
    %v2305 = vunpack.c.l.b16 %v2221
    %v2306 = vunpack.c.h.b16 %v2221
    %v2307 = vunpack.c.l.b16 %v2222
    %v2308 = vunpack.c.h.b16 %v2222
    %v2309 = vunpack.c.l.b16 %v2223
    %v2310 = vunpack.c.h.b16 %v2223
    %v2311 = vunpack.c.l.b16 %v2224
    %v2312 = vunpack.c.h.b16 %v2224
    %v2313 = vunpack.c.l.b16 %v2225
    %v2314 = vunpack.c.h.b16 %v2225
    %v2315 = vunpack.c.l.b16 %v2226
    %v2316 = vunpack.c.h.b16 %v2226
    %v2317 = vunpack.c.l.b16 %v2227
    %v2318 = vunpack.c.h.b16 %v2227
    %v2319 = vunpack.c.l.b16 %v2228
    %v2320 = vunpack.c.h.b16 %v2228
    %v2321 = vunpack.c.l.b16 %v2229
    %v2322 = vunpack.c.h.b16 %v2229
    %v2323 = vunpack.c.l.b16 %v2230
    %v2324 = vunpack.c.h.b16 %v2230
    %v2325 = vunpack.c.l.b16 %v2231
    %v2326 = vunpack.c.h.b16 %v2231
    %v2327 = vunpack.c.l.b16 %v2232
    %v2328 = vunpack.c.h.b16 %v2232
    %v2329 = vunpack.c.l.b16 %v2233
    %v2330 = vunpack.c.h.b16 %v2233
    %v2331 = vunpack.c.l.b16 %v2234
    %v2332 = vunpack.c.h.b16 %v2234
    %v2333 = vunpack.c.l.b16 %v2235
    %v2334 = vunpack.c.h.b16 %v2235
    %v2335 = vunpack.c.l.b16 %v2236
    %v2336 = vunpack.c.h.b16 %v2236
    %v2337 = vunpack.c.l.b16 %v2237
    %v2338 = vunpack.c.h.b16 %v2237
    %v2339 = vunpack.c.l.b16 %v2238
    %v2340 = vunpack.c.h.b16 %v2238
    %v2341 = vunpack.c.l.b16 %v2239
    %v2342 = vunpack.c.h.b16 %v2239
    %v2343 = vunpack.c.l.b16 %v2240
    %v2344 = vunpack.c.h.b16 %v2240
    %v2345 = vunpack.c.l.b16 %v2241
    %v2346 = vunpack.c.h.b16 %v2241
    %v2347 = vunpack.c.l.b16 %v2242
    %v2348 = vunpack.c.h.b16 %v2242
    %v2349 = vpack.c.b16 %v2289, %v2285
    %v2350 = vpack.c.b16 %v2290, %v2286
    %v2351 = vpack.c.b16 %v2291, %v2287
    %v2352 = vpack.c.b16 %v2292, %v2288
    %v2353 = vpack.c.b16 %v2297, %v2293
    %v2354 = vpack.c.b16 %v2298, %v2294
    %v2355 = vpack.c.b16 %v2299, %v2295
    %v2356 = vpack.c.b16 %v2300, %v2296
    %v2357 = vpack.c.b16 %v2305, %v2301
    %v2358 = vpack.c.b16 %v2306, %v2302
    %v2359 = vpack.c.b16 %v2307, %v2303
    %v2360 = vpack.c.b16 %v2308, %v2304
    %v2361 = vpack.c.b16 %v2313, %v2309
    %v2362 = vpack.c.b16 %v2314, %v2310
    %v2363 = vpack.c.b16 %v2315, %v2311
    %v2364 = vpack.c.b16 %v2316, %v2312
    %v2365 = vpack.c.b16 %v2321, %v2317
    %v2366 = vpack.c.b16 %v2322, %v2318
    %v2367 = vpack.c.b16 %v2323, %v2319
    %v2368 = vpack.c.b16 %v2324, %v2320
    %v2369 = vpack.c.b16 %v2329, %v2325
    %v2370 = vpack.c.b16 %v2330, %v2326
    %v2371 = vpack.c.b16 %v2331, %v2327
    %v2372 = vpack.c.b16 %v2332, %v2328
    %v2373 = vpack.c.b16 %v2337, %v2333
    %v2374 = vpack.c.b16 %v2338, %v2334
    %v2375 = vpack.c.b16 %v2339, %v2335
    %v2376 = vpack.c.b16 %v2340, %v2336
    %v2377 = vpack.c.b16 %v2345, %v2341
    %v2378 = vpack.c.b16 %v2346, %v2342
    %v2379 = vpack.c.b16 %v2347, %v2343
    %v2380 = vpack.c.b16 %v2348, %v2344
    %2413 = vmatpush.bf16.msra.mxu0 %v2377
    %2414 = vmatpush.bf16.msra.mxu0 %v2373
    %2415 = vmatpush.bf16.msra.mxu0 %v2369
    %2416 = vmatpush.bf16.msra.mxu0 %v2365
    %2417 = vmatpush.bf16.msra.mxu0 %v2361
    %2418 = vmatpush.bf16.msra.mxu0 %v2357
    %2419 = vmatpush.bf16.msra.mxu0 %v2353
    %2420 = vmatpush.bf16.msra.mxu0 %v2349
    %2421 = vmatmul.bf16.gmra.mxu0 %v2210
    %v2422 = vpop.f32.mrf.mxu0
    %v2423 = vadd.f32 %v2245, %v2422
    %v2424 = vpop.f32.mrf.mxu0
    %v2425 = vadd.f32 %v2245, %v2424
    %2426 = vdwg.mxu0
    %2427 = vmatpush.bf16.msra.mxu0 %v2378
    %2428 = vmatpush.bf16.msra.mxu0 %v2374
    %2429 = vmatpush.bf16.msra.mxu0 %v2370
    %2430 = vmatpush.bf16.msra.mxu0 %v2366
    %2431 = vmatpush.bf16.msra.mxu0 %v2362
    %2432 = vmatpush.bf16.msra.mxu0 %v2358
    %2433 = vmatpush.bf16.msra.mxu0 %v2354
    %2434 = vmatpush.bf16.msra.mxu0 %v2350
    %2435 = vmatmul.bf16.gmra.mxu0 %v2210
    %v2436 = vpop.f32.mrf.mxu0
    %v2437 = vadd.f32 %v2246, %v2436
    %v2438 = vpop.f32.mrf.mxu0
    %v2439 = vadd.f32 %v2246, %v2438
    %2440 = vdwg.mxu0
    %2441 = vmatpush.bf16.msra.mxu0 %v2379
    %2442 = vmatpush.bf16.msra.mxu0 %v2375
    %2443 = vmatpush.bf16.msra.mxu0 %v2371
    %2444 = vmatpush.bf16.msra.mxu0 %v2367
    %2445 = vmatpush.bf16.msra.mxu0 %v2363
    %2446 = vmatpush.bf16.msra.mxu0 %v2359
    %2447 = vmatpush.bf16.msra.mxu0 %v2355
    %2448 = vmatpush.bf16.msra.mxu0 %v2351
    %2449 = vmatmul.bf16.gmra.mxu0 %v2210
    %v2450 = vpop.f32.mrf.mxu0
    %v2451 = vadd.f32 %v2247, %v2450
    %v2452 = vpop.f32.mrf.mxu0
    %v2453 = vadd.f32 %v2247, %v2452
    %2454 = vdwg.mxu0
    %2455 = vmatpush.bf16.msra.mxu0 %v2380
    %2456 = vmatpush.bf16.msra.mxu0 %v2376
    %2457 = vmatpush.bf16.msra.mxu0 %v2372
    %2458 = vmatpush.bf16.msra.mxu0 %v2368
    %2459 = vmatpush.bf16.msra.mxu0 %v2364
    %2460 = vmatpush.bf16.msra.mxu0 %v2360
    %2461 = vmatpush.bf16.msra.mxu0 %v2356
    %2462 = vmatpush.bf16.msra.mxu0 %v2352
    %2463 = vmatmul.bf16.gmra.mxu0 %v2210
    %v2464 = vpop.f32.mrf.mxu0
    %v2465 = vadd.f32 %v2248, %v2464
    %v2466 = vpop.f32.mrf.mxu0
    %v2467 = vadd.f32 %v2248, %v2466
    %2468 = vdwg.mxu0
    %s2469 = sshll.u32 %s2207, 4
    %2470 = dma.done %s105, %s2469
    %v2471 = vld [vmem:[#allocation3] sm:$0xff]
    %v2472 = vld [vmem:[#allocation3 + $0x8] sm:$0xff]
    %v2473 = vld [vmem:[#allocation3 + $0x10] sm:$0xff]
    %v2474 = vld [vmem:[#allocation3 + $0x18] sm:$0xff]
    %v2475 = vld [vmem:[#allocation3 + $0x20] sm:$0xff]
    %v2476 = vld [vmem:[#allocation3 + $0x28] sm:$0xff]
    %v2477 = vld [vmem:[#allocation3 + $0x30] sm:$0xff]
    %v2478 = vld [vmem:[#allocation3 + $0x38] sm:$0xff]
    %v2479 = vld [vmem:[#allocation3 + $0x40] sm:$0xff]
    %v2480 = vld [vmem:[#allocation3 + $0x48] sm:$0xff]
    %v2481 = vld [vmem:[#allocation3 + $0x50] sm:$0xff]
    %v2482 = vld [vmem:[#allocation3 + $0x58] sm:$0xff]
    %v2483 = vld [vmem:[#allocation3 + $0x60] sm:$0xff]
    %v2484 = vld [vmem:[#allocation3 + $0x68] sm:$0xff]
    %v2485 = vld [vmem:[#allocation3 + $0x70] sm:$0xff]
    %v2486 = vld [vmem:[#allocation3 + $0x78] sm:$0xff]
    %v2487 = vld [vmem:[#allocation3 + $0x80] sm:$0xff]
    %v2488 = vld [vmem:[#allocation3 + $0x88] sm:$0xff]
    %v2489 = vld [vmem:[#allocation3 + $0x90] sm:$0xff]
    %v2490 = vld [vmem:[#allocation3 + $0x98] sm:$0xff]
    %v2491 = vld [vmem:[#allocation3 + $0xa0] sm:$0xff]
    %v2492 = vld [vmem:[#allocation3 + $0xa8] sm:$0xff]
    %v2493 = vld [vmem:[#allocation3 + $0xb0] sm:$0xff]
    %v2494 = vld [vmem:[#allocation3 + $0xb8] sm:$0xff]
    %v2495 = vld [vmem:[#allocation3 + $0xc0] sm:$0xff]
    %v2496 = vld [vmem:[#allocation3 + $0xc8] sm:$0xff]
    %v2497 = vld [vmem:[#allocation3 + $0xd0] sm:$0xff]
    %v2498 = vld [vmem:[#allocation3 + $0xd8] sm:$0xff]
    %v2499 = vld [vmem:[#allocation3 + $0xe0] sm:$0xff]
    %v2500 = vld [vmem:[#allocation3 + $0xe8] sm:$0xff]
    %v2501 = vld [vmem:[#allocation3 + $0xf0] sm:$0xff]
    %v2502 = vld [vmem:[#allocation3 + $0xf8] sm:$0xff]
    %v2535 = vunpack.c.l.b16 %v2471
    %v2536 = vunpack.c.h.b16 %v2471
    %v2537 = vunpack.c.l.b16 %v2472
    %v2538 = vunpack.c.h.b16 %v2472
    %v2539 = vunpack.c.l.b16 %v2473
    %v2540 = vunpack.c.h.b16 %v2473
    %v2541 = vunpack.c.l.b16 %v2474
    %v2542 = vunpack.c.h.b16 %v2474
    %v2543 = vunpack.c.l.b16 %v2475
    %v2544 = vunpack.c.h.b16 %v2475
    %v2545 = vunpack.c.l.b16 %v2476
    %v2546 = vunpack.c.h.b16 %v2476
    %v2547 = vunpack.c.l.b16 %v2477
    %v2548 = vunpack.c.h.b16 %v2477
    %v2549 = vunpack.c.l.b16 %v2478
    %v2550 = vunpack.c.h.b16 %v2478
    %v2551 = vunpack.c.l.b16 %v2479
    %v2552 = vunpack.c.h.b16 %v2479
    %v2553 = vunpack.c.l.b16 %v2480
    %v2554 = vunpack.c.h.b16 %v2480
    %v2555 = vunpack.c.l.b16 %v2481
    %v2556 = vunpack.c.h.b16 %v2481
    %v2557 = vunpack.c.l.b16 %v2482
    %v2558 = vunpack.c.h.b16 %v2482
    %v2559 = vunpack.c.l.b16 %v2483
    %v2560 = vunpack.c.h.b16 %v2483
    %v2561 = vunpack.c.l.b16 %v2484
    %v2562 = vunpack.c.h.b16 %v2484
    %v2563 = vunpack.c.l.b16 %v2485
    %v2564 = vunpack.c.h.b16 %v2485
    %v2565 = vunpack.c.l.b16 %v2486
    %v2566 = vunpack.c.h.b16 %v2486
    %v2567 = vunpack.c.l.b16 %v2487
    %v2568 = vunpack.c.h.b16 %v2487
    %v2569 = vunpack.c.l.b16 %v2488
    %v2570 = vunpack.c.h.b16 %v2488
    %v2571 = vunpack.c.l.b16 %v2489
    %v2572 = vunpack.c.h.b16 %v2489
    %v2573 = vunpack.c.l.b16 %v2490
    %v2574 = vunpack.c.h.b16 %v2490
    %v2575 = vunpack.c.l.b16 %v2491
    %v2576 = vunpack.c.h.b16 %v2491
    %v2577 = vunpack.c.l.b16 %v2492
    %v2578 = vunpack.c.h.b16 %v2492
    %v2579 = vunpack.c.l.b16 %v2493
    %v2580 = vunpack.c.h.b16 %v2493
    %v2581 = vunpack.c.l.b16 %v2494
    %v2582 = vunpack.c.h.b16 %v2494
    %v2583 = vunpack.c.l.b16 %v2495
    %v2584 = vunpack.c.h.b16 %v2495
    %v2585 = vunpack.c.l.b16 %v2496
    %v2586 = vunpack.c.h.b16 %v2496
    %v2587 = vunpack.c.l.b16 %v2497
    %v2588 = vunpack.c.h.b16 %v2497
    %v2589 = vunpack.c.l.b16 %v2498
    %v2590 = vunpack.c.h.b16 %v2498
    %v2591 = vunpack.c.l.b16 %v2499
    %v2592 = vunpack.c.h.b16 %v2499
    %v2593 = vunpack.c.l.b16 %v2500
    %v2594 = vunpack.c.h.b16 %v2500
    %v2595 = vunpack.c.l.b16 %v2501
    %v2596 = vunpack.c.h.b16 %v2501
    %v2597 = vunpack.c.l.b16 %v2502
    %v2598 = vunpack.c.h.b16 %v2502
    %v2599 = vpack.c.b16 %v2539, %v2535
    %v2600 = vpack.c.b16 %v2540, %v2536
    %v2601 = vpack.c.b16 %v2541, %v2537
    %v2602 = vpack.c.b16 %v2542, %v2538
    %v2603 = vpack.c.b16 %v2547, %v2543
    %v2604 = vpack.c.b16 %v2548, %v2544
    %v2605 = vpack.c.b16 %v2549, %v2545
    %v2606 = vpack.c.b16 %v2550, %v2546
    %v2607 = vpack.c.b16 %v2555, %v2551
    %v2608 = vpack.c.b16 %v2556, %v2552
    %v2609 = vpack.c.b16 %v2557, %v2553
    %v2610 = vpack.c.b16 %v2558, %v2554
    %v2611 = vpack.c.b16 %v2563, %v2559
    %v2612 = vpack.c.b16 %v2564, %v2560
    %v2613 = vpack.c.b16 %v2565, %v2561
    %v2614 = vpack.c.b16 %v2566, %v2562
    %v2615 = vpack.c.b16 %v2571, %v2567
    %v2616 = vpack.c.b16 %v2572, %v2568
    %v2617 = vpack.c.b16 %v2573, %v2569
    %v2618 = vpack.c.b16 %v2574, %v2570
    %v2619 = vpack.c.b16 %v2579, %v2575
    %v2620 = vpack.c.b16 %v2580, %v2576
    %v2621 = vpack.c.b16 %v2581, %v2577
    %v2622 = vpack.c.b16 %v2582, %v2578
    %v2623 = vpack.c.b16 %v2587, %v2583
    %v2624 = vpack.c.b16 %v2588, %v2584
    %v2625 = vpack.c.b16 %v2589, %v2585
    %v2626 = vpack.c.b16 %v2590, %v2586
    %v2627 = vpack.c.b16 %v2595, %v2591
    %v2628 = vpack.c.b16 %v2596, %v2592
    %v2629 = vpack.c.b16 %v2597, %v2593
    %v2630 = vpack.c.b16 %v2598, %v2594
    %2663 = vmatpush.bf16.msra.mxu0 %v2627
    %2664 = vmatpush.bf16.msra.mxu0 %v2623
    %2665 = vmatpush.bf16.msra.mxu0 %v2619
    %2666 = vmatpush.bf16.msra.mxu0 %v2615
    %2667 = vmatpush.bf16.msra.mxu0 %v2611
    %2668 = vmatpush.bf16.msra.mxu0 %v2607
    %2669 = vmatpush.bf16.msra.mxu0 %v2603
    %2670 = vmatpush.bf16.msra.mxu0 %v2599
    %2671 = vmatmul.bf16.gmra.mxu0 0
    %v2672 = vpop.f32.mrf.mxu0
    %v2673 = vadd.f32 0.0, %v2672
    %v2674 = vpop.f32.mrf.mxu0
    %2675 = vdwg.mxu0
    %2676 = vmatpush.bf16.msra.mxu0 %v2628
    %2677 = vmatpush.bf16.msra.mxu0 %v2624
    %2678 = vmatpush.bf16.msra.mxu0 %v2620
    %2679 = vmatpush.bf16.msra.mxu0 %v2616
    %2680 = vmatpush.bf16.msra.mxu0 %v2612
    %2681 = vmatpush.bf16.msra.mxu0 %v2608
    %2682 = vmatpush.bf16.msra.mxu0 %v2604
    %2683 = vmatpush.bf16.msra.mxu0 %v2600
    %2684 = vmatmul.bf16.gmra.mxu0 0
    %v2685 = vpop.f32.mrf.mxu0
    %v2686 = vadd.f32 0.0, %v2685
    %v2687 = vpop.f32.mrf.mxu0
    %2688 = vdwg.mxu0
    %2689 = vmatpush.bf16.msra.mxu0 %v2629
    %2690 = vmatpush.bf16.msra.mxu0 %v2625
    %2691 = vmatpush.bf16.msra.mxu0 %v2621
    %2692 = vmatpush.bf16.msra.mxu0 %v2617
    %2693 = vmatpush.bf16.msra.mxu0 %v2613
    %2694 = vmatpush.bf16.msra.mxu0 %v2609
    %2695 = vmatpush.bf16.msra.mxu0 %v2605
    %2696 = vmatpush.bf16.msra.mxu0 %v2601
    %2697 = vmatmul.bf16.gmra.mxu0 0
    %v2698 = vpop.f32.mrf.mxu0
    %v2699 = vadd.f32 0.0, %v2698
    %v2700 = vpop.f32.mrf.mxu0
    %2701 = vdwg.mxu0
    %2702 = vmatpush.bf16.msra.mxu0 %v2630
    %2703 = vmatpush.bf16.msra.mxu0 %v2626
    %2704 = vmatpush.bf16.msra.mxu0 %v2622
    %2705 = vmatpush.bf16.msra.mxu0 %v2618
    %2706 = vmatpush.bf16.msra.mxu0 %v2614
    %2707 = vmatpush.bf16.msra.mxu0 %v2610
    %2708 = vmatpush.bf16.msra.mxu0 %v2606
    %2709 = vmatpush.bf16.msra.mxu0 %v2602
    %2710 = vmatmul.bf16.gmra.mxu0 0
    %v2711 = vpop.f32.mrf.mxu0
    %v2712 = vadd.f32 0.0, %v2711
    %v2713 = vpop.f32.mrf.mxu0
    %2714 = vdwg.mxu0
    %v2715 = vadd.f32 %v2423, %v2673
    %v2716 = vadd.f32 %v2437, %v2686
    %v2717 = vadd.f32 %v2451, %v2699
    %v2718 = vadd.f32 %v2465, %v2712
    %v2719 = vxor.u32 %v2715, 2147483648
    %v2720 = vmul.f32 %v2719, 1.442695
    %v2721 = vpow.pop %v2720
    %v2722 = vadd.f32 %v2721, 1.0
    %v2723 = vrcp.pop %v2722
    %v2724 = vmul.f32 %v2722, %v2723
    %v2725 = vsub.f32 1.0, %v2724
    %v2726 = vmul.f32 %v2723, %v2725
    %v2727 = vadd.f32 %v2723, %v2726
    %vm2728 = vweird.f32 %v2722
    %vm2729 = vweird.f32 %v2723
    %vm2730 = vmor %vm2728, %vm2729
    %v2731 = vsel %vm2730, %v2723, %v2727
    %v2732 = vand.u32 2147483647, %v2722
    %vm2733 = vcmp.eq.f32.partialorder %v2732, 8.507059e+37
    %v2734 = vand.u32 %v2722, 2147483648
    %v2735 = vor.u32 1.1754944e-38, %v2734
    %v2736 = vsel %vm2733, %v2735, %v2731
    %v2737 = vmul.f32 1.0, %v2736
    %v2738 = vxor.u32 %v2716, 2147483648
    %v2739 = vmul.f32 %v2738, 1.442695
    %v2740 = vpow.pop %v2739
    %v2741 = vadd.f32 %v2740, 1.0
    %v2742 = vrcp.pop %v2741
    %v2743 = vmul.f32 %v2741, %v2742
    %v2744 = vsub.f32 1.0, %v2743
    %v2745 = vmul.f32 %v2742, %v2744
    %v2746 = vadd.f32 %v2742, %v2745
    %vm2747 = vweird.f32 %v2741
    %vm2748 = vweird.f32 %v2742
    %vm2749 = vmor %vm2747, %vm2748
    %v2750 = vsel %vm2749, %v2742, %v2746
    %v2751 = vand.u32 2147483647, %v2741
    %vm2752 = vcmp.eq.f32.partialorder %v2751, 8.507059e+37
    %v2753 = vand.u32 %v2741, 2147483648
    %v2754 = vor.u32 1.1754944e-38, %v2753
    %v2755 = vsel %vm2752, %v2754, %v2750
    %v2756 = vmul.f32 1.0, %v2755
    %v2757 = vtanh.pop %v2717
    %v2758 = vxor.u32 %v2718, 2147483648
    %v2759 = vmul.f32 %v2758, 1.442695
    %v2760 = vpow.pop %v2759
    %v2761 = vadd.f32 %v2760, 1.0
    %v2762 = vrcp.pop %v2761
    %v2763 = vmul.f32 %v2761, %v2762
    %v2764 = vsub.f32 1.0, %v2763
    %v2765 = vmul.f32 %v2762, %v2764
    %v2766 = vadd.f32 %v2762, %v2765
    %vm2767 = vweird.f32 %v2761
    %vm2768 = vweird.f32 %v2762
    %vm2769 = vmor %vm2767, %vm2768
    %v2770 = vsel %vm2769, %v2762, %v2766
    %v2771 = vand.u32 2147483647, %v2761
    %vm2772 = vcmp.eq.f32.partialorder %v2771, 8.507059e+37
    %v2773 = vand.u32 %v2761, 2147483648
    %v2774 = vor.u32 1.1754944e-38, %v2773
    %v2775 = vsel %vm2772, %v2774, %v2770
    %v2776 = vmul.f32 1.0, %v2775
    %v2777 = vmul.f32 %v2756, 0.0
    %v2778 = vmul.f32 %v2737, %v2757
    %v2779 = vadd.f32 %v2777, %v2778
    %v2780 = vtanh.pop %v2779
    %v2781 = vmul.f32 %v2776, %v2780
    %v2782 = vpack.c.bf16 %v2781, %v2781
    %2783 = vmatpush.bf16.msra.mxu0 %v2627
    %2784 = vmatpush.bf16.msra.mxu0 %v2623
    %2785 = vmatpush.bf16.msra.mxu0 %v2619
    %2786 = vmatpush.bf16.msra.mxu0 %v2615
    %2787 = vmatpush.bf16.msra.mxu0 %v2611
    %2788 = vmatpush.bf16.msra.mxu0 %v2607
    %2789 = vmatpush.bf16.msra.mxu0 %v2603
    %2790 = vmatpush.bf16.msra.mxu0 %v2599
    %2791 = vmatmul.bf16.gmra.mxu0 %v2782
    %v2792 = vpop.f32.mrf.mxu0
    %v2793 = vadd.f32 0.0, %v2792
    %v2794 = vpop.f32.mrf.mxu0
    %2795 = vdwg.mxu0
    %2796 = vmatpush.bf16.msra.mxu0 %v2628
    %2797 = vmatpush.bf16.msra.mxu0 %v2624
    %2798 = vmatpush.bf16.msra.mxu0 %v2620
    %2799 = vmatpush.bf16.msra.mxu0 %v2616
    %2800 = vmatpush.bf16.msra.mxu0 %v2612
    %2801 = vmatpush.bf16.msra.mxu0 %v2608
    %2802 = vmatpush.bf16.msra.mxu0 %v2604
    %2803 = vmatpush.bf16.msra.mxu0 %v2600
    %2804 = vmatmul.bf16.gmra.mxu0 %v2782
    %v2805 = vpop.f32.mrf.mxu0
    %v2806 = vadd.f32 0.0, %v2805
    %v2807 = vpop.f32.mrf.mxu0
    %2808 = vdwg.mxu0
    %2809 = vmatpush.bf16.msra.mxu0 %v2629
    %2810 = vmatpush.bf16.msra.mxu0 %v2625
    %2811 = vmatpush.bf16.msra.mxu0 %v2621
    %2812 = vmatpush.bf16.msra.mxu0 %v2617
    %2813 = vmatpush.bf16.msra.mxu0 %v2613
    %2814 = vmatpush.bf16.msra.mxu0 %v2609
    %2815 = vmatpush.bf16.msra.mxu0 %v2605
    %2816 = vmatpush.bf16.msra.mxu0 %v2601
    %2817 = vmatmul.bf16.gmra.mxu0 %v2782
    %v2818 = vpop.f32.mrf.mxu0
    %v2819 = vadd.f32 0.0, %v2818
    %v2820 = vpop.f32.mrf.mxu0
    %2821 = vdwg.mxu0
    %2822 = vmatpush.bf16.msra.mxu0 %v2630
    %2823 = vmatpush.bf16.msra.mxu0 %v2626
    %2824 = vmatpush.bf16.msra.mxu0 %v2622
    %2825 = vmatpush.bf16.msra.mxu0 %v2618
    %2826 = vmatpush.bf16.msra.mxu0 %v2614
    %2827 = vmatpush.bf16.msra.mxu0 %v2610
    %2828 = vmatpush.bf16.msra.mxu0 %v2606
    %2829 = vmatpush.bf16.msra.mxu0 %v2602
    %2830 = vmatmul.bf16.gmra.mxu0 %v2782
    %v2831 = vpop.f32.mrf.mxu0
    %v2832 = vadd.f32 0.0, %v2831
    %v2833 = vpop.f32.mrf.mxu0
    %2834 = vdwg.mxu0
    %v2839 = vrot.slane %v2793, 6
    %v2840 = vrot.slane %v2806, 6
    %v2841 = vrot.slane %v2819, 6
    %v2842 = vrot.slane %v2832, 6
    %v2847 = vadd.f32 %v2423, %v2839
    %v2848 = vadd.f32 %v2437, %v2840
    %v2849 = vadd.f32 %v2451, %v2841
    %v2850 = vadd.f32 %v2465, %v2842
    %v2851 = vxor.u32 %v2847, 2147483648
    %v2852 = vmul.f32 %v2851, 1.442695
    %v2853 = vpow.pop %v2852
    %v2854 = vadd.f32 %v2853, 1.0
    %v2855 = vrcp.pop %v2854
    %v2856 = vmul.f32 %v2854, %v2855
    %v2857 = vsub.f32 1.0, %v2856
    %v2858 = vmul.f32 %v2855, %v2857
    %v2859 = vadd.f32 %v2855, %v2858
    %vm2860 = vweird.f32 %v2854
    %vm2861 = vweird.f32 %v2855
    %vm2862 = vmor %vm2860, %vm2861
    %v2863 = vsel %vm2862, %v2855, %v2859
    %v2864 = vand.u32 2147483647, %v2854
    %vm2865 = vcmp.eq.f32.partialorder %v2864, 8.507059e+37
    %v2866 = vand.u32 %v2854, 2147483648
    %v2867 = vor.u32 1.1754944e-38, %v2866
    %v2868 = vsel %vm2865, %v2867, %v2863
    %v2869 = vmul.f32 1.0, %v2868
    %v2870 = vxor.u32 %v2848, 2147483648
    %v2871 = vmul.f32 %v2870, 1.442695
    %v2872 = vpow.pop %v2871
    %v2873 = vadd.f32 %v2872, 1.0
    %v2874 = vrcp.pop %v2873
    %v2875 = vmul.f32 %v2873, %v2874
    %v2876 = vsub.f32 1.0, %v2875
    %v2877 = vmul.f32 %v2874, %v2876
    %v2878 = vadd.f32 %v2874, %v2877
    %vm2879 = vweird.f32 %v2873
    %vm2880 = vweird.f32 %v2874
    %vm2881 = vmor %vm2879, %vm2880
    %v2882 = vsel %vm2881, %v2874, %v2878
    %v2883 = vand.u32 2147483647, %v2873
    %vm2884 = vcmp.eq.f32.partialorder %v2883, 8.507059e+37
    %v2885 = vand.u32 %v2873, 2147483648
    %v2886 = vor.u32 1.1754944e-38, %v2885
    %v2887 = vsel %vm2884, %v2886, %v2882
    %v2888 = vmul.f32 1.0, %v2887
    %v2889 = vtanh.pop %v2849
    %v2890 = vxor.u32 %v2850, 2147483648
    %v2891 = vmul.f32 %v2890, 1.442695
    %v2892 = vpow.pop %v2891
    %v2893 = vadd.f32 %v2892, 1.0
    %v2894 = vrcp.pop %v2893
    %v2895 = vmul.f32 %v2893, %v2894
    %v2896 = vsub.f32 1.0, %v2895
    %v2897 = vmul.f32 %v2894, %v2896
    %v2898 = vadd.f32 %v2894, %v2897
    %vm2899 = vweird.f32 %v2893
    %vm2900 = vweird.f32 %v2894
    %vm2901 = vmor %vm2899, %vm2900
    %v2902 = vsel %vm2901, %v2894, %v2898
    %v2903 = vand.u32 2147483647, %v2893
    %vm2904 = vcmp.eq.f32.partialorder %v2903, 8.507059e+37
    %v2905 = vand.u32 %v2893, 2147483648
    %v2906 = vor.u32 1.1754944e-38, %v2905
    %v2907 = vsel %vm2904, %v2906, %v2902
    %v2908 = vmul.f32 1.0, %v2907
    %v2910 = vrot.slane %v2779, 6
    %v2912 = vmul.f32 %v2888, %v2910
    %v2913 = vmul.f32 %v2869, %v2889
    %v2914 = vadd.f32 %v2912, %v2913
    %v2915 = vtanh.pop %v2914
    %v2916 = vmul.f32 %v2908, %v2915
    %v2917 = vpack.c.bf16 %v2916, %v2916
    %v2919 = vrot.slane %v2917, 1
    %2921 = vmatpush.bf16.msra.mxu0 %v2627
    %2922 = vmatpush.bf16.msra.mxu0 %v2623
    %2923 = vmatpush.bf16.msra.mxu0 %v2619
    %2924 = vmatpush.bf16.msra.mxu0 %v2615
    %2925 = vmatpush.bf16.msra.mxu0 %v2611
    %2926 = vmatpush.bf16.msra.mxu0 %v2607
    %2927 = vmatpush.bf16.msra.mxu0 %v2603
    %2928 = vmatpush.bf16.msra.mxu0 %v2599
    %2929 = vmatmul.bf16.gmra.mxu0 %v2919
    %v2930 = vpop.f32.mrf.mxu0
    %v2931 = vadd.f32 0.0, %v2930
    %v2932 = vpop.f32.mrf.mxu0
    %2933 = vdwg.mxu0
    %2934 = vmatpush.bf16.msra.mxu0 %v2628
    %2935 = vmatpush.bf16.msra.mxu0 %v2624
    %2936 = vmatpush.bf16.msra.mxu0 %v2620
    %2937 = vmatpush.bf16.msra.mxu0 %v2616
    %2938 = vmatpush.bf16.msra.mxu0 %v2612
    %2939 = vmatpush.bf16.msra.mxu0 %v2608
    %2940 = vmatpush.bf16.msra.mxu0 %v2604
    %2941 = vmatpush.bf16.msra.mxu0 %v2600
    %2942 = vmatmul.bf16.gmra.mxu0 %v2919
    %v2943 = vpop.f32.mrf.mxu0
    %v2944 = vadd.f32 0.0, %v2943
    %v2945 = vpop.f32.mrf.mxu0
    %2946 = vdwg.mxu0
    %2947 = vmatpush.bf16.msra.mxu0 %v2629
    %2948 = vmatpush.bf16.msra.mxu0 %v2625
    %2949 = vmatpush.bf16.msra.mxu0 %v2621
    %2950 = vmatpush.bf16.msra.mxu0 %v2617
    %2951 = vmatpush.bf16.msra.mxu0 %v2613
    %2952 = vmatpush.bf16.msra.mxu0 %v2609
    %2953 = vmatpush.bf16.msra.mxu0 %v2605
    %2954 = vmatpush.bf16.msra.mxu0 %v2601
    %2955 = vmatmul.bf16.gmra.mxu0 %v2919
    %v2956 = vpop.f32.mrf.mxu0
    %v2957 = vadd.f32 0.0, %v2956
    %v2958 = vpop.f32.mrf.mxu0
    %2959 = vdwg.mxu0
    %2960 = vmatpush.bf16.msra.mxu0 %v2630
    %2961 = vmatpush.bf16.msra.mxu0 %v2626
    %2962 = vmatpush.bf16.msra.mxu0 %v2622
    %2963 = vmatpush.bf16.msra.mxu0 %v2618
    %2964 = vmatpush.bf16.msra.mxu0 %v2614
    %2965 = vmatpush.bf16.msra.mxu0 %v2610
    %2966 = vmatpush.bf16.msra.mxu0 %v2606
    %2967 = vmatpush.bf16.msra.mxu0 %v2602
    %2968 = vmatmul.bf16.gmra.mxu0 %v2919
    %v2969 = vpop.f32.mrf.mxu0
    %v2970 = vadd.f32 0.0, %v2969
    %v2971 = vpop.f32.mrf.mxu0
    %2972 = vdwg.mxu0
    %v2977 = vrot.slane %v2931, 4
    %v2978 = vrot.slane %v2944, 4
    %v2979 = vrot.slane %v2957, 4
    %v2980 = vrot.slane %v2970, 4
    %v2985 = vadd.f32 %v2423, %v2977
    %v2986 = vadd.f32 %v2437, %v2978
    %v2987 = vadd.f32 %v2451, %v2979
    %v2988 = vadd.f32 %v2465, %v2980
    %v2989 = vxor.u32 %v2985, 2147483648
    %v2990 = vmul.f32 %v2989, 1.442695
    %v2991 = vpow.pop %v2990
    %v2992 = vadd.f32 %v2991, 1.0
    %v2993 = vrcp.pop %v2992
    %v2994 = vmul.f32 %v2992, %v2993
    %v2995 = vsub.f32 1.0, %v2994
    %v2996 = vmul.f32 %v2993, %v2995
    %v2997 = vadd.f32 %v2993, %v2996
    %vm2998 = vweird.f32 %v2992
    %vm2999 = vweird.f32 %v2993
    %vm3000 = vmor %vm2998, %vm2999
    %v3001 = vsel %vm3000, %v2993, %v2997
    %v3002 = vand.u32 2147483647, %v2992
    %vm3003 = vcmp.eq.f32.partialorder %v3002, 8.507059e+37
    %v3004 = vand.u32 %v2992, 2147483648
    %v3005 = vor.u32 1.1754944e-38, %v3004
    %v3006 = vsel %vm3003, %v3005, %v3001
    %v3007 = vmul.f32 1.0, %v3006
    %v3008 = vxor.u32 %v2986, 2147483648
    %v3009 = vmul.f32 %v3008, 1.442695
    %v3010 = vpow.pop %v3009
    %v3011 = vadd.f32 %v3010, 1.0
    %v3012 = vrcp.pop %v3011
    %v3013 = vmul.f32 %v3011, %v3012
    %v3014 = vsub.f32 1.0, %v3013
    %v3015 = vmul.f32 %v3012, %v3014
    %v3016 = vadd.f32 %v3012, %v3015
    %vm3017 = vweird.f32 %v3011
    %vm3018 = vweird.f32 %v3012
    %vm3019 = vmor %vm3017, %vm3018
    %v3020 = vsel %vm3019, %v3012, %v3016
    %v3021 = vand.u32 2147483647, %v3011
    %vm3022 = vcmp.eq.f32.partialorder %v3021, 8.507059e+37
    %v3023 = vand.u32 %v3011, 2147483648
    %v3024 = vor.u32 1.1754944e-38, %v3023
    %v3025 = vsel %vm3022, %v3024, %v3020
    %v3026 = vmul.f32 1.0, %v3025
    %v3027 = vtanh.pop %v2987
    %v3028 = vxor.u32 %v2988, 2147483648
    %v3029 = vmul.f32 %v3028, 1.442695
    %v3030 = vpow.pop %v3029
    %v3031 = vadd.f32 %v3030, 1.0
    %v3032 = vrcp.pop %v3031
    %v3033 = vmul.f32 %v3031, %v3032
    %v3034 = vsub.f32 1.0, %v3033
    %v3035 = vmul.f32 %v3032, %v3034
    %v3036 = vadd.f32 %v3032, %v3035
    %vm3037 = vweird.f32 %v3031
    %vm3038 = vweird.f32 %v3032
    %vm3039 = vmor %vm3037, %vm3038
    %v3040 = vsel %vm3039, %v3032, %v3036
    %v3041 = vand.u32 2147483647, %v3031
    %vm3042 = vcmp.eq.f32.partialorder %v3041, 8.507059e+37
    %v3043 = vand.u32 %v3031, 2147483648
    %v3044 = vor.u32 1.1754944e-38, %v3043
    %v3045 = vsel %vm3042, %v3044, %v3040
    %v3046 = vmul.f32 1.0, %v3045
    %v3048 = vrot.slane %v2914, 6
    %v3050 = vmul.f32 %v3026, %v3048
    %v3051 = vmul.f32 %v3007, %v3027
    %v3052 = vadd.f32 %v3050, %v3051
    %v3053 = vtanh.pop %v3052
    %v3054 = vmul.f32 %v3046, %v3053
    %v3055 = vpack.c.bf16 %v3054, %v3054
    %v3057 = vrot.slane %v3055, 2
    %3059 = vmatpush.bf16.msra.mxu0 %v2627
    %3060 = vmatpush.bf16.msra.mxu0 %v2623
    %3061 = vmatpush.bf16.msra.mxu0 %v2619
    %3062 = vmatpush.bf16.msra.mxu0 %v2615
    %3063 = vmatpush.bf16.msra.mxu0 %v2611
    %3064 = vmatpush.bf16.msra.mxu0 %v2607
    %3065 = vmatpush.bf16.msra.mxu0 %v2603
    %3066 = vmatpush.bf16.msra.mxu0 %v2599
    %3067 = vmatmul.bf16.gmra.mxu0 %v3057
    %v3068 = vpop.f32.mrf.mxu0
    %v3069 = vadd.f32 0.0, %v3068
    %v3070 = vpop.f32.mrf.mxu0
    %3071 = vdwg.mxu0
    %3072 = vmatpush.bf16.msra.mxu0 %v2628
    %3073 = vmatpush.bf16.msra.mxu0 %v2624
    %3074 = vmatpush.bf16.msra.mxu0 %v2620
    %3075 = vmatpush.bf16.msra.mxu0 %v2616
    %3076 = vmatpush.bf16.msra.mxu0 %v2612
    %3077 = vmatpush.bf16.msra.mxu0 %v2608
    %3078 = vmatpush.bf16.msra.mxu0 %v2604
    %3079 = vmatpush.bf16.msra.mxu0 %v2600
    %3080 = vmatmul.bf16.gmra.mxu0 %v3057
    %v3081 = vpop.f32.mrf.mxu0
    %v3082 = vadd.f32 0.0, %v3081
    %v3083 = vpop.f32.mrf.mxu0
    %3084 = vdwg.mxu0
    %3085 = vmatpush.bf16.msra.mxu0 %v2629
    %3086 = vmatpush.bf16.msra.mxu0 %v2625
    %3087 = vmatpush.bf16.msra.mxu0 %v2621
    %3088 = vmatpush.bf16.msra.mxu0 %v2617
    %3089 = vmatpush.bf16.msra.mxu0 %v2613
    %3090 = vmatpush.bf16.msra.mxu0 %v2609
    %3091 = vmatpush.bf16.msra.mxu0 %v2605
    %3092 = vmatpush.bf16.msra.mxu0 %v2601
    %3093 = vmatmul.bf16.gmra.mxu0 %v3057
    %v3094 = vpop.f32.mrf.mxu0
    %v3095 = vadd.f32 0.0, %v3094
    %v3096 = vpop.f32.mrf.mxu0
    %3097 = vdwg.mxu0
    %3098 = vmatpush.bf16.msra.mxu0 %v2630
    %3099 = vmatpush.bf16.msra.mxu0 %v2626
    %3100 = vmatpush.bf16.msra.mxu0 %v2622
    %3101 = vmatpush.bf16.msra.mxu0 %v2618
    %3102 = vmatpush.bf16.msra.mxu0 %v2614
    %3103 = vmatpush.bf16.msra.mxu0 %v2610
    %3104 = vmatpush.bf16.msra.mxu0 %v2606
    %3105 = vmatpush.bf16.msra.mxu0 %v2602
    %3106 = vmatmul.bf16.gmra.mxu0 %v3057
    %v3107 = vpop.f32.mrf.mxu0
    %v3108 = vadd.f32 0.0, %v3107
    %v3109 = vpop.f32.mrf.mxu0
    %3110 = vdwg.mxu0
    %v3115 = vrot.slane %v3069, 2
    %v3116 = vrot.slane %v3082, 2
    %v3117 = vrot.slane %v3095, 2
    %v3118 = vrot.slane %v3108, 2
    %v3123 = vadd.f32 %v2423, %v3115
    %v3124 = vadd.f32 %v2437, %v3116
    %v3125 = vadd.f32 %v2451, %v3117
    %v3126 = vadd.f32 %v2465, %v3118
    %v3127 = vxor.u32 %v3123, 2147483648
    %v3128 = vmul.f32 %v3127, 1.442695
    %v3129 = vpow.pop %v3128
    %v3130 = vadd.f32 %v3129, 1.0
    %v3131 = vrcp.pop %v3130
    %v3132 = vmul.f32 %v3130, %v3131
    %v3133 = vsub.f32 1.0, %v3132
    %v3134 = vmul.f32 %v3131, %v3133
    %v3135 = vadd.f32 %v3131, %v3134
    %vm3136 = vweird.f32 %v3130
    %vm3137 = vweird.f32 %v3131
    %vm3138 = vmor %vm3136, %vm3137
    %v3139 = vsel %vm3138, %v3131, %v3135
    %v3140 = vand.u32 2147483647, %v3130
    %vm3141 = vcmp.eq.f32.partialorder %v3140, 8.507059e+37
    %v3142 = vand.u32 %v3130, 2147483648
    %v3143 = vor.u32 1.1754944e-38, %v3142
    %v3144 = vsel %vm3141, %v3143, %v3139
    %v3145 = vmul.f32 1.0, %v3144
    %v3146 = vxor.u32 %v3124, 2147483648
    %v3147 = vmul.f32 %v3146, 1.442695
    %v3148 = vpow.pop %v3147
    %v3149 = vadd.f32 %v3148, 1.0
    %v3150 = vrcp.pop %v3149
    %v3151 = vmul.f32 %v3149, %v3150
    %v3152 = vsub.f32 1.0, %v3151
    %v3153 = vmul.f32 %v3150, %v3152
    %v3154 = vadd.f32 %v3150, %v3153
    %vm3155 = vweird.f32 %v3149
    %vm3156 = vweird.f32 %v3150
    %vm3157 = vmor %vm3155, %vm3156
    %v3158 = vsel %vm3157, %v3150, %v3154
    %v3159 = vand.u32 2147483647, %v3149
    %vm3160 = vcmp.eq.f32.partialorder %v3159, 8.507059e+37
    %v3161 = vand.u32 %v3149, 2147483648
    %v3162 = vor.u32 1.1754944e-38, %v3161
    %v3163 = vsel %vm3160, %v3162, %v3158
    %v3164 = vmul.f32 1.0, %v3163
    %v3165 = vtanh.pop %v3125
    %v3166 = vxor.u32 %v3126, 2147483648
    %v3167 = vmul.f32 %v3166, 1.442695
    %v3168 = vpow.pop %v3167
    %v3169 = vadd.f32 %v3168, 1.0
    %v3170 = vrcp.pop %v3169
    %v3171 = vmul.f32 %v3169, %v3170
    %v3172 = vsub.f32 1.0, %v3171
    %v3173 = vmul.f32 %v3170, %v3172
    %v3174 = vadd.f32 %v3170, %v3173
    %vm3175 = vweird.f32 %v3169
    %vm3176 = vweird.f32 %v3170
    %vm3177 = vmor %vm3175, %vm3176
    %v3178 = vsel %vm3177, %v3170, %v3174
    %v3179 = vand.u32 2147483647, %v3169
    %vm3180 = vcmp.eq.f32.partialorder %v3179, 8.507059e+37
    %v3181 = vand.u32 %v3169, 2147483648
    %v3182 = vor.u32 1.1754944e-38, %v3181
    %v3183 = vsel %vm3180, %v3182, %v3178
    %v3184 = vmul.f32 1.0, %v3183
    %v3186 = vrot.slane %v3052, 6
    %v3188 = vmul.f32 %v3164, %v3186
    %v3189 = vmul.f32 %v3145, %v3165
    %v3190 = vadd.f32 %v3188, %v3189
    %v3191 = vtanh.pop %v3190
    %v3192 = vmul.f32 %v3184, %v3191
    %v3193 = vpack.c.bf16 %v3192, %v3192
    %v3195 = vrot.slane %v3193, 3
    %3197 = vmatpush.bf16.msra.mxu0 %v2627
    %3198 = vmatpush.bf16.msra.mxu0 %v2623
    %3199 = vmatpush.bf16.msra.mxu0 %v2619
    %3200 = vmatpush.bf16.msra.mxu0 %v2615
    %3201 = vmatpush.bf16.msra.mxu0 %v2611
    %3202 = vmatpush.bf16.msra.mxu0 %v2607
    %3203 = vmatpush.bf16.msra.mxu0 %v2603
    %3204 = vmatpush.bf16.msra.mxu0 %v2599
    %3205 = vmatmul.bf16.gmra.mxu0 %v3195
    %v3206 = vpop.f32.mrf.mxu0
    %v3207 = vadd.f32 0.0, %v3206
    %v3208 = vpop.f32.mrf.mxu0
    %3209 = vdwg.mxu0
    %3210 = vmatpush.bf16.msra.mxu0 %v2628
    %3211 = vmatpush.bf16.msra.mxu0 %v2624
    %3212 = vmatpush.bf16.msra.mxu0 %v2620
    %3213 = vmatpush.bf16.msra.mxu0 %v2616
    %3214 = vmatpush.bf16.msra.mxu0 %v2612
    %3215 = vmatpush.bf16.msra.mxu0 %v2608
    %3216 = vmatpush.bf16.msra.mxu0 %v2604
    %3217 = vmatpush.bf16.msra.mxu0 %v2600
    %3218 = vmatmul.bf16.gmra.mxu0 %v3195
    %v3219 = vpop.f32.mrf.mxu0
    %v3220 = vadd.f32 0.0, %v3219
    %v3221 = vpop.f32.mrf.mxu0
    %3222 = vdwg.mxu0
    %3223 = vmatpush.bf16.msra.mxu0 %v2629
    %3224 = vmatpush.bf16.msra.mxu0 %v2625
    %3225 = vmatpush.bf16.msra.mxu0 %v2621
    %3226 = vmatpush.bf16.msra.mxu0 %v2617
    %3227 = vmatpush.bf16.msra.mxu0 %v2613
    %3228 = vmatpush.bf16.msra.mxu0 %v2609
    %3229 = vmatpush.bf16.msra.mxu0 %v2605
    %3230 = vmatpush.bf16.msra.mxu0 %v2601
    %3231 = vmatmul.bf16.gmra.mxu0 %v3195
    %v3232 = vpop.f32.mrf.mxu0
    %v3233 = vadd.f32 0.0, %v3232
    %v3234 = vpop.f32.mrf.mxu0
    %3235 = vdwg.mxu0
    %3236 = vmatpush.bf16.msra.mxu0 %v2630
    %3237 = vmatpush.bf16.msra.mxu0 %v2626
    %3238 = vmatpush.bf16.msra.mxu0 %v2622
    %3239 = vmatpush.bf16.msra.mxu0 %v2618
    %3240 = vmatpush.bf16.msra.mxu0 %v2614
    %3241 = vmatpush.bf16.msra.mxu0 %v2610
    %3242 = vmatpush.bf16.msra.mxu0 %v2606
    %3243 = vmatpush.bf16.msra.mxu0 %v2602
    %3244 = vmatmul.bf16.gmra.mxu0 %v3195
    %v3245 = vpop.f32.mrf.mxu0
    %v3246 = vadd.f32 0.0, %v3245
    %v3247 = vpop.f32.mrf.mxu0
    %3248 = vdwg.mxu0
    %v3249 = vadd.f32 %v2425, %v3207
    %v3250 = vadd.f32 %v2439, %v3220
    %v3251 = vadd.f32 %v2453, %v3233
    %v3252 = vadd.f32 %v2467, %v3246
    %v3253 = vxor.u32 %v3249, 2147483648
    %v3254 = vmul.f32 %v3253, 1.442695
    %v3255 = vpow.pop %v3254
    %v3256 = vadd.f32 %v3255, 1.0
    %v3257 = vrcp.pop %v3256
    %v3258 = vmul.f32 %v3256, %v3257
    %v3259 = vsub.f32 1.0, %v3258
    %v3260 = vmul.f32 %v3257, %v3259
    %v3261 = vadd.f32 %v3257, %v3260
    %vm3262 = vweird.f32 %v3256
    %vm3263 = vweird.f32 %v3257
    %vm3264 = vmor %vm3262, %vm3263
    %v3265 = vsel %vm3264, %v3257, %v3261
    %v3266 = vand.u32 2147483647, %v3256
    %vm3267 = vcmp.eq.f32.partialorder %v3266, 8.507059e+37
    %v3268 = vand.u32 %v3256, 2147483648
    %v3269 = vor.u32 1.1754944e-38, %v3268
    %v3270 = vsel %vm3267, %v3269, %v3265
    %v3271 = vmul.f32 1.0, %v3270
    %v3272 = vxor.u32 %v3250, 2147483648
    %v3273 = vmul.f32 %v3272, 1.442695
    %v3274 = vpow.pop %v3273
    %v3275 = vadd.f32 %v3274, 1.0
    %v3276 = vrcp.pop %v3275
    %v3277 = vmul.f32 %v3275, %v3276
    %v3278 = vsub.f32 1.0, %v3277
    %v3279 = vmul.f32 %v3276, %v3278
    %v3280 = vadd.f32 %v3276, %v3279
    %vm3281 = vweird.f32 %v3275
    %vm3282 = vweird.f32 %v3276
    %vm3283 = vmor %vm3281, %vm3282
    %v3284 = vsel %vm3283, %v3276, %v3280
    %v3285 = vand.u32 2147483647, %v3275
    %vm3286 = vcmp.eq.f32.partialorder %v3285, 8.507059e+37
    %v3287 = vand.u32 %v3275, 2147483648
    %v3288 = vor.u32 1.1754944e-38, %v3287
    %v3289 = vsel %vm3286, %v3288, %v3284
    %v3290 = vmul.f32 1.0, %v3289
    %v3291 = vtanh.pop %v3251
    %v3292 = vxor.u32 %v3252, 2147483648
    %v3293 = vmul.f32 %v3292, 1.442695
    %v3294 = vpow.pop %v3293
    %v3295 = vadd.f32 %v3294, 1.0
    %v3296 = vrcp.pop %v3295
    %v3297 = vmul.f32 %v3295, %v3296
    %v3298 = vsub.f32 1.0, %v3297
    %v3299 = vmul.f32 %v3296, %v3298
    %v3300 = vadd.f32 %v3296, %v3299
    %vm3301 = vweird.f32 %v3295
    %vm3302 = vweird.f32 %v3296
    %vm3303 = vmor %vm3301, %vm3302
    %v3304 = vsel %vm3303, %v3296, %v3300
    %v3305 = vand.u32 2147483647, %v3295
    %vm3306 = vcmp.eq.f32.partialorder %v3305, 8.507059e+37
    %v3307 = vand.u32 %v3295, 2147483648
    %v3308 = vor.u32 1.1754944e-38, %v3307
    %v3309 = vsel %vm3306, %v3308, %v3304
    %v3310 = vmul.f32 1.0, %v3309
    %v3312 = vrot.slane %v3190, 6
    %v3314 = vmul.f32 %v3290, %v3312
    %v3315 = vmul.f32 %v3271, %v3291
    %v3316 = vadd.f32 %v3314, %v3315
    %v3317 = vtanh.pop %v3316
    %v3318 = vmul.f32 %v3310, %v3317
    %s3319 = smul.u32 %s2206, 1
    %s3320 = sshll.u32 %s3319, 4
    %3321 = dma.done %s186, %s3320
    %v3322 = vpack.c.bf16 %v3318, %v3318
    %v3323 = vld [vmem:[#allocation4] sm:$0xf]
    %v3324 = vld [vmem:[#allocation4 + $0x4] sm:$0xf]
    %v3325 = vld [vmem:[#allocation4 + $0x8] sm:$0xf]
    %v3326 = vld [vmem:[#allocation4 + $0xc] sm:$0xf]
    %v3327 = vld [vmem:[#allocation4 + $0x10] sm:$0xf]
    %v3328 = vld [vmem:[#allocation4 + $0x14] sm:$0xf]
    %v3329 = vld [vmem:[#allocation4 + $0x18] sm:$0xf]
    %v3330 = vld [vmem:[#allocation4 + $0x1c] sm:$0xf]
    %v3331 = vld [vmem:[#allocation4 + $0x20] sm:$0xf]
    %v3332 = vld [vmem:[#allocation4 + $0x24] sm:$0xf]
    %v3333 = vld [vmem:[#allocation4 + $0x28] sm:$0xf]
    %v3334 = vld [vmem:[#allocation4 + $0x2c] sm:$0xf]
    %v3335 = vld [vmem:[#allocation4 + $0x30] sm:$0xf]
    %v3336 = vld [vmem:[#allocation4 + $0x34] sm:$0xf]
    %v3337 = vld [vmem:[#allocation4 + $0x38] sm:$0xf]
    %v3338 = vld [vmem:[#allocation4 + $0x3c] sm:$0xf]
    %v3339 = vld [vmem:[%s4] sm:$0x1]
    %v3341 = vperm.slane %v3339, 0
    %v3359 = vunpack.c.l.b16 %v3323
    %v3360 = vunpack.c.l.b16 %v3324
    %v3361 = vunpack.c.l.b16 %v3325
    %v3362 = vunpack.c.l.b16 %v3326
    %v3363 = vunpack.c.l.b16 %v3327
    %v3364 = vunpack.c.l.b16 %v3328
    %v3365 = vunpack.c.l.b16 %v3329
    %v3366 = vunpack.c.l.b16 %v3330
    %v3367 = vunpack.c.l.b16 %v3331
    %v3368 = vunpack.c.l.b16 %v3332
    %v3369 = vunpack.c.l.b16 %v3333
    %v3370 = vunpack.c.l.b16 %v3334
    %v3371 = vunpack.c.l.b16 %v3335
    %v3372 = vunpack.c.l.b16 %v3336
    %v3373 = vunpack.c.l.b16 %v3337
    %v3374 = vunpack.c.l.b16 %v3338
    %v3375 = vpack.c.b16 %v3360, %v3359
    %v3376 = vpack.c.b16 %v3362, %v3361
    %v3377 = vpack.c.b16 %v3364, %v3363
    %v3378 = vpack.c.b16 %v3366, %v3365
    %v3379 = vpack.c.b16 %v3368, %v3367
    %v3380 = vpack.c.b16 %v3370, %v3369
    %v3381 = vpack.c.b16 %v3372, %v3371
    %v3382 = vpack.c.b16 %v3374, %v3373
    %3391 = vmatpush.bf16.msra.mxu0 %v3382
    %3392 = vmatpush.bf16.msra.mxu0 %v3381
    %3393 = vmatpush.bf16.msra.mxu0 %v3380
    %3394 = vmatpush.bf16.msra.mxu0 %v3379
    %3395 = vmatpush.bf16.msra.mxu0 %v3378
    %3396 = vmatpush.bf16.msra.mxu0 %v3377
    %3397 = vmatpush.bf16.msra.mxu0 %v3376
    %3398 = vmatpush.bf16.msra.mxu0 %v3375
    %3399 = vmatmul.bf16.gmra.mxu0 %v3322
    %v3400 = vpop.f32.mrf.mxu0
    %v3401 = vadd.f32 %v3341, %v3400
    %v3402 = vpop.f32.mrf.mxu0
    %3403 = vdwg.mxu0
    %3404 = vst [vmem:[#allocation6] sm:$0x3] %v3401
    // Predicated region
    $region79: #{scanner_net_forward.1} parent=1 // pred_check
      _
    $region80: #{scanner_net_forward.1} parent=1 // pred_check_branch
      %3406 = sbr.rel (0) target = $region82
    $region81: #{scanner_net_forward.1} parent=1 // pred_region
      %3408 = vsyncadd [#allocation7], 0
      %s3410 = sshll.u32 [#allocation6], 4
      %s3411 = int_to_ptr.vmem [resolvable:$true] %s3410
      %s3412 = sshll.u32 %s8, 4
      %s3413 = int_to_ptr.hbm [resolvable:$true] %s3412
      %3415 = dma.vmem_to_hbm [thread:$0]  %s3411, 32, %s3413, [#allocation7]
    $region82: #{scanner_net_forward.1} parent=1 // pred_fallthru
      _
    // Predicated region
    $region83: #{scanner_net_forward.1} parent=1 // pred_check
      _
    $region84: #{scanner_net_forward.1} parent=1 // pred_check_branch
      %3417 = sbr.rel (0) target = $region86
    $region85: #{scanner_net_forward.1} parent=1 // pred_region
      %3419 = dma.done [#allocation7], 32
    $region86: #{scanner_net_forward.1} parent=1 // pred_fallthru
      _
    %3420 = vsyncpa [#allocation7], 1
  %3421 = vsyncmov [#allocation5]
  %s3422 = vpop.sfrf %3421
  %p3423 = scmp.eq.s32.totalorder %s3422, 0
  %p3424 = pneg %p3423
  %3426 = shalt.err (%p3424)
  %s3427 = scalar_lea.sflag [#allocation5], 1
  %3428 = vsyncmov %s3427
  %s3429 = vpop.sfrf %3428
  %p3430 = scmp.eq.s32.totalorder %s3429, 0
  %p3431 = pneg %p3430
  %3433 = shalt.err (%p3431)
  %s3434 = scalar_lea.sflag [#allocation5], 2
  %3435 = vsyncmov %s3434
  %s3436 = vpop.sfrf %3435
  %p3437 = scmp.eq.s32.totalorder %s3436, 0
  %p3438 = pneg %p3437
  %3440 = shalt.err (%p3438)

</llo_original>
